<compile_context>
chip_gen: v6e
topology: v6e:2x2x1
jax: 0.10.0
libtpu: 0.0.40
codegen_flags: <defaults>
</compile_context>

<pallas_src>
import jax
import jax.numpy as jnp
from jax.experimental import pallas as pl
from jax.experimental.pallas import tpu as pltpu

D_IN = 32
H1, H2, H3 = 512, 1024, 512
D_OUT = 16
BATCH = 8  # small demo batch (matches a typical single-call FFNN input)


def ffnn_kernel(x_ref, w1_ref, b1_ref, w2_ref, b2_ref,
                w3_ref, b3_ref, w4_ref, b4_ref, o_ref):
    # Weights arrive as bf16 tiles; cast activations to bf16 for the MXU,
    # accumulate in f32, add f32 bias.
    def dense(h_f32, w_ref, b_ref):
        acc = jnp.dot(h_f32.astype(jnp.bfloat16), w_ref[...],
                      preferred_element_type=jnp.float32)
        return acc + b_ref[...]

    h = jnp.maximum(dense(x_ref[...], w1_ref, b1_ref), 0.0)   # [tm, 512]
    h = jnp.maximum(dense(h, w2_ref, b2_ref), 0.0)            # [tm, 1024]
    h = jnp.maximum(dense(h, w3_ref, b3_ref), 0.0)            # [tm, 512]
    logits = dense(h, w4_ref, b4_ref)                         # [tm, D_out]

    # log_softmax over the feature axis (numerically stable).
    m = jnp.max(logits, axis=-1, keepdims=True)
    shifted = logits - m
    lse = jnp.log(jnp.sum(jnp.exp(shifted), axis=-1, keepdims=True))
    o_ref[...] = (shifted - lse).astype(o_ref.dtype)


def _round_up(n, m):
    return (n + m - 1) // m * m


def ffnn_forward(x, params, tile_m=128):
    (w1, b1), (w2, b2), (w3, b3), (w4, b4) = params
    B = x.shape[0]

    # 128 rows matches the native MXU M on v5e/v6e/v7x; for tiny batches use
    # the sublane-aligned batch itself so we don't pad 8 -> 128.
    tm = tile_m if B >= tile_m else _round_up(B, 8)
    b_pad = _round_up(B, tm)
    if b_pad != B:
        x = jnp.pad(x, ((0, b_pad - B), (0, 0)))
    n_tiles = b_pad // tm

    # Stream the large weight matrices as bf16; biases stay f32.
    w1, w2, w3, w4 = (w.astype(jnp.bfloat16) for w in (w1, w2, w3, w4))

    def resident(shape):
        # Constant block index -> DMA'd once, VMEM-resident across batch tiles.
        return pl.BlockSpec(shape, lambda i: (0, 0))

    out = pl.pallas_call(
        ffnn_kernel,
        out_shape=jax.ShapeDtypeStruct((b_pad, D_OUT), jnp.float32),
        grid=(n_tiles,),
        in_specs=[
            pl.BlockSpec((tm, D_IN), lambda i: (i, 0)),
            resident(w1.shape), resident(b1.shape),
            resident(w2.shape), resident(b2.shape),
            resident(w3.shape), resident(b3.shape),
            resident(w4.shape), resident(b4.shape),
        ],
        out_specs=pl.BlockSpec((tm, D_OUT), lambda i: (i, 0)),
        compiler_params=pltpu.CompilerParams(
            dimension_semantics=("parallel",),
            vmem_limit_bytes=32 << 20,
        ),
    )(x, w1, b1, w2, b2, w3, b3, w4, b4)

    return out[:B]


def init_params(key):
    """Deterministic init mirroring nn.Linear shapes (stored transposed: [in, out])."""
    dims = [(D_IN, H1), (H1, H2), (H2, H3), (H3, D_OUT)]
    params = []
    for i, (d_in, d_out) in enumerate(dims):
        kw, kb, key = jax.random.split(jax.random.fold_in(key, i), 3)
        bound = 1.0 / jnp.sqrt(d_in)
        w = jax.random.uniform(kw, (d_in, d_out), jnp.float32, -bound, bound)
        b = jax.random.uniform(kb, (1, d_out), jnp.float32, -bound, bound)
        params.append((w, b))
    return params


def reference_forward_bf16(x, params):
    """JAX reference using the same bf16-weight / f32-accumulate recipe."""
    h = x
    for i, (w, b) in enumerate(params):
        h = jnp.dot(h.astype(jnp.bfloat16), w.astype(jnp.bfloat16),
                    preferred_element_type=jnp.float32) + b
        if i < 3:
            h = jnp.maximum(h, 0.0)
    return jax.nn.log_softmax(h, axis=1)


def reference_forward_f32(x, params):
    h = x
    for i, (w, b) in enumerate(params):
        h = h @ w + b
        if i < 3:
            h = jnp.maximum(h, 0.0)
    return jax.nn.log_softmax(h, axis=1)


if __name__ == "__main__":
    key = jax.random.PRNGKey(0)
    kx, kp = jax.random.split(key)
    params = init_params(kp)

    # Small-batch path (single tile, no padding).
    x_small = jax.random.normal(kx, (BATCH, D_IN), jnp.float32)
    out_small = jax.block_until_ready(ffnn_forward(x_small, params))
    ref_small = reference_forward_bf16(x_small, params)
    assert out_small.shape == (BATCH, D_OUT)
    assert jnp.allclose(out_small, ref_small, atol=2e-3, rtol=2e-3), \
        "mismatch vs bf16 JAX reference (small batch)"
    # Sanity check vs full-f32 reference (bf16 weights -> loose tolerance).
    assert jnp.allclose(out_small, reference_forward_f32(x_small, params),
                        atol=5e-2, rtol=5e-2), "mismatch vs f32 reference"

    # Batch-tiled path (grid over 128-row tiles, weights VMEM-resident).
    x_big = jax.random.normal(jax.random.fold_in(kx, 1), (256, D_IN), jnp.float32)
    out_big = jax.block_until_ready(ffnn_forward(x_big, params))
    ref_big = reference_forward_bf16(x_big, params)
    assert out_big.shape == (256, D_OUT)
    assert jnp.allclose(out_big, ref_big, atol=2e-3, rtol=2e-3), \
        "mismatch vs bf16 JAX reference (tiled batch)"

    print("KERNEL_OK")
</pallas_src>

<mosaic_0001>
module attributes {stable_mosaic.version = 11 : i64} {
  func.func @ffnn_kernel(%arg0: i32, %arg1: memref<8x32xf32, #tpu.memory_space<vmem>>, %arg2: memref<32x512xbf16, #tpu.memory_space<vmem>>, %arg3: memref<1x512xf32, #tpu.memory_space<vmem>>, %arg4: memref<512x1024xbf16, #tpu.memory_space<vmem>>, %arg5: memref<1x1024xf32, #tpu.memory_space<vmem>>, %arg6: memref<1024x512xbf16, #tpu.memory_space<vmem>>, %arg7: memref<1x512xf32, #tpu.memory_space<vmem>>, %arg8: memref<512x16xbf16, #tpu.memory_space<vmem>>, %arg9: memref<1x16xf32, #tpu.memory_space<vmem>>, %arg10: memref<8x16xf32, #tpu.memory_space<vmem>>) attributes {dimension_semantics = [#tpu.dimension_semantics<parallel>], iteration_bounds = array<i64: 1>, scalar_prefetch = 0 : i64, scratch_operands = 0 : i64, tpu.core_type = #tpu.core_type<tc>, window_params = [{transform_indices = @transform_0, window_bounds = array<i64: 8, 32>}, {pipeline_mode = #tpu.pipeline_mode<synchronous>, transform_indices = @transform_1, window_bounds = array<i64: 32, 512>}, {pipeline_mode = #tpu.pipeline_mode<synchronous>, transform_indices = @transform_2, window_bounds = array<i64: 1, 512>}, {pipeline_mode = #tpu.pipeline_mode<synchronous>, transform_indices = @transform_3, window_bounds = array<i64: 512, 1024>}, {pipeline_mode = #tpu.pipeline_mode<synchronous>, transform_indices = @transform_4, window_bounds = array<i64: 1, 1024>}, {pipeline_mode = #tpu.pipeline_mode<synchronous>, transform_indices = @transform_5, window_bounds = array<i64: 1024, 512>}, {pipeline_mode = #tpu.pipeline_mode<synchronous>, transform_indices = @transform_6, window_bounds = array<i64: 1, 512>}, {pipeline_mode = #tpu.pipeline_mode<synchronous>, transform_indices = @transform_7, window_bounds = array<i64: 512, 16>}, {pipeline_mode = #tpu.pipeline_mode<synchronous>, transform_indices = @transform_8, window_bounds = array<i64: 1, 16>}, {transform_indices = @transform_9, window_bounds = array<i64: 8, 16>}]} {
    %c0 = arith.constant 0 : index
    %c0_0 = arith.constant 0 : index
    %0 = vector.load %arg1[%c0, %c0_0] : memref<8x32xf32, #tpu.memory_space<vmem>>, vector<8x32xf32>
    %1 = arith.truncf %0 : vector<8x32xf32> to vector<8x32xbf16>
    %c0_1 = arith.constant 0 : index
    %c0_2 = arith.constant 0 : index
    %2 = vector.load %arg2[%c0_1, %c0_2] : memref<32x512xbf16, #tpu.memory_space<vmem>>, vector<32x512xbf16>
    %cst = arith.constant dense<0.000000e+00> : vector<8x512xf32>
    %3 = tpu.matmul %1, %2, %cst {dimension_numbers = #tpu.dot_dimension_numbers<[1], [0], [0], [1], [0, 0, 1, 1], [], []>} : vector<8x32xbf16>, vector<32x512xbf16>, vector<8x512xf32> -> vector<8x512xf32>
    %c0_3 = arith.constant 0 : index
    %c0_4 = arith.constant 0 : index
    %4 = vector.load %arg3[%c0_3, %c0_4] : memref<1x512xf32, #tpu.memory_space<vmem>>, vector<1x512xf32>
    %5 = vector.broadcast %4 : vector<1x512xf32> to vector<8x512xf32>
    %6 = arith.addf %3, %5 : vector<8x512xf32>
    %cst_5 = arith.constant 0.000000e+00 : f32
    %7 = vector.broadcast %cst_5 : f32 to vector<8x512xf32>
    %8 = arith.maximumf %6, %7 : vector<8x512xf32>
    %9 = arith.truncf %8 : vector<8x512xf32> to vector<8x512xbf16>
    %c0_6 = arith.constant 0 : index
    %c0_7 = arith.constant 0 : index
    %10 = vector.load %arg4[%c0_6, %c0_7] : memref<512x1024xbf16, #tpu.memory_space<vmem>>, vector<512x1024xbf16>
    %cst_8 = arith.constant dense<0.000000e+00> : vector<8x1024xf32>
    %11 = tpu.matmul %9, %10, %cst_8 {dimension_numbers = #tpu.dot_dimension_numbers<[1], [0], [0], [1], [0, 0, 1, 1], [], []>} : vector<8x512xbf16>, vector<512x1024xbf16>, vector<8x1024xf32> -> vector<8x1024xf32>
    %c0_9 = arith.constant 0 : index
    %c0_10 = arith.constant 0 : index
    %12 = vector.load %arg5[%c0_9, %c0_10] : memref<1x1024xf32, #tpu.memory_space<vmem>>, vector<1x1024xf32>
    %13 = vector.broadcast %12 : vector<1x1024xf32> to vector<8x1024xf32>
    %14 = arith.addf %11, %13 : vector<8x1024xf32>
    %cst_11 = arith.constant 0.000000e+00 : f32
    %15 = vector.broadcast %cst_11 : f32 to vector<8x1024xf32>
    %16 = arith.maximumf %14, %15 : vector<8x1024xf32>
    %17 = arith.truncf %16 : vector<8x1024xf32> to vector<8x1024xbf16>
    %c0_12 = arith.constant 0 : index
    %c0_13 = arith.constant 0 : index
    %18 = vector.load %arg6[%c0_12, %c0_13] : memref<1024x512xbf16, #tpu.memory_space<vmem>>, vector<1024x512xbf16>
    %cst_14 = arith.constant dense<0.000000e+00> : vector<8x512xf32>
    %19 = tpu.matmul %17, %18, %cst_14 {dimension_numbers = #tpu.dot_dimension_numbers<[1], [0], [0], [1], [0, 0, 1, 1], [], []>} : vector<8x1024xbf16>, vector<1024x512xbf16>, vector<8x512xf32> -> vector<8x512xf32>
    %c0_15 = arith.constant 0 : index
    %c0_16 = arith.constant 0 : index
    %20 = vector.load %arg7[%c0_15, %c0_16] : memref<1x512xf32, #tpu.memory_space<vmem>>, vector<1x512xf32>
    %21 = vector.broadcast %20 : vector<1x512xf32> to vector<8x512xf32>
    %22 = arith.addf %19, %21 : vector<8x512xf32>
    %cst_17 = arith.constant 0.000000e+00 : f32
    %23 = vector.broadcast %cst_17 : f32 to vector<8x512xf32>
    %24 = arith.maximumf %22, %23 : vector<8x512xf32>
    %25 = arith.truncf %24 : vector<8x512xf32> to vector<8x512xbf16>
    %c0_18 = arith.constant 0 : index
    %c0_19 = arith.constant 0 : index
    %26 = vector.load %arg8[%c0_18, %c0_19] : memref<512x16xbf16, #tpu.memory_space<vmem>>, vector<512x16xbf16>
    %cst_20 = arith.constant dense<0.000000e+00> : vector<8x16xf32>
    %27 = tpu.matmul %25, %26, %cst_20 {dimension_numbers = #tpu.dot_dimension_numbers<[1], [0], [0], [1], [0, 0, 1, 1], [], []>} : vector<8x512xbf16>, vector<512x16xbf16>, vector<8x16xf32> -> vector<8x16xf32>
    %c0_21 = arith.constant 0 : index
    %c0_22 = arith.constant 0 : index
    %28 = vector.load %arg9[%c0_21, %c0_22] : memref<1x16xf32, #tpu.memory_space<vmem>>, vector<1x16xf32>
    %29 = vector.broadcast %28 : vector<1x16xf32> to vector<8x16xf32>
    %30 = arith.addf %27, %29 : vector<8x16xf32>
    %cst_23 = arith.constant dense<0xFF800000> : vector<8xf32>
    %31 = vector.multi_reduction <maximumf>, %30, %cst_23 [1] : vector<8x16xf32> to vector<8xf32>
    %32 = vector.shape_cast %31 : vector<8xf32> to vector<8x1xf32>
    %33 = vector.broadcast %32 : vector<8x1xf32> to vector<8x16xf32>
    %34 = arith.subf %30, %33 : vector<8x16xf32>
    %35 = math.exp %34 : vector<8x16xf32>
    %cst_24 = arith.constant dense<0.000000e+00> : vector<8xf32>
    %36 = vector.multi_reduction <add>, %35, %cst_24 [1] : vector<8x16xf32> to vector<8xf32>
    %37 = vector.shape_cast %36 : vector<8xf32> to vector<8x1xf32>
    %38 = math.log %37 : vector<8x1xf32>
    %39 = vector.broadcast %38 : vector<8x1xf32> to vector<8x16xf32>
    %40 = arith.subf %34, %39 : vector<8x16xf32>
    %c0_25 = arith.constant 0 : index
    %c0_26 = arith.constant 0 : index
    %41 = vector.load %arg10[%c0_25, %c0_26] : memref<8x16xf32, #tpu.memory_space<vmem>>, vector<8x16xf32>
    tpu.vector_store %arg10[%c0_25, %c0_26], %40 {strides = array<i32>} : memref<8x16xf32, #tpu.memory_space<vmem>>, vector<8x16xf32>,
    return
  }
  func.func @transform_0(%arg0: i32) -> (i32, i32) {
    %c0_i32 = arith.constant 0 : i32
    %c0_i32_0 = arith.constant 0 : i32
    return %arg0, %c0_i32 : i32, i32
  }
  func.func @transform_1(%arg0: i32) -> (i32, i32) {
    %c0_i32 = arith.constant 0 : i32
    %c0_i32_0 = arith.constant 0 : i32
    %c0_i32_1 = arith.constant 0 : i32
    return %c0_i32, %c0_i32_0 : i32, i32
  }
  func.func @transform_2(%arg0: i32) -> (i32, i32) {
    %c0_i32 = arith.constant 0 : i32
    %c0_i32_0 = arith.constant 0 : i32
    %c0_i32_1 = arith.constant 0 : i32
    return %c0_i32, %c0_i32_0 : i32, i32
  }
  func.func @transform_3(%arg0: i32) -> (i32, i32) {
    %c0_i32 = arith.constant 0 : i32
    %c0_i32_0 = arith.constant 0 : i32
    %c0_i32_1 = arith.constant 0 : i32
    return %c0_i32, %c0_i32_0 : i32, i32
  }
  func.func @transform_4(%arg0: i32) -> (i32, i32) {
    %c0_i32 = arith.constant 0 : i32
    %c0_i32_0 = arith.constant 0 : i32
    %c0_i32_1 = arith.constant 0 : i32
    return %c0_i32, %c0_i32_0 : i32, i32
  }
  func.func @transform_5(%arg0: i32) -> (i32, i32) {
    %c0_i32 = arith.constant 0 : i32
    %c0_i32_0 = arith.constant 0 : i32
    %c0_i32_1 = arith.constant 0 : i32
    return %c0_i32, %c0_i32_0 : i32, i32
  }
  func.func @transform_6(%arg0: i32) -> (i32, i32) {
    %c0_i32 = arith.constant 0 : i32
    %c0_i32_0 = arith.constant 0 : i32
    %c0_i32_1 = arith.constant 0 : i32
    return %c0_i32, %c0_i32_0 : i32, i32
  }
  func.func @transform_7(%arg0: i32) -> (i32, i32) {
    %c0_i32 = arith.constant 0 : i32
    %c0_i32_0 = arith.constant 0 : i32
    %c0_i32_1 = arith.constant 0 : i32
    return %c0_i32, %c0_i32_0 : i32, i32
  }
  func.func @transform_8(%arg0: i32) -> (i32, i32) {
    %c0_i32 = arith.constant 0 : i32
    %c0_i32_0 = arith.constant 0 : i32
    %c0_i32_1 = arith.constant 0 : i32
    return %c0_i32, %c0_i32_0 : i32, i32
  }
  func.func @transform_9(%arg0: i32) -> (i32, i32) {
    %c0_i32 = arith.constant 0 : i32
    %c0_i32_0 = arith.constant 0 : i32
    return %arg0, %c0_i32 : i32, i32
  }
}

</mosaic_0001>

<llo_original>
// kernel: tpu_custom_call.1
$region0: #{tpu_custom_call.1}
  #allocation0 [shape = 'u32[]', space=smem, size = 0x4, offset = 0x4, fixed_abs, tag = 'smem constant byte address 0x4 - core index']
  #allocation1 [shape = 'u32[144,128]{1,0:T(1,128)}', space=vmem, size = 0x12000, scoped, tag = 'internal scratch']
  %s0 = inlined_call_operand.vmem [shape: f32[8,32], index: 0, kind: input, shape index: {}]
  %s1 = inlined_call_operand.vmem [shape: bf16[32,512], index: 1, kind: input, shape index: {}]
  %s2 = inlined_call_operand.vmem [shape: f32[1,512], index: 2, kind: input, shape index: {}]
  %s3 = inlined_call_operand.hbm [shape: bf16[512,1024], index: 3, kind: input, shape index: {}]
  %s4 = inlined_call_operand.vmem [shape: f32[1,1024], index: 4, kind: input, shape index: {}]
  %s5 = inlined_call_operand.hbm [shape: bf16[1024,512], index: 5, kind: input, shape index: {}]
  %s6 = inlined_call_operand.vmem [shape: f32[1,512], index: 6, kind: input, shape index: {}]
  %s7 = inlined_call_operand.vmem [shape: bf16[512,16], index: 7, kind: input, shape index: {}]
  %s8 = inlined_call_operand.vmem [shape: f32[1,16], index: 8, kind: input, shape index: {}]
  %s9 = inlined_call_operand.hbm [shape: f32[8,16], index: 9, kind: output, shape index: {}]
  %s10 = sld [smem:[#allocation0]]
  $region54: #{tpu_custom_call.1} parent=0
    _
  %s12 = ssub.s32 1, %s10
  %s13 = scalar_select 0, %s12, %s10
  $region1: #{tpu_custom_call.1} parent=0
    #allocation2 [shape = 'u8[1048576]{0}', space=vmem, size = 0x100000, scoped, tag = 'input window, operand 3, single buffered']
    #allocation3 [shape = 's32[1]{0}', space=sflag, size = 0x4, scoped, tag = 'scoped memory for tpu_custom_call.1']
    #allocation4 [shape = 's32[1]{0}', space=sflag, size = 0x4, scoped, tag = 'scoped memory for tpu_custom_call.1']
    #allocation5 [shape = 'u8[1048576]{0}', space=vmem, size = 0x100000, scoped, tag = 'input window, operand 5, single buffered']
    #allocation6 [shape = 's32[1]{0}', space=sflag, size = 0x4, scoped, tag = 'scoped memory for tpu_custom_call.1']
    #allocation7 [shape = 'u8[4096]{0}', space=vmem, size = 0x1000, scoped, tag = 'output window, operand 0, single buffered']
    %14 = vsyncpa [#allocation3], 0
    %15 = vsyncpa [#allocation6], 0
    %16 = vsyncpa [#allocation4], 0
    // Predicated region
    $region2: #{tpu_custom_call.1} parent=1 // pred_check
      _
    $region3: #{tpu_custom_call.1} parent=1 // pred_check_branch
      %18 = sbr.rel (0) target = $region5
    $region4: #{tpu_custom_call.1} parent=1 // pred_region
      _
    $region5: #{tpu_custom_call.1} parent=1 // pred_fallthru
      _
    // Predicated region
    $region6: #{tpu_custom_call.1} parent=1 // pred_check
      _
    $region7: #{tpu_custom_call.1} parent=1 // pred_check_branch
      %20 = sbr.rel (0) target = $region9
    $region8: #{tpu_custom_call.1} parent=1 // pred_region
      _
    $region9: #{tpu_custom_call.1} parent=1 // pred_fallthru
      _
    // Predicated region
    $region10: #{tpu_custom_call.1} parent=1 // pred_check
      _
    $region11: #{tpu_custom_call.1} parent=1 // pred_check_branch
      %22 = sbr.rel (0) target = $region13
    $region12: #{tpu_custom_call.1} parent=1 // pred_region
      _
    $region13: #{tpu_custom_call.1} parent=1 // pred_fallthru
      _
    // Predicated region
    $region14: #{tpu_custom_call.1} parent=1 // pred_check
      _
    $region15: #{tpu_custom_call.1} parent=1 // pred_check_branch
      %24 = sbr.rel (0) target = $region17
    $region16: #{tpu_custom_call.1} parent=1 // pred_region
      %s26 = ssub.s32 32768, 32768
      %27 = vsyncadd [#allocation3], %s26
      %s28 = sshll.u32 [#allocation2], 4
      %s29 = int_to_ptr.vmem [resolvable:$true] %s28
      %34 = dma.hbm_to_vmem [thread:$0]  %s3, 32768, %s29, [#allocation3], 512, 512, 32
    $region17: #{tpu_custom_call.1} parent=1 // pred_fallthru
      _
    // Predicated region
    $region18: #{tpu_custom_call.1} parent=1 // pred_check
      _
    $region19: #{tpu_custom_call.1} parent=1 // pred_check_branch
      %36 = sbr.rel (0) target = $region21
    $region20: #{tpu_custom_call.1} parent=1 // pred_region
      _
    $region21: #{tpu_custom_call.1} parent=1 // pred_fallthru
      _
    // Predicated region
    $region22: #{tpu_custom_call.1} parent=1 // pred_check
      _
    $region23: #{tpu_custom_call.1} parent=1 // pred_check_branch
      %38 = sbr.rel (0) target = $region25
    $region24: #{tpu_custom_call.1} parent=1 // pred_region
      %s40 = ssub.s32 32768, 32768
      %41 = vsyncadd [#allocation6], %s40
      %s42 = sshll.u32 [#allocation5], 4
      %s43 = int_to_ptr.vmem [resolvable:$true] %s42
      %48 = dma.hbm_to_vmem [thread:$0]  %s5, 32768, %s43, [#allocation6], 256, 256, 16
    $region25: #{tpu_custom_call.1} parent=1 // pred_fallthru
      _
    // Predicated region
    $region26: #{tpu_custom_call.1} parent=1 // pred_check
      _
    $region27: #{tpu_custom_call.1} parent=1 // pred_check_branch
      %50 = sbr.rel (0) target = $region29
    $region28: #{tpu_custom_call.1} parent=1 // pred_region
      _
    $region29: #{tpu_custom_call.1} parent=1 // pred_fallthru
      _
    // Predicated region
    $region30: #{tpu_custom_call.1} parent=1 // pred_check
      _
    $region31: #{tpu_custom_call.1} parent=1 // pred_check_branch
      %52 = sbr.rel (0) target = $region33
    $region32: #{tpu_custom_call.1} parent=1 // pred_region
      _
    $region33: #{tpu_custom_call.1} parent=1 // pred_fallthru
      _
    // Predicated region
    $region34: #{tpu_custom_call.1} parent=1 // pred_check
      _
    $region35: #{tpu_custom_call.1} parent=1 // pred_check_branch
      %54 = sbr.rel (0) target = $region37
    $region36: #{tpu_custom_call.1} parent=1 // pred_region
      _
    $region37: #{tpu_custom_call.1} parent=1 // pred_fallthru
      _
    // Predicated region
    $region38: #{tpu_custom_call.1} parent=1 // pred_check
      _
    $region39: #{tpu_custom_call.1} parent=1 // pred_check_branch
      %56 = sbr.rel (0) target = $region41
    $region40: #{tpu_custom_call.1} parent=1 // pred_region
      %57 = dma.done [#allocation3], 32768
    $region41: #{tpu_custom_call.1} parent=1 // pred_fallthru
      _
    // Predicated region
    $region42: #{tpu_custom_call.1} parent=1 // pred_check
      _
    $region43: #{tpu_custom_call.1} parent=1 // pred_check_branch
      %59 = sbr.rel (0) target = $region45
    $region44: #{tpu_custom_call.1} parent=1 // pred_region
      %60 = dma.done [#allocation6], 32768
    $region45: #{tpu_custom_call.1} parent=1 // pred_fallthru
      _
    %v62 = vld [vmem:[%s0] sm:$0xff]
    %v63 = vpack.c.bf16 %v62, %v62
    %v64 = vld [vmem:[%s1] sm:$0xff]
    %v65 = vld [vmem:[%s1 + $0x8] sm:$0xff]
    %v66 = vld [vmem:[%s1 + $0x10] sm:$0xff]
    %v67 = vld [vmem:[%s1 + $0x18] sm:$0xff]
    %v68 = vld [vmem:[%s1 + $0x20] sm:$0xff]
    %v69 = vld [vmem:[%s1 + $0x28] sm:$0xff]
    %v70 = vld [vmem:[%s1 + $0x30] sm:$0xff]
    %v71 = vld [vmem:[%s1 + $0x38] sm:$0xff]
    %v72 = vld [vmem:[%s2] sm:$0xf]
    %v74 = vlaneseq
    %v75 = vshrl.u32 %v74, 7
    %v76 = vsub.s32 0, %v75
    %v77 = vrot.slane %v72, %v76
    %v78 = vlaneseq
    %v79 = vshrl.u32 %v78, 7
    %v80 = vsub.s32 1, %v79
    %v81 = vrot.slane %v72, %v80
    %v82 = vlaneseq
    %v83 = vshrl.u32 %v82, 7
    %v84 = vsub.s32 2, %v83
    %v85 = vrot.slane %v72, %v84
    %v86 = vlaneseq
    %v87 = vshrl.u32 %v86, 7
    %v88 = vsub.s32 3, %v87
    %v89 = vrot.slane %v72, %v88
    %v102 = vunpack.c.l.b16 %v64
    %v103 = vunpack.c.h.b16 %v64
    %v104 = vunpack.c.l.b16 %v65
    %v105 = vunpack.c.h.b16 %v65
    %v106 = vunpack.c.l.b16 %v66
    %v107 = vunpack.c.h.b16 %v66
    %v108 = vunpack.c.l.b16 %v67
    %v109 = vunpack.c.h.b16 %v67
    %v110 = vunpack.c.l.b16 %v68
    %v111 = vunpack.c.h.b16 %v68
    %v112 = vunpack.c.l.b16 %v69
    %v113 = vunpack.c.h.b16 %v69
    %v114 = vunpack.c.l.b16 %v70
    %v115 = vunpack.c.h.b16 %v70
    %v116 = vunpack.c.l.b16 %v71
    %v117 = vunpack.c.h.b16 %v71
    %v118 = vpack.c.b16 %v106, %v102
    %v119 = vpack.c.b16 %v107, %v103
    %v120 = vpack.c.b16 %v108, %v104
    %v121 = vpack.c.b16 %v109, %v105
    %v122 = vpack.c.b16 %v114, %v110
    %v123 = vpack.c.b16 %v115, %v111
    %v124 = vpack.c.b16 %v116, %v112
    %v125 = vpack.c.b16 %v117, %v113
    %vm134 = vcmask 261120
    %v136 = vsel %vm134, %v63, 0
    %138 = vmatprep.subr.bf16.mxu0 0
    %139 = vmatpush1.bf16.msra.mxu0 0
    %140 = vmatprep.subr.bf16.mxu0 0
    %141 = vmatpush1.bf16.msra.mxu0 0
    %142 = vmatprep.subr.bf16.mxu0 0
    %143 = vmatpush1.bf16.msra.mxu0 0
    %144 = vmatprep.subr.bf16.mxu0 0
    %145 = vmatpush1.bf16.msra.mxu0 0
    %146 = vmatprep.subr.bf16.mxu0 0
    %147 = vmatpush1.bf16.msra.mxu0 0
    %148 = vmatprep.subr.bf16.mxu0 0
    %149 = vmatpush1.bf16.msra.mxu0 0
    %150 = vmatprep.subr.bf16.mxu0 %v123
    %151 = vmatpush1.bf16.msra.mxu0 %v122
    %152 = vmatprep.subr.bf16.mxu0 %v119
    %153 = vmatpush1.bf16.msra.mxu0 %v118
    %154 = vmatprep.subr.bf16.mxu0 0
    %155 = vmatpush2.bf16.msra.mxu0 0
    %156 = vmatprep.subr.bf16.mxu0 0
    %157 = vmatpush2.bf16.msra.mxu0 0
    %158 = vmatprep.subr.bf16.mxu0 0
    %159 = vmatpush2.bf16.msra.mxu0 0
    %160 = vmatprep.subr.bf16.mxu0 0
    %161 = vmatpush2.bf16.msra.mxu0 0
    %162 = vmatprep.subr.bf16.mxu0 0
    %163 = vmatpush2.bf16.msra.mxu0 0
    %164 = vmatprep.subr.bf16.mxu0 0
    %165 = vmatpush2.bf16.msra.mxu0 0
    %166 = vmatprep.subr.bf16.mxu0 0
    %167 = vmatpush2.bf16.msra.mxu0 0
    %168 = vmatprep.subr.bf16.mxu0 0
    %169 = vmatpush2.bf16.msra.mxu0 0
    %170 = vmatprep.mubr.bf16.mxu0 0
    %171 = vmatmul.mubr.bf16.gmra.mxu0 %v136
    %v172 = vpop.f32.mrf.mxu0
    %v173 = vadd.f32 %v77, %v172
    %v174 = vpop.f32.mrf.mxu0
    %v175 = vadd.f32 %v81, %v174
    %v176 = vpop.f32.mrf.mxu0
    %v177 = vpop.f32.mrf.mxu0
    %178 = vdwg.mxu0
    %179 = vmatprep.subr.bf16.mxu0 0
    %180 = vmatpush1.bf16.msra.mxu0 0
    %181 = vmatprep.subr.bf16.mxu0 0
    %182 = vmatpush1.bf16.msra.mxu0 0
    %183 = vmatprep.subr.bf16.mxu0 0
    %184 = vmatpush1.bf16.msra.mxu0 0
    %185 = vmatprep.subr.bf16.mxu0 0
    %186 = vmatpush1.bf16.msra.mxu0 0
    %187 = vmatprep.subr.bf16.mxu0 0
    %188 = vmatpush1.bf16.msra.mxu0 0
    %189 = vmatprep.subr.bf16.mxu0 0
    %190 = vmatpush1.bf16.msra.mxu0 0
    %191 = vmatprep.subr.bf16.mxu0 %v125
    %192 = vmatpush1.bf16.msra.mxu0 %v124
    %193 = vmatprep.subr.bf16.mxu0 %v121
    %194 = vmatpush1.bf16.msra.mxu0 %v120
    %195 = vmatprep.subr.bf16.mxu0 0
    %196 = vmatpush2.bf16.msra.mxu0 0
    %197 = vmatprep.subr.bf16.mxu0 0
    %198 = vmatpush2.bf16.msra.mxu0 0
    %199 = vmatprep.subr.bf16.mxu0 0
    %200 = vmatpush2.bf16.msra.mxu0 0
    %201 = vmatprep.subr.bf16.mxu0 0
    %202 = vmatpush2.bf16.msra.mxu0 0
    %203 = vmatprep.subr.bf16.mxu0 0
    %204 = vmatpush2.bf16.msra.mxu0 0
    %205 = vmatprep.subr.bf16.mxu0 0
    %206 = vmatpush2.bf16.msra.mxu0 0
    %207 = vmatprep.subr.bf16.mxu0 0
    %208 = vmatpush2.bf16.msra.mxu0 0
    %209 = vmatprep.subr.bf16.mxu0 0
    %210 = vmatpush2.bf16.msra.mxu0 0
    %211 = vmatprep.mubr.bf16.mxu0 0
    %212 = vmatmul.mubr.bf16.gmra.mxu0 %v136
    %v213 = vpop.f32.mrf.mxu0
    %v214 = vadd.f32 %v85, %v213
    %v215 = vpop.f32.mrf.mxu0
    %v216 = vadd.f32 %v89, %v215
    %v217 = vpop.f32.mrf.mxu0
    %v218 = vpop.f32.mrf.mxu0
    %219 = vdwg.mxu0
    %v220 = vmax.f32 %v173, 0.0
    %v221 = vmax.f32 %v175, 0.0
    %v222 = vmax.f32 %v214, 0.0
    %v223 = vmax.f32 %v216, 0.0
    %v224 = vpack.c.bf16 %v220, %v220
    %v225 = vpack.c.bf16 %v221, %v221
    %v226 = vpack.c.bf16 %v222, %v222
    %v227 = vpack.c.bf16 %v223, %v223
    %v228 = vld [vmem:[#allocation2] sm:$0xff]
    %v229 = vld [vmem:[#allocation2 + $0x8] sm:$0xff]
    %v230 = vld [vmem:[#allocation2 + $0x10] sm:$0xff]
    %v231 = vld [vmem:[#allocation2 + $0x18] sm:$0xff]
    %v232 = vld [vmem:[#allocation2 + $0x20] sm:$0xff]
    %v233 = vld [vmem:[#allocation2 + $0x28] sm:$0xff]
    %v234 = vld [vmem:[#allocation2 + $0x30] sm:$0xff]
    %v235 = vld [vmem:[#allocation2 + $0x38] sm:$0xff]
    %v236 = vld [vmem:[#allocation2 + $0x40] sm:$0xff]
    %v237 = vld [vmem:[#allocation2 + $0x48] sm:$0xff]
    %v238 = vld [vmem:[#allocation2 + $0x50] sm:$0xff]
    %v239 = vld [vmem:[#allocation2 + $0x58] sm:$0xff]
    %v240 = vld [vmem:[#allocation2 + $0x60] sm:$0xff]
    %v241 = vld [vmem:[#allocation2 + $0x68] sm:$0xff]
    %v242 = vld [vmem:[#allocation2 + $0x70] sm:$0xff]
    %v243 = vld [vmem:[#allocation2 + $0x78] sm:$0xff]
    %v244 = vld [vmem:[#allocation2 + $0x80] sm:$0xff]
    %v245 = vld [vmem:[#allocation2 + $0x88] sm:$0xff]
    %v246 = vld [vmem:[#allocation2 + $0x90] sm:$0xff]
    %v247 = vld [vmem:[#allocation2 + $0x98] sm:$0xff]
    %v248 = vld [vmem:[#allocation2 + $0xa0] sm:$0xff]
    %v249 = vld [vmem:[#allocation2 + $0xa8] sm:$0xff]
    %v250 = vld [vmem:[#allocation2 + $0xb0] sm:$0xff]
    %v251 = vld [vmem:[#allocation2 + $0xb8] sm:$0xff]
    %v252 = vld [vmem:[#allocation2 + $0xc0] sm:$0xff]
    %v253 = vld [vmem:[#allocation2 + $0xc8] sm:$0xff]
    %v254 = vld [vmem:[#allocation2 + $0xd0] sm:$0xff]
    %v255 = vld [vmem:[#allocation2 + $0xd8] sm:$0xff]
    %v256 = vld [vmem:[#allocation2 + $0xe0] sm:$0xff]
    %v257 = vld [vmem:[#allocation2 + $0xe8] sm:$0xff]
    %v258 = vld [vmem:[#allocation2 + $0xf0] sm:$0xff]
    %v259 = vld [vmem:[#allocation2 + $0xf8] sm:$0xff]
    %v260 = vld [vmem:[#allocation2 + $0x100] sm:$0xff]
    %v261 = vld [vmem:[#allocation2 + $0x108] sm:$0xff]
    %v262 = vld [vmem:[#allocation2 + $0x110] sm:$0xff]
    %v263 = vld [vmem:[#allocation2 + $0x118] sm:$0xff]
    %v264 = vld [vmem:[#allocation2 + $0x120] sm:$0xff]
    %v265 = vld [vmem:[#allocation2 + $0x128] sm:$0xff]
    %v266 = vld [vmem:[#allocation2 + $0x130] sm:$0xff]
    %v267 = vld [vmem:[#allocation2 + $0x138] sm:$0xff]
    %v268 = vld [vmem:[#allocation2 + $0x140] sm:$0xff]
    %v269 = vld [vmem:[#allocation2 + $0x148] sm:$0xff]
    %v270 = vld [vmem:[#allocation2 + $0x150] sm:$0xff]
    %v271 = vld [vmem:[#allocation2 + $0x158] sm:$0xff]
    %v272 = vld [vmem:[#allocation2 + $0x160] sm:$0xff]
    %v273 = vld [vmem:[#allocation2 + $0x168] sm:$0xff]
    %v274 = vld [vmem:[#allocation2 + $0x170] sm:$0xff]
    %v275 = vld [vmem:[#allocation2 + $0x178] sm:$0xff]
    %v276 = vld [vmem:[#allocation2 + $0x180] sm:$0xff]
    %v277 = vld [vmem:[#allocation2 + $0x188] sm:$0xff]
    %v278 = vld [vmem:[#allocation2 + $0x190] sm:$0xff]
    %v279 = vld [vmem:[#allocation2 + $0x198] sm:$0xff]
    %v280 = vld [vmem:[#allocation2 + $0x1a0] sm:$0xff]
    %v281 = vld [vmem:[#allocation2 + $0x1a8] sm:$0xff]
    %v282 = vld [vmem:[#allocation2 + $0x1b0] sm:$0xff]
    %v283 = vld [vmem:[#allocation2 + $0x1b8] sm:$0xff]
    %v284 = vld [vmem:[#allocation2 + $0x1c0] sm:$0xff]
    %v285 = vld [vmem:[#allocation2 + $0x1c8] sm:$0xff]
    %v286 = vld [vmem:[#allocation2 + $0x1d0] sm:$0xff]
    %v287 = vld [vmem:[#allocation2 + $0x1d8] sm:$0xff]
    %v288 = vld [vmem:[#allocation2 + $0x1e0] sm:$0xff]
    %v289 = vld [vmem:[#allocation2 + $0x1e8] sm:$0xff]
    %v290 = vld [vmem:[#allocation2 + $0x1f0] sm:$0xff]
    %v291 = vld [vmem:[#allocation2 + $0x1f8] sm:$0xff]
    %v292 = vld [vmem:[#allocation2 + $0x200] sm:$0xff]
    %v293 = vld [vmem:[#allocation2 + $0x208] sm:$0xff]
    %v294 = vld [vmem:[#allocation2 + $0x210] sm:$0xff]
    %v295 = vld [vmem:[#allocation2 + $0x218] sm:$0xff]
    %v296 = vld [vmem:[#allocation2 + $0x220] sm:$0xff]
    %v297 = vld [vmem:[#allocation2 + $0x228] sm:$0xff]
    %v298 = vld [vmem:[#allocation2 + $0x230] sm:$0xff]
    %v299 = vld [vmem:[#allocation2 + $0x238] sm:$0xff]
    %v300 = vld [vmem:[#allocation2 + $0x240] sm:$0xff]
    %v301 = vld [vmem:[#allocation2 + $0x248] sm:$0xff]
    %v302 = vld [vmem:[#allocation2 + $0x250] sm:$0xff]
    %v303 = vld [vmem:[#allocation2 + $0x258] sm:$0xff]
    %v304 = vld [vmem:[#allocation2 + $0x260] sm:$0xff]
    %v305 = vld [vmem:[#allocation2 + $0x268] sm:$0xff]
    %v306 = vld [vmem:[#allocation2 + $0x270] sm:$0xff]
    %v307 = vld [vmem:[#allocation2 + $0x278] sm:$0xff]
    %v308 = vld [vmem:[#allocation2 + $0x280] sm:$0xff]
    %v309 = vld [vmem:[#allocation2 + $0x288] sm:$0xff]
    %v310 = vld [vmem:[#allocation2 + $0x290] sm:$0xff]
    %v311 = vld [vmem:[#allocation2 + $0x298] sm:$0xff]
    %v312 = vld [vmem:[#allocation2 + $0x2a0] sm:$0xff]
    %v313 = vld [vmem:[#allocation2 + $0x2a8] sm:$0xff]
    %v314 = vld [vmem:[#allocation2 + $0x2b0] sm:$0xff]
    %v315 = vld [vmem:[#allocation2 + $0x2b8] sm:$0xff]
    %v316 = vld [vmem:[#allocation2 + $0x2c0] sm:$0xff]
    %v317 = vld [vmem:[#allocation2 + $0x2c8] sm:$0xff]
    %v318 = vld [vmem:[#allocation2 + $0x2d0] sm:$0xff]
    %v319 = vld [vmem:[#allocation2 + $0x2d8] sm:$0xff]
    %v320 = vld [vmem:[#allocation2 + $0x2e0] sm:$0xff]
    %v321 = vld [vmem:[#allocation2 + $0x2e8] sm:$0xff]
    %v322 = vld [vmem:[#allocation2 + $0x2f0] sm:$0xff]
    %v323 = vld [vmem:[#allocation2 + $0x2f8] sm:$0xff]
    %v324 = vld [vmem:[#allocation2 + $0x300] sm:$0xff]
    %v325 = vld [vmem:[#allocation2 + $0x308] sm:$0xff]
    %v326 = vld [vmem:[#allocation2 + $0x310] sm:$0xff]
    %v327 = vld [vmem:[#allocation2 + $0x318] sm:$0xff]
    %v328 = vld [vmem:[#allocation2 + $0x320] sm:$0xff]
    %v329 = vld [vmem:[#allocation2 + $0x328] sm:$0xff]
    %v330 = vld [vmem:[#allocation2 + $0x330] sm:$0xff]
    %v331 = vld [vmem:[#allocation2 + $0x338] sm:$0xff]
    %v332 = vld [vmem:[#allocation2 + $0x340] sm:$0xff]
    %v333 = vld [vmem:[#allocation2 + $0x348] sm:$0xff]
    %v334 = vld [vmem:[#allocation2 + $0x350] sm:$0xff]
    %v335 = vld [vmem:[#allocation2 + $0x358] sm:$0xff]
    %v336 = vld [vmem:[#allocation2 + $0x360] sm:$0xff]
    %v337 = vld [vmem:[#allocation2 + $0x368] sm:$0xff]
    %v338 = vld [vmem:[#allocation2 + $0x370] sm:$0xff]
    %v339 = vld [vmem:[#allocation2 + $0x378] sm:$0xff]
    %v340 = vld [vmem:[#allocation2 + $0x380] sm:$0xff]
    %v341 = vld [vmem:[#allocation2 + $0x388] sm:$0xff]
    %v342 = vld [vmem:[#allocation2 + $0x390] sm:$0xff]
    %v343 = vld [vmem:[#allocation2 + $0x398] sm:$0xff]
    %v344 = vld [vmem:[#allocation2 + $0x3a0] sm:$0xff]
    %v345 = vld [vmem:[#allocation2 + $0x3a8] sm:$0xff]
    %v346 = vld [vmem:[#allocation2 + $0x3b0] sm:$0xff]
    %v347 = vld [vmem:[#allocation2 + $0x3b8] sm:$0xff]
    %v348 = vld [vmem:[#allocation2 + $0x3c0] sm:$0xff]
    %v349 = vld [vmem:[#allocation2 + $0x3c8] sm:$0xff]
    %v350 = vld [vmem:[#allocation2 + $0x3d0] sm:$0xff]
    %v351 = vld [vmem:[#allocation2 + $0x3d8] sm:$0xff]
    %v352 = vld [vmem:[#allocation2 + $0x3e0] sm:$0xff]
    %v353 = vld [vmem:[#allocation2 + $0x3e8] sm:$0xff]
    %v354 = vld [vmem:[#allocation2 + $0x3f0] sm:$0xff]
    %v355 = vld [vmem:[#allocation2 + $0x3f8] sm:$0xff]
    %v356 = vld [vmem:[#allocation2 + $0x400] sm:$0xff]
    %v357 = vld [vmem:[#allocation2 + $0x408] sm:$0xff]
    %v358 = vld [vmem:[#allocation2 + $0x410] sm:$0xff]
    %v359 = vld [vmem:[#allocation2 + $0x418] sm:$0xff]
    %v360 = vld [vmem:[#allocation2 + $0x420] sm:$0xff]
    %v361 = vld [vmem:[#allocation2 + $0x428] sm:$0xff]
    %v362 = vld [vmem:[#allocation2 + $0x430] sm:$0xff]
    %v363 = vld [vmem:[#allocation2 + $0x438] sm:$0xff]
    %v364 = vld [vmem:[#allocation2 + $0x440] sm:$0xff]
    %v365 = vld [vmem:[#allocation2 + $0x448] sm:$0xff]
    %v366 = vld [vmem:[#allocation2 + $0x450] sm:$0xff]
    %v367 = vld [vmem:[#allocation2 + $0x458] sm:$0xff]
    %v368 = vld [vmem:[#allocation2 + $0x460] sm:$0xff]
    %v369 = vld [vmem:[#allocation2 + $0x468] sm:$0xff]
    %v370 = vld [vmem:[#allocation2 + $0x470] sm:$0xff]
    %v371 = vld [vmem:[#allocation2 + $0x478] sm:$0xff]
    %v372 = vld [vmem:[#allocation2 + $0x480] sm:$0xff]
    %v373 = vld [vmem:[#allocation2 + $0x488] sm:$0xff]
    %v374 = vld [vmem:[#allocation2 + $0x490] sm:$0xff]
    %v375 = vld [vmem:[#allocation2 + $0x498] sm:$0xff]
    %v376 = vld [vmem:[#allocation2 + $0x4a0] sm:$0xff]
    %v377 = vld [vmem:[#allocation2 + $0x4a8] sm:$0xff]
    %v378 = vld [vmem:[#allocation2 + $0x4b0] sm:$0xff]
    %v379 = vld [vmem:[#allocation2 + $0x4b8] sm:$0xff]
    %v380 = vld [vmem:[#allocation2 + $0x4c0] sm:$0xff]
    %v381 = vld [vmem:[#allocation2 + $0x4c8] sm:$0xff]
    %v382 = vld [vmem:[#allocation2 + $0x4d0] sm:$0xff]
    %v383 = vld [vmem:[#allocation2 + $0x4d8] sm:$0xff]
    %v384 = vld [vmem:[#allocation2 + $0x4e0] sm:$0xff]
    %v385 = vld [vmem:[#allocation2 + $0x4e8] sm:$0xff]
    %v386 = vld [vmem:[#allocation2 + $0x4f0] sm:$0xff]
    %v387 = vld [vmem:[#allocation2 + $0x4f8] sm:$0xff]
    %v388 = vld [vmem:[#allocation2 + $0x500] sm:$0xff]
    %v389 = vld [vmem:[#allocation2 + $0x508] sm:$0xff]
    %v390 = vld [vmem:[#allocation2 + $0x510] sm:$0xff]
    %v391 = vld [vmem:[#allocation2 + $0x518] sm:$0xff]
    %v392 = vld [vmem:[#allocation2 + $0x520] sm:$0xff]
    %v393 = vld [vmem:[#allocation2 + $0x528] sm:$0xff]
    %v394 = vld [vmem:[#allocation2 + $0x530] sm:$0xff]
    %v395 = vld [vmem:[#allocation2 + $0x538] sm:$0xff]
    %v396 = vld [vmem:[#allocation2 + $0x540] sm:$0xff]
    %v397 = vld [vmem:[#allocation2 + $0x548] sm:$0xff]
    %v398 = vld [vmem:[#allocation2 + $0x550] sm:$0xff]
    %v399 = vld [vmem:[#allocation2 + $0x558] sm:$0xff]
    %v400 = vld [vmem:[#allocation2 + $0x560] sm:$0xff]
    %v401 = vld [vmem:[#allocation2 + $0x568] sm:$0xff]
    %v402 = vld [vmem:[#allocation2 + $0x570] sm:$0xff]
    %v403 = vld [vmem:[#allocation2 + $0x578] sm:$0xff]
    %v404 = vld [vmem:[#allocation2 + $0x580] sm:$0xff]
    %v405 = vld [vmem:[#allocation2 + $0x588] sm:$0xff]
    %v406 = vld [vmem:[#allocation2 + $0x590] sm:$0xff]
    %v407 = vld [vmem:[#allocation2 + $0x598] sm:$0xff]
    %v408 = vld [vmem:[#allocation2 + $0x5a0] sm:$0xff]
    %v409 = vld [vmem:[#allocation2 + $0x5a8] sm:$0xff]
    %v410 = vld [vmem:[#allocation2 + $0x5b0] sm:$0xff]
    %v411 = vld [vmem:[#allocation2 + $0x5b8] sm:$0xff]
    %v412 = vld [vmem:[#allocation2 + $0x5c0] sm:$0xff]
    %v413 = vld [vmem:[#allocation2 + $0x5c8] sm:$0xff]
    %v414 = vld [vmem:[#allocation2 + $0x5d0] sm:$0xff]
    %v415 = vld [vmem:[#allocation2 + $0x5d8] sm:$0xff]
    %v416 = vld [vmem:[#allocation2 + $0x5e0] sm:$0xff]
    %v417 = vld [vmem:[#allocation2 + $0x5e8] sm:$0xff]
    %v418 = vld [vmem:[#allocation2 + $0x5f0] sm:$0xff]
    %v419 = vld [vmem:[#allocation2 + $0x5f8] sm:$0xff]
    %v420 = vld [vmem:[#allocation2 + $0x600] sm:$0xff]
    %v421 = vld [vmem:[#allocation2 + $0x608] sm:$0xff]
    %v422 = vld [vmem:[#allocation2 + $0x610] sm:$0xff]
    %v423 = vld [vmem:[#allocation2 + $0x618] sm:$0xff]
    %v424 = vld [vmem:[#allocation2 + $0x620] sm:$0xff]
    %v425 = vld [vmem:[#allocation2 + $0x628] sm:$0xff]
    %v426 = vld [vmem:[#allocation2 + $0x630] sm:$0xff]
    %v427 = vld [vmem:[#allocation2 + $0x638] sm:$0xff]
    %v428 = vld [vmem:[#allocation2 + $0x640] sm:$0xff]
    %v429 = vld [vmem:[#allocation2 + $0x648] sm:$0xff]
    %v430 = vld [vmem:[#allocation2 + $0x650] sm:$0xff]
    %v431 = vld [vmem:[#allocation2 + $0x658] sm:$0xff]
    %v432 = vld [vmem:[#allocation2 + $0x660] sm:$0xff]
    %v433 = vld [vmem:[#allocation2 + $0x668] sm:$0xff]
    %v434 = vld [vmem:[#allocation2 + $0x670] sm:$0xff]
    %v435 = vld [vmem:[#allocation2 + $0x678] sm:$0xff]
    %v436 = vld [vmem:[#allocation2 + $0x680] sm:$0xff]
    %v437 = vld [vmem:[#allocation2 + $0x688] sm:$0xff]
    %v438 = vld [vmem:[#allocation2 + $0x690] sm:$0xff]
    %v439 = vld [vmem:[#allocation2 + $0x698] sm:$0xff]
    %v440 = vld [vmem:[#allocation2 + $0x6a0] sm:$0xff]
    %v441 = vld [vmem:[#allocation2 + $0x6a8] sm:$0xff]
    %v442 = vld [vmem:[#allocation2 + $0x6b0] sm:$0xff]
    %v443 = vld [vmem:[#allocation2 + $0x6b8] sm:$0xff]
    %v444 = vld [vmem:[#allocation2 + $0x6c0] sm:$0xff]
    %v445 = vld [vmem:[#allocation2 + $0x6c8] sm:$0xff]
    %v446 = vld [vmem:[#allocation2 + $0x6d0] sm:$0xff]
    %v447 = vld [vmem:[#allocation2 + $0x6d8] sm:$0xff]
    %v448 = vld [vmem:[#allocation2 + $0x6e0] sm:$0xff]
    %v449 = vld [vmem:[#allocation2 + $0x6e8] sm:$0xff]
    %v450 = vld [vmem:[#allocation2 + $0x6f0] sm:$0xff]
    %v451 = vld [vmem:[#allocation2 + $0x6f8] sm:$0xff]
    %v452 = vld [vmem:[#allocation2 + $0x700] sm:$0xff]
    %v453 = vld [vmem:[#allocation2 + $0x708] sm:$0xff]
    %v454 = vld [vmem:[#allocation2 + $0x710] sm:$0xff]
    %v455 = vld [vmem:[#allocation2 + $0x718] sm:$0xff]
    %v456 = vld [vmem:[#allocation2 + $0x720] sm:$0xff]
    %v457 = vld [vmem:[#allocation2 + $0x728] sm:$0xff]
    %v458 = vld [vmem:[#allocation2 + $0x730] sm:$0xff]
    %v459 = vld [vmem:[#allocation2 + $0x738] sm:$0xff]
    %v460 = vld [vmem:[#allocation2 + $0x740] sm:$0xff]
    %v461 = vld [vmem:[#allocation2 + $0x748] sm:$0xff]
    %v462 = vld [vmem:[#allocation2 + $0x750] sm:$0xff]
    %v463 = vld [vmem:[#allocation2 + $0x758] sm:$0xff]
    %v464 = vld [vmem:[#allocation2 + $0x760] sm:$0xff]
    %v465 = vld [vmem:[#allocation2 + $0x768] sm:$0xff]
    %v466 = vld [vmem:[#allocation2 + $0x770] sm:$0xff]
    %v467 = vld [vmem:[#allocation2 + $0x778] sm:$0xff]
    %v468 = vld [vmem:[#allocation2 + $0x780] sm:$0xff]
    %v469 = vld [vmem:[#allocation2 + $0x788] sm:$0xff]
    %v470 = vld [vmem:[#allocation2 + $0x790] sm:$0xff]
    %v471 = vld [vmem:[#allocation2 + $0x798] sm:$0xff]
    %v472 = vld [vmem:[#allocation2 + $0x7a0] sm:$0xff]
    %v473 = vld [vmem:[#allocation2 + $0x7a8] sm:$0xff]
    %v474 = vld [vmem:[#allocation2 + $0x7b0] sm:$0xff]
    %v475 = vld [vmem:[#allocation2 + $0x7b8] sm:$0xff]
    %v476 = vld [vmem:[#allocation2 + $0x7c0] sm:$0xff]
    %v477 = vld [vmem:[#allocation2 + $0x7c8] sm:$0xff]
    %v478 = vld [vmem:[#allocation2 + $0x7d0] sm:$0xff]
    %v479 = vld [vmem:[#allocation2 + $0x7d8] sm:$0xff]
    %v480 = vld [vmem:[#allocation2 + $0x7e0] sm:$0xff]
    %v481 = vld [vmem:[#allocation2 + $0x7e8] sm:$0xff]
    %v482 = vld [vmem:[#allocation2 + $0x7f0] sm:$0xff]
    %v483 = vld [vmem:[#allocation2 + $0x7f8] sm:$0xff]
    %v484 = vld [vmem:[%s4] sm:$0xff]
    %v486 = vlaneseq
    %v487 = vshrl.u32 %v486, 7
    %v488 = vsub.s32 0, %v487
    %v489 = vrot.slane %v484, %v488
    %v490 = vlaneseq
    %v491 = vshrl.u32 %v490, 7
    %v492 = vsub.s32 1, %v491
    %v493 = vrot.slane %v484, %v492
    %v494 = vlaneseq
    %v495 = vshrl.u32 %v494, 7
    %v496 = vsub.s32 2, %v495
    %v497 = vrot.slane %v484, %v496
    %v498 = vlaneseq
    %v499 = vshrl.u32 %v498, 7
    %v500 = vsub.s32 3, %v499
    %v501 = vrot.slane %v484, %v500
    %v502 = vlaneseq
    %v503 = vshrl.u32 %v502, 7
    %v504 = vsub.s32 4, %v503
    %v505 = vrot.slane %v484, %v504
    %v506 = vlaneseq
    %v507 = vshrl.u32 %v506, 7
    %v508 = vsub.s32 5, %v507
    %v509 = vrot.slane %v484, %v508
    %v510 = vlaneseq
    %v511 = vshrl.u32 %v510, 7
    %v512 = vsub.s32 6, %v511
    %v513 = vrot.slane %v484, %v512
    %v514 = vlaneseq
    %v515 = vshrl.u32 %v514, 7
    %v516 = vsub.s32 7, %v515
    %v517 = vrot.slane %v484, %v516
    %v782 = vunpack.c.l.b16 %v228
    %v783 = vunpack.c.h.b16 %v228
    %v784 = vunpack.c.l.b16 %v229
    %v785 = vunpack.c.h.b16 %v229
    %v786 = vunpack.c.l.b16 %v230
    %v787 = vunpack.c.h.b16 %v230
    %v788 = vunpack.c.l.b16 %v231
    %v789 = vunpack.c.h.b16 %v231
    %v790 = vunpack.c.l.b16 %v232
    %v791 = vunpack.c.h.b16 %v232
    %v792 = vunpack.c.l.b16 %v233
    %v793 = vunpack.c.h.b16 %v233
    %v794 = vunpack.c.l.b16 %v234
    %v795 = vunpack.c.h.b16 %v234
    %v796 = vunpack.c.l.b16 %v235
    %v797 = vunpack.c.h.b16 %v235
    %v798 = vunpack.c.l.b16 %v236
    %v799 = vunpack.c.h.b16 %v236
    %v800 = vunpack.c.l.b16 %v237
    %v801 = vunpack.c.h.b16 %v237
    %v802 = vunpack.c.l.b16 %v238
    %v803 = vunpack.c.h.b16 %v238
    %v804 = vunpack.c.l.b16 %v239
    %v805 = vunpack.c.h.b16 %v239
    %v806 = vunpack.c.l.b16 %v240
    %v807 = vunpack.c.h.b16 %v240
    %v808 = vunpack.c.l.b16 %v241
    %v809 = vunpack.c.h.b16 %v241
    %v810 = vunpack.c.l.b16 %v242
    %v811 = vunpack.c.h.b16 %v242
    %v812 = vunpack.c.l.b16 %v243
    %v813 = vunpack.c.h.b16 %v243
    %v814 = vunpack.c.l.b16 %v244
    %v815 = vunpack.c.h.b16 %v244
    %v816 = vunpack.c.l.b16 %v245
    %v817 = vunpack.c.h.b16 %v245
    %v818 = vunpack.c.l.b16 %v246
    %v819 = vunpack.c.h.b16 %v246
    %v820 = vunpack.c.l.b16 %v247
    %v821 = vunpack.c.h.b16 %v247
    %v822 = vunpack.c.l.b16 %v248
    %v823 = vunpack.c.h.b16 %v248
    %v824 = vunpack.c.l.b16 %v249
    %v825 = vunpack.c.h.b16 %v249
    %v826 = vunpack.c.l.b16 %v250
    %v827 = vunpack.c.h.b16 %v250
    %v828 = vunpack.c.l.b16 %v251
    %v829 = vunpack.c.h.b16 %v251
    %v830 = vunpack.c.l.b16 %v252
    %v831 = vunpack.c.h.b16 %v252
    %v832 = vunpack.c.l.b16 %v253
    %v833 = vunpack.c.h.b16 %v253
    %v834 = vunpack.c.l.b16 %v254
    %v835 = vunpack.c.h.b16 %v254
    %v836 = vunpack.c.l.b16 %v255
    %v837 = vunpack.c.h.b16 %v255
    %v838 = vunpack.c.l.b16 %v256
    %v839 = vunpack.c.h.b16 %v256
    %v840 = vunpack.c.l.b16 %v257
    %v841 = vunpack.c.h.b16 %v257
    %v842 = vunpack.c.l.b16 %v258
    %v843 = vunpack.c.h.b16 %v258
    %v844 = vunpack.c.l.b16 %v259
    %v845 = vunpack.c.h.b16 %v259
    %v846 = vunpack.c.l.b16 %v260
    %v847 = vunpack.c.h.b16 %v260
    %v848 = vunpack.c.l.b16 %v261
    %v849 = vunpack.c.h.b16 %v261
    %v850 = vunpack.c.l.b16 %v262
    %v851 = vunpack.c.h.b16 %v262
    %v852 = vunpack.c.l.b16 %v263
    %v853 = vunpack.c.h.b16 %v263
    %v854 = vunpack.c.l.b16 %v264
    %v855 = vunpack.c.h.b16 %v264
    %v856 = vunpack.c.l.b16 %v265
    %v857 = vunpack.c.h.b16 %v265
    %v858 = vunpack.c.l.b16 %v266
    %v859 = vunpack.c.h.b16 %v266
    %v860 = vunpack.c.l.b16 %v267
    %v861 = vunpack.c.h.b16 %v267
    %v862 = vunpack.c.l.b16 %v268
    %v863 = vunpack.c.h.b16 %v268
    %v864 = vunpack.c.l.b16 %v269
    %v865 = vunpack.c.h.b16 %v269
    %v866 = vunpack.c.l.b16 %v270
    %v867 = vunpack.c.h.b16 %v270
    %v868 = vunpack.c.l.b16 %v271
    %v869 = vunpack.c.h.b16 %v271
    %v870 = vunpack.c.l.b16 %v272
    %v871 = vunpack.c.h.b16 %v272
    %v872 = vunpack.c.l.b16 %v273
    %v873 = vunpack.c.h.b16 %v273
    %v874 = vunpack.c.l.b16 %v274
    %v875 = vunpack.c.h.b16 %v274
    %v876 = vunpack.c.l.b16 %v275
    %v877 = vunpack.c.h.b16 %v275
    %v878 = vunpack.c.l.b16 %v276
    %v879 = vunpack.c.h.b16 %v276
    %v880 = vunpack.c.l.b16 %v277
    %v881 = vunpack.c.h.b16 %v277
    %v882 = vunpack.c.l.b16 %v278
    %v883 = vunpack.c.h.b16 %v278
    %v884 = vunpack.c.l.b16 %v279
    %v885 = vunpack.c.h.b16 %v279
    %v886 = vunpack.c.l.b16 %v280
    %v887 = vunpack.c.h.b16 %v280
    %v888 = vunpack.c.l.b16 %v281
    %v889 = vunpack.c.h.b16 %v281
    %v890 = vunpack.c.l.b16 %v282
    %v891 = vunpack.c.h.b16 %v282
    %v892 = vunpack.c.l.b16 %v283
    %v893 = vunpack.c.h.b16 %v283
    %v894 = vunpack.c.l.b16 %v284
    %v895 = vunpack.c.h.b16 %v284
    %v896 = vunpack.c.l.b16 %v285
    %v897 = vunpack.c.h.b16 %v285
    %v898 = vunpack.c.l.b16 %v286
    %v899 = vunpack.c.h.b16 %v286
    %v900 = vunpack.c.l.b16 %v287
    %v901 = vunpack.c.h.b16 %v287
    %v902 = vunpack.c.l.b16 %v288
    %v903 = vunpack.c.h.b16 %v288
    %v904 = vunpack.c.l.b16 %v289
    %v905 = vunpack.c.h.b16 %v289
    %v906 = vunpack.c.l.b16 %v290
    %v907 = vunpack.c.h.b16 %v290
    %v908 = vunpack.c.l.b16 %v291
    %v909 = vunpack.c.h.b16 %v291
    %v910 = vunpack.c.l.b16 %v292
    %v911 = vunpack.c.h.b16 %v292
    %v912 = vunpack.c.l.b16 %v293
    %v913 = vunpack.c.h.b16 %v293
    %v914 = vunpack.c.l.b16 %v294
    %v915 = vunpack.c.h.b16 %v294
    %v916 = vunpack.c.l.b16 %v295
    %v917 = vunpack.c.h.b16 %v295
    %v918 = vunpack.c.l.b16 %v296
    %v919 = vunpack.c.h.b16 %v296
    %v920 = vunpack.c.l.b16 %v297
    %v921 = vunpack.c.h.b16 %v297
    %v922 = vunpack.c.l.b16 %v298
    %v923 = vunpack.c.h.b16 %v298
    %v924 = vunpack.c.l.b16 %v299
    %v925 = vunpack.c.h.b16 %v299
    %v926 = vunpack.c.l.b16 %v300
    %v927 = vunpack.c.h.b16 %v300
    %v928 = vunpack.c.l.b16 %v301
    %v929 = vunpack.c.h.b16 %v301
    %v930 = vunpack.c.l.b16 %v302
    %v931 = vunpack.c.h.b16 %v302
    %v932 = vunpack.c.l.b16 %v303
    %v933 = vunpack.c.h.b16 %v303
    %v934 = vunpack.c.l.b16 %v304
    %v935 = vunpack.c.h.b16 %v304
    %v936 = vunpack.c.l.b16 %v305
    %v937 = vunpack.c.h.b16 %v305
    %v938 = vunpack.c.l.b16 %v306
    %v939 = vunpack.c.h.b16 %v306
    %v940 = vunpack.c.l.b16 %v307
    %v941 = vunpack.c.h.b16 %v307
    %v942 = vunpack.c.l.b16 %v308
    %v943 = vunpack.c.h.b16 %v308
    %v944 = vunpack.c.l.b16 %v309
    %v945 = vunpack.c.h.b16 %v309
    %v946 = vunpack.c.l.b16 %v310
    %v947 = vunpack.c.h.b16 %v310
    %v948 = vunpack.c.l.b16 %v311
    %v949 = vunpack.c.h.b16 %v311
    %v950 = vunpack.c.l.b16 %v312
    %v951 = vunpack.c.h.b16 %v312
    %v952 = vunpack.c.l.b16 %v313
    %v953 = vunpack.c.h.b16 %v313
    %v954 = vunpack.c.l.b16 %v314
    %v955 = vunpack.c.h.b16 %v314
    %v956 = vunpack.c.l.b16 %v315
    %v957 = vunpack.c.h.b16 %v315
    %v958 = vunpack.c.l.b16 %v316
    %v959 = vunpack.c.h.b16 %v316
    %v960 = vunpack.c.l.b16 %v317
    %v961 = vunpack.c.h.b16 %v317
    %v962 = vunpack.c.l.b16 %v318
    %v963 = vunpack.c.h.b16 %v318
    %v964 = vunpack.c.l.b16 %v319
    %v965 = vunpack.c.h.b16 %v319
    %v966 = vunpack.c.l.b16 %v320
    %v967 = vunpack.c.h.b16 %v320
    %v968 = vunpack.c.l.b16 %v321
    %v969 = vunpack.c.h.b16 %v321
    %v970 = vunpack.c.l.b16 %v322
    %v971 = vunpack.c.h.b16 %v322
    %v972 = vunpack.c.l.b16 %v323
    %v973 = vunpack.c.h.b16 %v323
    %v974 = vunpack.c.l.b16 %v324
    %v975 = vunpack.c.h.b16 %v324
    %v976 = vunpack.c.l.b16 %v325
    %v977 = vunpack.c.h.b16 %v325
    %v978 = vunpack.c.l.b16 %v326
    %v979 = vunpack.c.h.b16 %v326
    %v980 = vunpack.c.l.b16 %v327
    %v981 = vunpack.c.h.b16 %v327
    %v982 = vunpack.c.l.b16 %v328
    %v983 = vunpack.c.h.b16 %v328
    %v984 = vunpack.c.l.b16 %v329
    %v985 = vunpack.c.h.b16 %v329
    %v986 = vunpack.c.l.b16 %v330
    %v987 = vunpack.c.h.b16 %v330
    %v988 = vunpack.c.l.b16 %v331
    %v989 = vunpack.c.h.b16 %v331
    %v990 = vunpack.c.l.b16 %v332
    %v991 = vunpack.c.h.b16 %v332
    %v992 = vunpack.c.l.b16 %v333
    %v993 = vunpack.c.h.b16 %v333
    %v994 = vunpack.c.l.b16 %v334
    %v995 = vunpack.c.h.b16 %v334
    %v996 = vunpack.c.l.b16 %v335
    %v997 = vunpack.c.h.b16 %v335
    %v998 = vunpack.c.l.b16 %v336
    %v999 = vunpack.c.h.b16 %v336
    %v1000 = vunpack.c.l.b16 %v337
    %v1001 = vunpack.c.h.b16 %v337
    %v1002 = vunpack.c.l.b16 %v338
    %v1003 = vunpack.c.h.b16 %v338
    %v1004 = vunpack.c.l.b16 %v339
    %v1005 = vunpack.c.h.b16 %v339
    %v1006 = vunpack.c.l.b16 %v340
    %v1007 = vunpack.c.h.b16 %v340
    %v1008 = vunpack.c.l.b16 %v341
    %v1009 = vunpack.c.h.b16 %v341
    %v1010 = vunpack.c.l.b16 %v342
    %v1011 = vunpack.c.h.b16 %v342
    %v1012 = vunpack.c.l.b16 %v343
    %v1013 = vunpack.c.h.b16 %v343
    %v1014 = vunpack.c.l.b16 %v344
    %v1015 = vunpack.c.h.b16 %v344
    %v1016 = vunpack.c.l.b16 %v345
    %v1017 = vunpack.c.h.b16 %v345
    %v1018 = vunpack.c.l.b16 %v346
    %v1019 = vunpack.c.h.b16 %v346
    %v1020 = vunpack.c.l.b16 %v347
    %v1021 = vunpack.c.h.b16 %v347
    %v1022 = vunpack.c.l.b16 %v348
    %v1023 = vunpack.c.h.b16 %v348
    %v1024 = vunpack.c.l.b16 %v349
    %v1025 = vunpack.c.h.b16 %v349
    %v1026 = vunpack.c.l.b16 %v350
    %v1027 = vunpack.c.h.b16 %v350
    %v1028 = vunpack.c.l.b16 %v351
    %v1029 = vunpack.c.h.b16 %v351
    %v1030 = vunpack.c.l.b16 %v352
    %v1031 = vunpack.c.h.b16 %v352
    %v1032 = vunpack.c.l.b16 %v353
    %v1033 = vunpack.c.h.b16 %v353
    %v1034 = vunpack.c.l.b16 %v354
    %v1035 = vunpack.c.h.b16 %v354
    %v1036 = vunpack.c.l.b16 %v355
    %v1037 = vunpack.c.h.b16 %v355
    %v1038 = vunpack.c.l.b16 %v356
    %v1039 = vunpack.c.h.b16 %v356
    %v1040 = vunpack.c.l.b16 %v357
    %v1041 = vunpack.c.h.b16 %v357
    %v1042 = vunpack.c.l.b16 %v358
    %v1043 = vunpack.c.h.b16 %v358
    %v1044 = vunpack.c.l.b16 %v359
    %v1045 = vunpack.c.h.b16 %v359
    %v1046 = vunpack.c.l.b16 %v360
    %v1047 = vunpack.c.h.b16 %v360
    %v1048 = vunpack.c.l.b16 %v361
    %v1049 = vunpack.c.h.b16 %v361
    %v1050 = vunpack.c.l.b16 %v362
    %v1051 = vunpack.c.h.b16 %v362
    %v1052 = vunpack.c.l.b16 %v363
    %v1053 = vunpack.c.h.b16 %v363
    %v1054 = vunpack.c.l.b16 %v364
    %v1055 = vunpack.c.h.b16 %v364
    %v1056 = vunpack.c.l.b16 %v365
    %v1057 = vunpack.c.h.b16 %v365
    %v1058 = vunpack.c.l.b16 %v366
    %v1059 = vunpack.c.h.b16 %v366
    %v1060 = vunpack.c.l.b16 %v367
    %v1061 = vunpack.c.h.b16 %v367
    %v1062 = vunpack.c.l.b16 %v368
    %v1063 = vunpack.c.h.b16 %v368
    %v1064 = vunpack.c.l.b16 %v369
    %v1065 = vunpack.c.h.b16 %v369
    %v1066 = vunpack.c.l.b16 %v370
    %v1067 = vunpack.c.h.b16 %v370
    %v1068 = vunpack.c.l.b16 %v371
    %v1069 = vunpack.c.h.b16 %v371
    %v1070 = vunpack.c.l.b16 %v372
    %v1071 = vunpack.c.h.b16 %v372
    %v1072 = vunpack.c.l.b16 %v373
    %v1073 = vunpack.c.h.b16 %v373
    %v1074 = vunpack.c.l.b16 %v374
    %v1075 = vunpack.c.h.b16 %v374
    %v1076 = vunpack.c.l.b16 %v375
    %v1077 = vunpack.c.h.b16 %v375
    %v1078 = vunpack.c.l.b16 %v376
    %v1079 = vunpack.c.h.b16 %v376
    %v1080 = vunpack.c.l.b16 %v377
    %v1081 = vunpack.c.h.b16 %v377
    %v1082 = vunpack.c.l.b16 %v378
    %v1083 = vunpack.c.h.b16 %v378
    %v1084 = vunpack.c.l.b16 %v379
    %v1085 = vunpack.c.h.b16 %v379
    %v1086 = vunpack.c.l.b16 %v380
    %v1087 = vunpack.c.h.b16 %v380
    %v1088 = vunpack.c.l.b16 %v381
    %v1089 = vunpack.c.h.b16 %v381
    %v1090 = vunpack.c.l.b16 %v382
    %v1091 = vunpack.c.h.b16 %v382
    %v1092 = vunpack.c.l.b16 %v383
    %v1093 = vunpack.c.h.b16 %v383
    %v1094 = vunpack.c.l.b16 %v384
    %v1095 = vunpack.c.h.b16 %v384
    %v1096 = vunpack.c.l.b16 %v385
    %v1097 = vunpack.c.h.b16 %v385
    %v1098 = vunpack.c.l.b16 %v386
    %v1099 = vunpack.c.h.b16 %v386
    %v1100 = vunpack.c.l.b16 %v387
    %v1101 = vunpack.c.h.b16 %v387
    %v1102 = vunpack.c.l.b16 %v388
    %v1103 = vunpack.c.h.b16 %v388
    %v1104 = vunpack.c.l.b16 %v389
    %v1105 = vunpack.c.h.b16 %v389
    %v1106 = vunpack.c.l.b16 %v390
    %v1107 = vunpack.c.h.b16 %v390
    %v1108 = vunpack.c.l.b16 %v391
    %v1109 = vunpack.c.h.b16 %v391
    %v1110 = vunpack.c.l.b16 %v392
    %v1111 = vunpack.c.h.b16 %v392
    %v1112 = vunpack.c.l.b16 %v393
    %v1113 = vunpack.c.h.b16 %v393
    %v1114 = vunpack.c.l.b16 %v394
    %v1115 = vunpack.c.h.b16 %v394
    %v1116 = vunpack.c.l.b16 %v395
    %v1117 = vunpack.c.h.b16 %v395
    %v1118 = vunpack.c.l.b16 %v396
    %v1119 = vunpack.c.h.b16 %v396
    %v1120 = vunpack.c.l.b16 %v397
    %v1121 = vunpack.c.h.b16 %v397
    %v1122 = vunpack.c.l.b16 %v398
    %v1123 = vunpack.c.h.b16 %v398
    %v1124 = vunpack.c.l.b16 %v399
    %v1125 = vunpack.c.h.b16 %v399
    %v1126 = vunpack.c.l.b16 %v400
    %v1127 = vunpack.c.h.b16 %v400
    %v1128 = vunpack.c.l.b16 %v401
    %v1129 = vunpack.c.h.b16 %v401
    %v1130 = vunpack.c.l.b16 %v402
    %v1131 = vunpack.c.h.b16 %v402
    %v1132 = vunpack.c.l.b16 %v403
    %v1133 = vunpack.c.h.b16 %v403
    %v1134 = vunpack.c.l.b16 %v404
    %v1135 = vunpack.c.h.b16 %v404
    %v1136 = vunpack.c.l.b16 %v405
    %v1137 = vunpack.c.h.b16 %v405
    %v1138 = vunpack.c.l.b16 %v406
    %v1139 = vunpack.c.h.b16 %v406
    %v1140 = vunpack.c.l.b16 %v407
    %v1141 = vunpack.c.h.b16 %v407
    %v1142 = vunpack.c.l.b16 %v408
    %v1143 = vunpack.c.h.b16 %v408
    %v1144 = vunpack.c.l.b16 %v409
    %v1145 = vunpack.c.h.b16 %v409
    %v1146 = vunpack.c.l.b16 %v410
    %v1147 = vunpack.c.h.b16 %v410
    %v1148 = vunpack.c.l.b16 %v411
    %v1149 = vunpack.c.h.b16 %v411
    %v1150 = vunpack.c.l.b16 %v412
    %v1151 = vunpack.c.h.b16 %v412
    %v1152 = vunpack.c.l.b16 %v413
    %v1153 = vunpack.c.h.b16 %v413
    %v1154 = vunpack.c.l.b16 %v414
    %v1155 = vunpack.c.h.b16 %v414
    %v1156 = vunpack.c.l.b16 %v415
    %v1157 = vunpack.c.h.b16 %v415
    %v1158 = vunpack.c.l.b16 %v416
    %v1159 = vunpack.c.h.b16 %v416
    %v1160 = vunpack.c.l.b16 %v417
    %v1161 = vunpack.c.h.b16 %v417
    %v1162 = vunpack.c.l.b16 %v418
    %v1163 = vunpack.c.h.b16 %v418
    %v1164 = vunpack.c.l.b16 %v419
    %v1165 = vunpack.c.h.b16 %v419
    %v1166 = vunpack.c.l.b16 %v420
    %v1167 = vunpack.c.h.b16 %v420
    %v1168 = vunpack.c.l.b16 %v421
    %v1169 = vunpack.c.h.b16 %v421
    %v1170 = vunpack.c.l.b16 %v422
    %v1171 = vunpack.c.h.b16 %v422
    %v1172 = vunpack.c.l.b16 %v423
    %v1173 = vunpack.c.h.b16 %v423
    %v1174 = vunpack.c.l.b16 %v424
    %v1175 = vunpack.c.h.b16 %v424
    %v1176 = vunpack.c.l.b16 %v425
    %v1177 = vunpack.c.h.b16 %v425
    %v1178 = vunpack.c.l.b16 %v426
    %v1179 = vunpack.c.h.b16 %v426
    %v1180 = vunpack.c.l.b16 %v427
    %v1181 = vunpack.c.h.b16 %v427
    %v1182 = vunpack.c.l.b16 %v428
    %v1183 = vunpack.c.h.b16 %v428
    %v1184 = vunpack.c.l.b16 %v429
    %v1185 = vunpack.c.h.b16 %v429
    %v1186 = vunpack.c.l.b16 %v430
    %v1187 = vunpack.c.h.b16 %v430
    %v1188 = vunpack.c.l.b16 %v431
    %v1189 = vunpack.c.h.b16 %v431
    %v1190 = vunpack.c.l.b16 %v432
    %v1191 = vunpack.c.h.b16 %v432
    %v1192 = vunpack.c.l.b16 %v433
    %v1193 = vunpack.c.h.b16 %v433
    %v1194 = vunpack.c.l.b16 %v434
    %v1195 = vunpack.c.h.b16 %v434
    %v1196 = vunpack.c.l.b16 %v435
    %v1197 = vunpack.c.h.b16 %v435
    %v1198 = vunpack.c.l.b16 %v436
    %v1199 = vunpack.c.h.b16 %v436
    %v1200 = vunpack.c.l.b16 %v437
    %v1201 = vunpack.c.h.b16 %v437
    %v1202 = vunpack.c.l.b16 %v438
    %v1203 = vunpack.c.h.b16 %v438
    %v1204 = vunpack.c.l.b16 %v439
    %v1205 = vunpack.c.h.b16 %v439
    %v1206 = vunpack.c.l.b16 %v440
    %v1207 = vunpack.c.h.b16 %v440
    %v1208 = vunpack.c.l.b16 %v441
    %v1209 = vunpack.c.h.b16 %v441
    %v1210 = vunpack.c.l.b16 %v442
    %v1211 = vunpack.c.h.b16 %v442
    %v1212 = vunpack.c.l.b16 %v443
    %v1213 = vunpack.c.h.b16 %v443
    %v1214 = vunpack.c.l.b16 %v444
    %v1215 = vunpack.c.h.b16 %v444
    %v1216 = vunpack.c.l.b16 %v445
    %v1217 = vunpack.c.h.b16 %v445
    %v1218 = vunpack.c.l.b16 %v446
    %v1219 = vunpack.c.h.b16 %v446
    %v1220 = vunpack.c.l.b16 %v447
    %v1221 = vunpack.c.h.b16 %v447
    %v1222 = vunpack.c.l.b16 %v448
    %v1223 = vunpack.c.h.b16 %v448
    %v1224 = vunpack.c.l.b16 %v449
    %v1225 = vunpack.c.h.b16 %v449
    %v1226 = vunpack.c.l.b16 %v450
    %v1227 = vunpack.c.h.b16 %v450
    %v1228 = vunpack.c.l.b16 %v451
    %v1229 = vunpack.c.h.b16 %v451
    %v1230 = vunpack.c.l.b16 %v452
    %v1231 = vunpack.c.h.b16 %v452
    %v1232 = vunpack.c.l.b16 %v453
    %v1233 = vunpack.c.h.b16 %v453
    %v1234 = vunpack.c.l.b16 %v454
    %v1235 = vunpack.c.h.b16 %v454
    %v1236 = vunpack.c.l.b16 %v455
    %v1237 = vunpack.c.h.b16 %v455
    %v1238 = vunpack.c.l.b16 %v456
    %v1239 = vunpack.c.h.b16 %v456
    %v1240 = vunpack.c.l.b16 %v457
    %v1241 = vunpack.c.h.b16 %v457
    %v1242 = vunpack.c.l.b16 %v458
    %v1243 = vunpack.c.h.b16 %v458
    %v1244 = vunpack.c.l.b16 %v459
    %v1245 = vunpack.c.h.b16 %v459
    %v1246 = vunpack.c.l.b16 %v460
    %v1247 = vunpack.c.h.b16 %v460
    %v1248 = vunpack.c.l.b16 %v461
    %v1249 = vunpack.c.h.b16 %v461
    %v1250 = vunpack.c.l.b16 %v462
    %v1251 = vunpack.c.h.b16 %v462
    %v1252 = vunpack.c.l.b16 %v463
    %v1253 = vunpack.c.h.b16 %v463
    %v1254 = vunpack.c.l.b16 %v464
    %v1255 = vunpack.c.h.b16 %v464
    %v1256 = vunpack.c.l.b16 %v465
    %v1257 = vunpack.c.h.b16 %v465
    %v1258 = vunpack.c.l.b16 %v466
    %v1259 = vunpack.c.h.b16 %v466
    %v1260 = vunpack.c.l.b16 %v467
    %v1261 = vunpack.c.h.b16 %v467
    %v1262 = vunpack.c.l.b16 %v468
    %v1263 = vunpack.c.h.b16 %v468
    %v1264 = vunpack.c.l.b16 %v469
    %v1265 = vunpack.c.h.b16 %v469
    %v1266 = vunpack.c.l.b16 %v470
    %v1267 = vunpack.c.h.b16 %v470
    %v1268 = vunpack.c.l.b16 %v471
    %v1269 = vunpack.c.h.b16 %v471
    %v1270 = vunpack.c.l.b16 %v472
    %v1271 = vunpack.c.h.b16 %v472
    %v1272 = vunpack.c.l.b16 %v473
    %v1273 = vunpack.c.h.b16 %v473
    %v1274 = vunpack.c.l.b16 %v474
    %v1275 = vunpack.c.h.b16 %v474
    %v1276 = vunpack.c.l.b16 %v475
    %v1277 = vunpack.c.h.b16 %v475
    %v1278 = vunpack.c.l.b16 %v476
    %v1279 = vunpack.c.h.b16 %v476
    %v1280 = vunpack.c.l.b16 %v477
    %v1281 = vunpack.c.h.b16 %v477
    %v1282 = vunpack.c.l.b16 %v478
    %v1283 = vunpack.c.h.b16 %v478
    %v1284 = vunpack.c.l.b16 %v479
    %v1285 = vunpack.c.h.b16 %v479
    %v1286 = vunpack.c.l.b16 %v480
    %v1287 = vunpack.c.h.b16 %v480
    %v1288 = vunpack.c.l.b16 %v481
    %v1289 = vunpack.c.h.b16 %v481
    %v1290 = vunpack.c.l.b16 %v482
    %v1291 = vunpack.c.h.b16 %v482
    %v1292 = vunpack.c.l.b16 %v483
    %v1293 = vunpack.c.h.b16 %v483
    %v1294 = vpack.c.b16 %v790, %v782
    %v1295 = vpack.c.b16 %v791, %v783
    %v1296 = vpack.c.b16 %v792, %v784
    %v1297 = vpack.c.b16 %v793, %v785
    %v1298 = vpack.c.b16 %v794, %v786
    %v1299 = vpack.c.b16 %v795, %v787
    %v1300 = vpack.c.b16 %v796, %v788
    %v1301 = vpack.c.b16 %v797, %v789
    %v1302 = vpack.c.b16 %v806, %v798
    %v1303 = vpack.c.b16 %v807, %v799
    %v1304 = vpack.c.b16 %v808, %v800
    %v1305 = vpack.c.b16 %v809, %v801
    %v1306 = vpack.c.b16 %v810, %v802
    %v1307 = vpack.c.b16 %v811, %v803
    %v1308 = vpack.c.b16 %v812, %v804
    %v1309 = vpack.c.b16 %v813, %v805
    %v1310 = vpack.c.b16 %v822, %v814
    %v1311 = vpack.c.b16 %v823, %v815
    %v1312 = vpack.c.b16 %v824, %v816
    %v1313 = vpack.c.b16 %v825, %v817
    %v1314 = vpack.c.b16 %v826, %v818
    %v1315 = vpack.c.b16 %v827, %v819
    %v1316 = vpack.c.b16 %v828, %v820
    %v1317 = vpack.c.b16 %v829, %v821
    %v1318 = vpack.c.b16 %v838, %v830
    %v1319 = vpack.c.b16 %v839, %v831
    %v1320 = vpack.c.b16 %v840, %v832
    %v1321 = vpack.c.b16 %v841, %v833
    %v1322 = vpack.c.b16 %v842, %v834
    %v1323 = vpack.c.b16 %v843, %v835
    %v1324 = vpack.c.b16 %v844, %v836
    %v1325 = vpack.c.b16 %v845, %v837
    %v1326 = vpack.c.b16 %v854, %v846
    %v1327 = vpack.c.b16 %v855, %v847
    %v1328 = vpack.c.b16 %v856, %v848
    %v1329 = vpack.c.b16 %v857, %v849
    %v1330 = vpack.c.b16 %v858, %v850
    %v1331 = vpack.c.b16 %v859, %v851
    %v1332 = vpack.c.b16 %v860, %v852
    %v1333 = vpack.c.b16 %v861, %v853
    %v1334 = vpack.c.b16 %v870, %v862
    %v1335 = vpack.c.b16 %v871, %v863
    %v1336 = vpack.c.b16 %v872, %v864
    %v1337 = vpack.c.b16 %v873, %v865
    %v1338 = vpack.c.b16 %v874, %v866
    %v1339 = vpack.c.b16 %v875, %v867
    %v1340 = vpack.c.b16 %v876, %v868
    %v1341 = vpack.c.b16 %v877, %v869
    %v1342 = vpack.c.b16 %v886, %v878
    %v1343 = vpack.c.b16 %v887, %v879
    %v1344 = vpack.c.b16 %v888, %v880
    %v1345 = vpack.c.b16 %v889, %v881
    %v1346 = vpack.c.b16 %v890, %v882
    %v1347 = vpack.c.b16 %v891, %v883
    %v1348 = vpack.c.b16 %v892, %v884
    %v1349 = vpack.c.b16 %v893, %v885
    %v1350 = vpack.c.b16 %v902, %v894
    %v1351 = vpack.c.b16 %v903, %v895
    %v1352 = vpack.c.b16 %v904, %v896
    %v1353 = vpack.c.b16 %v905, %v897
    %v1354 = vpack.c.b16 %v906, %v898
    %v1355 = vpack.c.b16 %v907, %v899
    %v1356 = vpack.c.b16 %v908, %v900
    %v1357 = vpack.c.b16 %v909, %v901
    %v1358 = vpack.c.b16 %v918, %v910
    %v1359 = vpack.c.b16 %v919, %v911
    %v1360 = vpack.c.b16 %v920, %v912
    %v1361 = vpack.c.b16 %v921, %v913
    %v1362 = vpack.c.b16 %v922, %v914
    %v1363 = vpack.c.b16 %v923, %v915
    %v1364 = vpack.c.b16 %v924, %v916
    %v1365 = vpack.c.b16 %v925, %v917
    %v1366 = vpack.c.b16 %v934, %v926
    %v1367 = vpack.c.b16 %v935, %v927
    %v1368 = vpack.c.b16 %v936, %v928
    %v1369 = vpack.c.b16 %v937, %v929
    %v1370 = vpack.c.b16 %v938, %v930
    %v1371 = vpack.c.b16 %v939, %v931
    %v1372 = vpack.c.b16 %v940, %v932
    %v1373 = vpack.c.b16 %v941, %v933
    %v1374 = vpack.c.b16 %v950, %v942
    %v1375 = vpack.c.b16 %v951, %v943
    %v1376 = vpack.c.b16 %v952, %v944
    %v1377 = vpack.c.b16 %v953, %v945
    %v1378 = vpack.c.b16 %v954, %v946
    %v1379 = vpack.c.b16 %v955, %v947
    %v1380 = vpack.c.b16 %v956, %v948
    %v1381 = vpack.c.b16 %v957, %v949
    %v1382 = vpack.c.b16 %v966, %v958
    %v1383 = vpack.c.b16 %v967, %v959
    %v1384 = vpack.c.b16 %v968, %v960
    %v1385 = vpack.c.b16 %v969, %v961
    %v1386 = vpack.c.b16 %v970, %v962
    %v1387 = vpack.c.b16 %v971, %v963
    %v1388 = vpack.c.b16 %v972, %v964
    %v1389 = vpack.c.b16 %v973, %v965
    %v1390 = vpack.c.b16 %v982, %v974
    %v1391 = vpack.c.b16 %v983, %v975
    %v1392 = vpack.c.b16 %v984, %v976
    %v1393 = vpack.c.b16 %v985, %v977
    %v1394 = vpack.c.b16 %v986, %v978
    %v1395 = vpack.c.b16 %v987, %v979
    %v1396 = vpack.c.b16 %v988, %v980
    %v1397 = vpack.c.b16 %v989, %v981
    %v1398 = vpack.c.b16 %v998, %v990
    %v1399 = vpack.c.b16 %v999, %v991
    %v1400 = vpack.c.b16 %v1000, %v992
    %v1401 = vpack.c.b16 %v1001, %v993
    %v1402 = vpack.c.b16 %v1002, %v994
    %v1403 = vpack.c.b16 %v1003, %v995
    %v1404 = vpack.c.b16 %v1004, %v996
    %v1405 = vpack.c.b16 %v1005, %v997
    %v1406 = vpack.c.b16 %v1014, %v1006
    %v1407 = vpack.c.b16 %v1015, %v1007
    %v1408 = vpack.c.b16 %v1016, %v1008
    %v1409 = vpack.c.b16 %v1017, %v1009
    %v1410 = vpack.c.b16 %v1018, %v1010
    %v1411 = vpack.c.b16 %v1019, %v1011
    %v1412 = vpack.c.b16 %v1020, %v1012
    %v1413 = vpack.c.b16 %v1021, %v1013
    %v1414 = vpack.c.b16 %v1030, %v1022
    %v1415 = vpack.c.b16 %v1031, %v1023
    %v1416 = vpack.c.b16 %v1032, %v1024
    %v1417 = vpack.c.b16 %v1033, %v1025
    %v1418 = vpack.c.b16 %v1034, %v1026
    %v1419 = vpack.c.b16 %v1035, %v1027
    %v1420 = vpack.c.b16 %v1036, %v1028
    %v1421 = vpack.c.b16 %v1037, %v1029
    %v1422 = vpack.c.b16 %v1046, %v1038
    %v1423 = vpack.c.b16 %v1047, %v1039
    %v1424 = vpack.c.b16 %v1048, %v1040
    %v1425 = vpack.c.b16 %v1049, %v1041
    %v1426 = vpack.c.b16 %v1050, %v1042
    %v1427 = vpack.c.b16 %v1051, %v1043
    %v1428 = vpack.c.b16 %v1052, %v1044
    %v1429 = vpack.c.b16 %v1053, %v1045
    %v1430 = vpack.c.b16 %v1062, %v1054
    %v1431 = vpack.c.b16 %v1063, %v1055
    %v1432 = vpack.c.b16 %v1064, %v1056
    %v1433 = vpack.c.b16 %v1065, %v1057
    %v1434 = vpack.c.b16 %v1066, %v1058
    %v1435 = vpack.c.b16 %v1067, %v1059
    %v1436 = vpack.c.b16 %v1068, %v1060
    %v1437 = vpack.c.b16 %v1069, %v1061
    %v1438 = vpack.c.b16 %v1078, %v1070
    %v1439 = vpack.c.b16 %v1079, %v1071
    %v1440 = vpack.c.b16 %v1080, %v1072
    %v1441 = vpack.c.b16 %v1081, %v1073
    %v1442 = vpack.c.b16 %v1082, %v1074
    %v1443 = vpack.c.b16 %v1083, %v1075
    %v1444 = vpack.c.b16 %v1084, %v1076
    %v1445 = vpack.c.b16 %v1085, %v1077
    %v1446 = vpack.c.b16 %v1094, %v1086
    %v1447 = vpack.c.b16 %v1095, %v1087
    %v1448 = vpack.c.b16 %v1096, %v1088
    %v1449 = vpack.c.b16 %v1097, %v1089
    %v1450 = vpack.c.b16 %v1098, %v1090
    %v1451 = vpack.c.b16 %v1099, %v1091
    %v1452 = vpack.c.b16 %v1100, %v1092
    %v1453 = vpack.c.b16 %v1101, %v1093
    %v1454 = vpack.c.b16 %v1110, %v1102
    %v1455 = vpack.c.b16 %v1111, %v1103
    %v1456 = vpack.c.b16 %v1112, %v1104
    %v1457 = vpack.c.b16 %v1113, %v1105
    %v1458 = vpack.c.b16 %v1114, %v1106
    %v1459 = vpack.c.b16 %v1115, %v1107
    %v1460 = vpack.c.b16 %v1116, %v1108
    %v1461 = vpack.c.b16 %v1117, %v1109
    %v1462 = vpack.c.b16 %v1126, %v1118
    %v1463 = vpack.c.b16 %v1127, %v1119
    %v1464 = vpack.c.b16 %v1128, %v1120
    %v1465 = vpack.c.b16 %v1129, %v1121
    %v1466 = vpack.c.b16 %v1130, %v1122
    %v1467 = vpack.c.b16 %v1131, %v1123
    %v1468 = vpack.c.b16 %v1132, %v1124
    %v1469 = vpack.c.b16 %v1133, %v1125
    %v1470 = vpack.c.b16 %v1142, %v1134
    %v1471 = vpack.c.b16 %v1143, %v1135
    %v1472 = vpack.c.b16 %v1144, %v1136
    %v1473 = vpack.c.b16 %v1145, %v1137
    %v1474 = vpack.c.b16 %v1146, %v1138
    %v1475 = vpack.c.b16 %v1147, %v1139
    %v1476 = vpack.c.b16 %v1148, %v1140
    %v1477 = vpack.c.b16 %v1149, %v1141
    %v1478 = vpack.c.b16 %v1158, %v1150
    %v1479 = vpack.c.b16 %v1159, %v1151
    %v1480 = vpack.c.b16 %v1160, %v1152
    %v1481 = vpack.c.b16 %v1161, %v1153
    %v1482 = vpack.c.b16 %v1162, %v1154
    %v1483 = vpack.c.b16 %v1163, %v1155
    %v1484 = vpack.c.b16 %v1164, %v1156
    %v1485 = vpack.c.b16 %v1165, %v1157
    %v1486 = vpack.c.b16 %v1174, %v1166
    %v1487 = vpack.c.b16 %v1175, %v1167
    %v1488 = vpack.c.b16 %v1176, %v1168
    %v1489 = vpack.c.b16 %v1177, %v1169
    %v1490 = vpack.c.b16 %v1178, %v1170
    %v1491 = vpack.c.b16 %v1179, %v1171
    %v1492 = vpack.c.b16 %v1180, %v1172
    %v1493 = vpack.c.b16 %v1181, %v1173
    %v1494 = vpack.c.b16 %v1190, %v1182
    %v1495 = vpack.c.b16 %v1191, %v1183
    %v1496 = vpack.c.b16 %v1192, %v1184
    %v1497 = vpack.c.b16 %v1193, %v1185
    %v1498 = vpack.c.b16 %v1194, %v1186
    %v1499 = vpack.c.b16 %v1195, %v1187
    %v1500 = vpack.c.b16 %v1196, %v1188
    %v1501 = vpack.c.b16 %v1197, %v1189
    %v1502 = vpack.c.b16 %v1206, %v1198
    %v1503 = vpack.c.b16 %v1207, %v1199
    %v1504 = vpack.c.b16 %v1208, %v1200
    %v1505 = vpack.c.b16 %v1209, %v1201
    %v1506 = vpack.c.b16 %v1210, %v1202
    %v1507 = vpack.c.b16 %v1211, %v1203
    %v1508 = vpack.c.b16 %v1212, %v1204
    %v1509 = vpack.c.b16 %v1213, %v1205
    %v1510 = vpack.c.b16 %v1222, %v1214
    %v1511 = vpack.c.b16 %v1223, %v1215
    %v1512 = vpack.c.b16 %v1224, %v1216
    %v1513 = vpack.c.b16 %v1225, %v1217
    %v1514 = vpack.c.b16 %v1226, %v1218
    %v1515 = vpack.c.b16 %v1227, %v1219
    %v1516 = vpack.c.b16 %v1228, %v1220
    %v1517 = vpack.c.b16 %v1229, %v1221
    %v1518 = vpack.c.b16 %v1238, %v1230
    %v1519 = vpack.c.b16 %v1239, %v1231
    %v1520 = vpack.c.b16 %v1240, %v1232
    %v1521 = vpack.c.b16 %v1241, %v1233
    %v1522 = vpack.c.b16 %v1242, %v1234
    %v1523 = vpack.c.b16 %v1243, %v1235
    %v1524 = vpack.c.b16 %v1244, %v1236
    %v1525 = vpack.c.b16 %v1245, %v1237
    %v1526 = vpack.c.b16 %v1254, %v1246
    %v1527 = vpack.c.b16 %v1255, %v1247
    %v1528 = vpack.c.b16 %v1256, %v1248
    %v1529 = vpack.c.b16 %v1257, %v1249
    %v1530 = vpack.c.b16 %v1258, %v1250
    %v1531 = vpack.c.b16 %v1259, %v1251
    %v1532 = vpack.c.b16 %v1260, %v1252
    %v1533 = vpack.c.b16 %v1261, %v1253
    %v1534 = vpack.c.b16 %v1270, %v1262
    %v1535 = vpack.c.b16 %v1271, %v1263
    %v1536 = vpack.c.b16 %v1272, %v1264
    %v1537 = vpack.c.b16 %v1273, %v1265
    %v1538 = vpack.c.b16 %v1274, %v1266
    %v1539 = vpack.c.b16 %v1275, %v1267
    %v1540 = vpack.c.b16 %v1276, %v1268
    %v1541 = vpack.c.b16 %v1277, %v1269
    %v1542 = vpack.c.b16 %v1286, %v1278
    %v1543 = vpack.c.b16 %v1287, %v1279
    %v1544 = vpack.c.b16 %v1288, %v1280
    %v1545 = vpack.c.b16 %v1289, %v1281
    %v1546 = vpack.c.b16 %v1290, %v1282
    %v1547 = vpack.c.b16 %v1291, %v1283
    %v1548 = vpack.c.b16 %v1292, %v1284
    %v1549 = vpack.c.b16 %v1293, %v1285
    %1806 = vmatprep.subr.bf16.mxu0 %v1351
    %1807 = vmatpush1.bf16.msra.mxu0 %v1350
    %1808 = vmatprep.subr.bf16.mxu0 %v1343
    %1809 = vmatpush1.bf16.msra.mxu0 %v1342
    %1810 = vmatprep.subr.bf16.mxu0 %v1335
    %1811 = vmatpush1.bf16.msra.mxu0 %v1334
    %1812 = vmatprep.subr.bf16.mxu0 %v1327
    %1813 = vmatpush1.bf16.msra.mxu0 %v1326
    %1814 = vmatprep.subr.bf16.mxu0 %v1319
    %1815 = vmatpush1.bf16.msra.mxu0 %v1318
    %1816 = vmatprep.subr.bf16.mxu0 %v1311
    %1817 = vmatpush1.bf16.msra.mxu0 %v1310
    %1818 = vmatprep.subr.bf16.mxu0 %v1303
    %1819 = vmatpush1.bf16.msra.mxu0 %v1302
    %1820 = vmatprep.subr.bf16.mxu0 %v1295
    %1821 = vmatpush1.bf16.msra.mxu0 %v1294
    %1822 = vmatprep.subr.bf16.mxu0 %v1415
    %1823 = vmatpush2.bf16.msra.mxu0 %v1414
    %1824 = vmatprep.subr.bf16.mxu0 %v1407
    %1825 = vmatpush2.bf16.msra.mxu0 %v1406
    %1826 = vmatprep.subr.bf16.mxu0 %v1399
    %1827 = vmatpush2.bf16.msra.mxu0 %v1398
    %1828 = vmatprep.subr.bf16.mxu0 %v1391
    %1829 = vmatpush2.bf16.msra.mxu0 %v1390
    %1830 = vmatprep.subr.bf16.mxu0 %v1383
    %1831 = vmatpush2.bf16.msra.mxu0 %v1382
    %1832 = vmatprep.subr.bf16.mxu0 %v1375
    %1833 = vmatpush2.bf16.msra.mxu0 %v1374
    %1834 = vmatprep.subr.bf16.mxu0 %v1367
    %1835 = vmatpush2.bf16.msra.mxu0 %v1366
    %1836 = vmatprep.subr.bf16.mxu0 %v1359
    %1837 = vmatpush2.bf16.msra.mxu0 %v1358
    %1838 = vmatprep.mubr.bf16.mxu0 %v225
    %1839 = vmatmul.mubr.bf16.gmra.mxu0 %v224
    %v1840 = vpop.f32.mrf.mxu0
    %v1841 = vadd.f32 %v489, %v1840
    %v1842 = vpop.f32.mrf.mxu0
    %v1843 = vadd.f32 %v493, %v1842
    %v1844 = vpop.f32.mrf.mxu0
    %v1845 = vpop.f32.mrf.mxu0
    %1846 = vdwg.mxu0
    %1847 = vmatprep.subr.bf16.mxu0 %v1479
    %1848 = vmatpush1.bf16.msra.mxu0 %v1478
    %1849 = vmatprep.subr.bf16.mxu0 %v1471
    %1850 = vmatpush1.bf16.msra.mxu0 %v1470
    %1851 = vmatprep.subr.bf16.mxu0 %v1463
    %1852 = vmatpush1.bf16.msra.mxu0 %v1462
    %1853 = vmatprep.subr.bf16.mxu0 %v1455
    %1854 = vmatpush1.bf16.msra.mxu0 %v1454
    %1855 = vmatprep.subr.bf16.mxu0 %v1447
    %1856 = vmatpush1.bf16.msra.mxu0 %v1446
    %1857 = vmatprep.subr.bf16.mxu0 %v1439
    %1858 = vmatpush1.bf16.msra.mxu0 %v1438
    %1859 = vmatprep.subr.bf16.mxu0 %v1431
    %1860 = vmatpush1.bf16.msra.mxu0 %v1430
    %1861 = vmatprep.subr.bf16.mxu0 %v1423
    %1862 = vmatpush1.bf16.msra.mxu0 %v1422
    %1863 = vmatprep.subr.bf16.mxu0 %v1543
    %1864 = vmatpush2.bf16.msra.mxu0 %v1542
    %1865 = vmatprep.subr.bf16.mxu0 %v1535
    %1866 = vmatpush2.bf16.msra.mxu0 %v1534
    %1867 = vmatprep.subr.bf16.mxu0 %v1527
    %1868 = vmatpush2.bf16.msra.mxu0 %v1526
    %1869 = vmatprep.subr.bf16.mxu0 %v1519
    %1870 = vmatpush2.bf16.msra.mxu0 %v1518
    %1871 = vmatprep.subr.bf16.mxu0 %v1511
    %1872 = vmatpush2.bf16.msra.mxu0 %v1510
    %1873 = vmatprep.subr.bf16.mxu0 %v1503
    %1874 = vmatpush2.bf16.msra.mxu0 %v1502
    %1875 = vmatprep.subr.bf16.mxu0 %v1495
    %1876 = vmatpush2.bf16.msra.mxu0 %v1494
    %1877 = vmatprep.subr.bf16.mxu0 %v1487
    %1878 = vmatpush2.bf16.msra.mxu0 %v1486
    %1879 = vmatprep.mubr.bf16.mxu0 %v227
    %1880 = vmatmul.mubr.bf16.gmra.mxu0 %v226
    %v1881 = vpop.f32.mrf.mxu0
    %v1882 = vadd.f32 %v1841, %v1881
    %v1883 = vpop.f32.mrf.mxu0
    %v1884 = vadd.f32 %v1843, %v1883
    %v1885 = vpop.f32.mrf.mxu0
    %v1886 = vpop.f32.mrf.mxu0
    %1887 = vdwg.mxu0
    %1888 = vmatprep.subr.bf16.mxu0 %v1353
    %1889 = vmatpush1.bf16.msra.mxu0 %v1352
    %1890 = vmatprep.subr.bf16.mxu0 %v1345
    %1891 = vmatpush1.bf16.msra.mxu0 %v1344
    %1892 = vmatprep.subr.bf16.mxu0 %v1337
    %1893 = vmatpush1.bf16.msra.mxu0 %v1336
    %1894 = vmatprep.subr.bf16.mxu0 %v1329
    %1895 = vmatpush1.bf16.msra.mxu0 %v1328
    %1896 = vmatprep.subr.bf16.mxu0 %v1321
    %1897 = vmatpush1.bf16.msra.mxu0 %v1320
    %1898 = vmatprep.subr.bf16.mxu0 %v1313
    %1899 = vmatpush1.bf16.msra.mxu0 %v1312
    %1900 = vmatprep.subr.bf16.mxu0 %v1305
    %1901 = vmatpush1.bf16.msra.mxu0 %v1304
    %1902 = vmatprep.subr.bf16.mxu0 %v1297
    %1903 = vmatpush1.bf16.msra.mxu0 %v1296
    %1904 = vmatprep.subr.bf16.mxu0 %v1417
    %1905 = vmatpush2.bf16.msra.mxu0 %v1416
    %1906 = vmatprep.subr.bf16.mxu0 %v1409
    %1907 = vmatpush2.bf16.msra.mxu0 %v1408
    %1908 = vmatprep.subr.bf16.mxu0 %v1401
    %1909 = vmatpush2.bf16.msra.mxu0 %v1400
    %1910 = vmatprep.subr.bf16.mxu0 %v1393
    %1911 = vmatpush2.bf16.msra.mxu0 %v1392
    %1912 = vmatprep.subr.bf16.mxu0 %v1385
    %1913 = vmatpush2.bf16.msra.mxu0 %v1384
    %1914 = vmatprep.subr.bf16.mxu0 %v1377
    %1915 = vmatpush2.bf16.msra.mxu0 %v1376
    %1916 = vmatprep.subr.bf16.mxu0 %v1369
    %1917 = vmatpush2.bf16.msra.mxu0 %v1368
    %1918 = vmatprep.subr.bf16.mxu0 %v1361
    %1919 = vmatpush2.bf16.msra.mxu0 %v1360
    %1920 = vmatprep.mubr.bf16.mxu0 %v225
    %1921 = vmatmul.mubr.bf16.gmra.mxu0 %v224
    %v1922 = vpop.f32.mrf.mxu0
    %v1923 = vadd.f32 %v497, %v1922
    %v1924 = vpop.f32.mrf.mxu0
    %v1925 = vadd.f32 %v501, %v1924
    %v1926 = vpop.f32.mrf.mxu0
    %v1927 = vpop.f32.mrf.mxu0
    %1928 = vdwg.mxu0
    %1929 = vmatprep.subr.bf16.mxu0 %v1481
    %1930 = vmatpush1.bf16.msra.mxu0 %v1480
    %1931 = vmatprep.subr.bf16.mxu0 %v1473
    %1932 = vmatpush1.bf16.msra.mxu0 %v1472
    %1933 = vmatprep.subr.bf16.mxu0 %v1465
    %1934 = vmatpush1.bf16.msra.mxu0 %v1464
    %1935 = vmatprep.subr.bf16.mxu0 %v1457
    %1936 = vmatpush1.bf16.msra.mxu0 %v1456
    %1937 = vmatprep.subr.bf16.mxu0 %v1449
    %1938 = vmatpush1.bf16.msra.mxu0 %v1448
    %1939 = vmatprep.subr.bf16.mxu0 %v1441
    %1940 = vmatpush1.bf16.msra.mxu0 %v1440
    %1941 = vmatprep.subr.bf16.mxu0 %v1433
    %1942 = vmatpush1.bf16.msra.mxu0 %v1432
    %1943 = vmatprep.subr.bf16.mxu0 %v1425
    %1944 = vmatpush1.bf16.msra.mxu0 %v1424
    %1945 = vmatprep.subr.bf16.mxu0 %v1545
    %1946 = vmatpush2.bf16.msra.mxu0 %v1544
    %1947 = vmatprep.subr.bf16.mxu0 %v1537
    %1948 = vmatpush2.bf16.msra.mxu0 %v1536
    %1949 = vmatprep.subr.bf16.mxu0 %v1529
    %1950 = vmatpush2.bf16.msra.mxu0 %v1528
    %1951 = vmatprep.subr.bf16.mxu0 %v1521
    %1952 = vmatpush2.bf16.msra.mxu0 %v1520
    %1953 = vmatprep.subr.bf16.mxu0 %v1513
    %1954 = vmatpush2.bf16.msra.mxu0 %v1512
    %1955 = vmatprep.subr.bf16.mxu0 %v1505
    %1956 = vmatpush2.bf16.msra.mxu0 %v1504
    %1957 = vmatprep.subr.bf16.mxu0 %v1497
    %1958 = vmatpush2.bf16.msra.mxu0 %v1496
    %1959 = vmatprep.subr.bf16.mxu0 %v1489
    %1960 = vmatpush2.bf16.msra.mxu0 %v1488
    %1961 = vmatprep.mubr.bf16.mxu0 %v227
    %1962 = vmatmul.mubr.bf16.gmra.mxu0 %v226
    %v1963 = vpop.f32.mrf.mxu0
    %v1964 = vadd.f32 %v1923, %v1963
    %v1965 = vpop.f32.mrf.mxu0
    %v1966 = vadd.f32 %v1925, %v1965
    %v1967 = vpop.f32.mrf.mxu0
    %v1968 = vpop.f32.mrf.mxu0
    %1969 = vdwg.mxu0
    %1970 = vmatprep.subr.bf16.mxu0 %v1355
    %1971 = vmatpush1.bf16.msra.mxu0 %v1354
    %1972 = vmatprep.subr.bf16.mxu0 %v1347
    %1973 = vmatpush1.bf16.msra.mxu0 %v1346
    %1974 = vmatprep.subr.bf16.mxu0 %v1339
    %1975 = vmatpush1.bf16.msra.mxu0 %v1338
    %1976 = vmatprep.subr.bf16.mxu0 %v1331
    %1977 = vmatpush1.bf16.msra.mxu0 %v1330
    %1978 = vmatprep.subr.bf16.mxu0 %v1323
    %1979 = vmatpush1.bf16.msra.mxu0 %v1322
    %1980 = vmatprep.subr.bf16.mxu0 %v1315
    %1981 = vmatpush1.bf16.msra.mxu0 %v1314
    %1982 = vmatprep.subr.bf16.mxu0 %v1307
    %1983 = vmatpush1.bf16.msra.mxu0 %v1306
    %1984 = vmatprep.subr.bf16.mxu0 %v1299
    %1985 = vmatpush1.bf16.msra.mxu0 %v1298
    %1986 = vmatprep.subr.bf16.mxu0 %v1419
    %1987 = vmatpush2.bf16.msra.mxu0 %v1418
    %1988 = vmatprep.subr.bf16.mxu0 %v1411
    %1989 = vmatpush2.bf16.msra.mxu0 %v1410
    %1990 = vmatprep.subr.bf16.mxu0 %v1403
    %1991 = vmatpush2.bf16.msra.mxu0 %v1402
    %1992 = vmatprep.subr.bf16.mxu0 %v1395
    %1993 = vmatpush2.bf16.msra.mxu0 %v1394
    %1994 = vmatprep.subr.bf16.mxu0 %v1387
    %1995 = vmatpush2.bf16.msra.mxu0 %v1386
    %1996 = vmatprep.subr.bf16.mxu0 %v1379
    %1997 = vmatpush2.bf16.msra.mxu0 %v1378
    %1998 = vmatprep.subr.bf16.mxu0 %v1371
    %1999 = vmatpush2.bf16.msra.mxu0 %v1370
    %2000 = vmatprep.subr.bf16.mxu0 %v1363
    %2001 = vmatpush2.bf16.msra.mxu0 %v1362
    %2002 = vmatprep.mubr.bf16.mxu0 %v225
    %2003 = vmatmul.mubr.bf16.gmra.mxu0 %v224
    %v2004 = vpop.f32.mrf.mxu0
    %v2005 = vadd.f32 %v505, %v2004
    %v2006 = vpop.f32.mrf.mxu0
    %v2007 = vadd.f32 %v509, %v2006
    %v2008 = vpop.f32.mrf.mxu0
    %v2009 = vpop.f32.mrf.mxu0
    %2010 = vdwg.mxu0
    %2011 = vmatprep.subr.bf16.mxu0 %v1483
    %2012 = vmatpush1.bf16.msra.mxu0 %v1482
    %2013 = vmatprep.subr.bf16.mxu0 %v1475
    %2014 = vmatpush1.bf16.msra.mxu0 %v1474
    %2015 = vmatprep.subr.bf16.mxu0 %v1467
    %2016 = vmatpush1.bf16.msra.mxu0 %v1466
    %2017 = vmatprep.subr.bf16.mxu0 %v1459
    %2018 = vmatpush1.bf16.msra.mxu0 %v1458
    %2019 = vmatprep.subr.bf16.mxu0 %v1451
    %2020 = vmatpush1.bf16.msra.mxu0 %v1450
    %2021 = vmatprep.subr.bf16.mxu0 %v1443
    %2022 = vmatpush1.bf16.msra.mxu0 %v1442
    %2023 = vmatprep.subr.bf16.mxu0 %v1435
    %2024 = vmatpush1.bf16.msra.mxu0 %v1434
    %2025 = vmatprep.subr.bf16.mxu0 %v1427
    %2026 = vmatpush1.bf16.msra.mxu0 %v1426
    %2027 = vmatprep.subr.bf16.mxu0 %v1547
    %2028 = vmatpush2.bf16.msra.mxu0 %v1546
    %2029 = vmatprep.subr.bf16.mxu0 %v1539
    %2030 = vmatpush2.bf16.msra.mxu0 %v1538
    %2031 = vmatprep.subr.bf16.mxu0 %v1531
    %2032 = vmatpush2.bf16.msra.mxu0 %v1530
    %2033 = vmatprep.subr.bf16.mxu0 %v1523
    %2034 = vmatpush2.bf16.msra.mxu0 %v1522
    %2035 = vmatprep.subr.bf16.mxu0 %v1515
    %2036 = vmatpush2.bf16.msra.mxu0 %v1514
    %2037 = vmatprep.subr.bf16.mxu0 %v1507
    %2038 = vmatpush2.bf16.msra.mxu0 %v1506
    %2039 = vmatprep.subr.bf16.mxu0 %v1499
    %2040 = vmatpush2.bf16.msra.mxu0 %v1498
    %2041 = vmatprep.subr.bf16.mxu0 %v1491
    %2042 = vmatpush2.bf16.msra.mxu0 %v1490
    %2043 = vmatprep.mubr.bf16.mxu0 %v227
    %2044 = vmatmul.mubr.bf16.gmra.mxu0 %v226
    %v2045 = vpop.f32.mrf.mxu0
    %v2046 = vadd.f32 %v2005, %v2045
    %v2047 = vpop.f32.mrf.mxu0
    %v2048 = vadd.f32 %v2007, %v2047
    %v2049 = vpop.f32.mrf.mxu0
    %v2050 = vpop.f32.mrf.mxu0
    %2051 = vdwg.mxu0
    %2052 = vmatprep.subr.bf16.mxu0 %v1357
    %2053 = vmatpush1.bf16.msra.mxu0 %v1356
    %2054 = vmatprep.subr.bf16.mxu0 %v1349
    %2055 = vmatpush1.bf16.msra.mxu0 %v1348
    %2056 = vmatprep.subr.bf16.mxu0 %v1341
    %2057 = vmatpush1.bf16.msra.mxu0 %v1340
    %2058 = vmatprep.subr.bf16.mxu0 %v1333
    %2059 = vmatpush1.bf16.msra.mxu0 %v1332
    %2060 = vmatprep.subr.bf16.mxu0 %v1325
    %2061 = vmatpush1.bf16.msra.mxu0 %v1324
    %2062 = vmatprep.subr.bf16.mxu0 %v1317
    %2063 = vmatpush1.bf16.msra.mxu0 %v1316
    %2064 = vmatprep.subr.bf16.mxu0 %v1309
    %2065 = vmatpush1.bf16.msra.mxu0 %v1308
    %2066 = vmatprep.subr.bf16.mxu0 %v1301
    %2067 = vmatpush1.bf16.msra.mxu0 %v1300
    %2068 = vmatprep.subr.bf16.mxu0 %v1421
    %2069 = vmatpush2.bf16.msra.mxu0 %v1420
    %2070 = vmatprep.subr.bf16.mxu0 %v1413
    %2071 = vmatpush2.bf16.msra.mxu0 %v1412
    %2072 = vmatprep.subr.bf16.mxu0 %v1405
    %2073 = vmatpush2.bf16.msra.mxu0 %v1404
    %2074 = vmatprep.subr.bf16.mxu0 %v1397
    %2075 = vmatpush2.bf16.msra.mxu0 %v1396
    %2076 = vmatprep.subr.bf16.mxu0 %v1389
    %2077 = vmatpush2.bf16.msra.mxu0 %v1388
    %2078 = vmatprep.subr.bf16.mxu0 %v1381
    %2079 = vmatpush2.bf16.msra.mxu0 %v1380
    %2080 = vmatprep.subr.bf16.mxu0 %v1373
    %2081 = vmatpush2.bf16.msra.mxu0 %v1372
    %2082 = vmatprep.subr.bf16.mxu0 %v1365
    %2083 = vmatpush2.bf16.msra.mxu0 %v1364
    %2084 = vmatprep.mubr.bf16.mxu0 %v225
    %2085 = vmatmul.mubr.bf16.gmra.mxu0 %v224
    %v2086 = vpop.f32.mrf.mxu0
    %v2087 = vadd.f32 %v513, %v2086
    %v2088 = vpop.f32.mrf.mxu0
    %v2089 = vadd.f32 %v517, %v2088
    %v2090 = vpop.f32.mrf.mxu0
    %v2091 = vpop.f32.mrf.mxu0
    %2092 = vdwg.mxu0
    %2093 = vmatprep.subr.bf16.mxu0 %v1485
    %2094 = vmatpush1.bf16.msra.mxu0 %v1484
    %2095 = vmatprep.subr.bf16.mxu0 %v1477
    %2096 = vmatpush1.bf16.msra.mxu0 %v1476
    %2097 = vmatprep.subr.bf16.mxu0 %v1469
    %2098 = vmatpush1.bf16.msra.mxu0 %v1468
    %2099 = vmatprep.subr.bf16.mxu0 %v1461
    %2100 = vmatpush1.bf16.msra.mxu0 %v1460
    %2101 = vmatprep.subr.bf16.mxu0 %v1453
    %2102 = vmatpush1.bf16.msra.mxu0 %v1452
    %2103 = vmatprep.subr.bf16.mxu0 %v1445
    %2104 = vmatpush1.bf16.msra.mxu0 %v1444
    %2105 = vmatprep.subr.bf16.mxu0 %v1437
    %2106 = vmatpush1.bf16.msra.mxu0 %v1436
    %2107 = vmatprep.subr.bf16.mxu0 %v1429
    %2108 = vmatpush1.bf16.msra.mxu0 %v1428
    %2109 = vmatprep.subr.bf16.mxu0 %v1549
    %2110 = vmatpush2.bf16.msra.mxu0 %v1548
    %2111 = vmatprep.subr.bf16.mxu0 %v1541
    %2112 = vmatpush2.bf16.msra.mxu0 %v1540
    %2113 = vmatprep.subr.bf16.mxu0 %v1533
    %2114 = vmatpush2.bf16.msra.mxu0 %v1532
    %2115 = vmatprep.subr.bf16.mxu0 %v1525
    %2116 = vmatpush2.bf16.msra.mxu0 %v1524
    %2117 = vmatprep.subr.bf16.mxu0 %v1517
    %2118 = vmatpush2.bf16.msra.mxu0 %v1516
    %2119 = vmatprep.subr.bf16.mxu0 %v1509
    %2120 = vmatpush2.bf16.msra.mxu0 %v1508
    %2121 = vmatprep.subr.bf16.mxu0 %v1501
    %2122 = vmatpush2.bf16.msra.mxu0 %v1500
    %2123 = vmatprep.subr.bf16.mxu0 %v1493
    %2124 = vmatpush2.bf16.msra.mxu0 %v1492
    %2125 = vmatprep.mubr.bf16.mxu0 %v227
    %2126 = vmatmul.mubr.bf16.gmra.mxu0 %v226
    %v2127 = vpop.f32.mrf.mxu0
    %v2128 = vadd.f32 %v2087, %v2127
    %v2129 = vpop.f32.mrf.mxu0
    %v2130 = vadd.f32 %v2089, %v2129
    %v2131 = vpop.f32.mrf.mxu0
    %v2132 = vpop.f32.mrf.mxu0
    %2133 = vdwg.mxu0
    %v2134 = vmax.f32 %v1882, 0.0
    %v2135 = vmax.f32 %v1884, 0.0
    %v2136 = vmax.f32 %v1964, 0.0
    %v2137 = vmax.f32 %v1966, 0.0
    %v2138 = vmax.f32 %v2046, 0.0
    %v2139 = vmax.f32 %v2048, 0.0
    %v2140 = vmax.f32 %v2128, 0.0
    %v2141 = vmax.f32 %v2130, 0.0
    %v2142 = vpack.c.bf16 %v2134, %v2134
    %v2143 = vpack.c.bf16 %v2135, %v2135
    %v2144 = vpack.c.bf16 %v2136, %v2136
    %v2145 = vpack.c.bf16 %v2137, %v2137
    %v2146 = vpack.c.bf16 %v2138, %v2138
    %v2147 = vpack.c.bf16 %v2139, %v2139
    %v2148 = vpack.c.bf16 %v2140, %v2140
    %v2149 = vpack.c.bf16 %v2141, %v2141
    %v2150 = vld [vmem:[#allocation5] sm:$0xff]
    %v2151 = vld [vmem:[#allocation5 + $0x8] sm:$0xff]
    %v2152 = vld [vmem:[#allocation5 + $0x10] sm:$0xff]
    %v2153 = vld [vmem:[#allocation5 + $0x18] sm:$0xff]
    %v2154 = vld [vmem:[#allocation5 + $0x20] sm:$0xff]
    %v2155 = vld [vmem:[#allocation5 + $0x28] sm:$0xff]
    %v2156 = vld [vmem:[#allocation5 + $0x30] sm:$0xff]
    %v2157 = vld [vmem:[#allocation5 + $0x38] sm:$0xff]
    %v2158 = vld [vmem:[#allocation5 + $0x40] sm:$0xff]
    %v2159 = vld [vmem:[#allocation5 + $0x48] sm:$0xff]
    %v2160 = vld [vmem:[#allocation5 + $0x50] sm:$0xff]
    %v2161 = vld [vmem:[#allocation5 + $0x58] sm:$0xff]
    %v2162 = vld [vmem:[#allocation5 + $0x60] sm:$0xff]
    %v2163 = vld [vmem:[#allocation5 + $0x68] sm:$0xff]
    %v2164 = vld [vmem:[#allocation5 + $0x70] sm:$0xff]
    %v2165 = vld [vmem:[#allocation5 + $0x78] sm:$0xff]
    %v2166 = vld [vmem:[#allocation5 + $0x80] sm:$0xff]
    %v2167 = vld [vmem:[#allocation5 + $0x88] sm:$0xff]
    %v2168 = vld [vmem:[#allocation5 + $0x90] sm:$0xff]
    %v2169 = vld [vmem:[#allocation5 + $0x98] sm:$0xff]
    %v2170 = vld [vmem:[#allocation5 + $0xa0] sm:$0xff]
    %v2171 = vld [vmem:[#allocation5 + $0xa8] sm:$0xff]
    %v2172 = vld [vmem:[#allocation5 + $0xb0] sm:$0xff]
    %v2173 = vld [vmem:[#allocation5 + $0xb8] sm:$0xff]
    %v2174 = vld [vmem:[#allocation5 + $0xc0] sm:$0xff]
    %v2175 = vld [vmem:[#allocation5 + $0xc8] sm:$0xff]
    %v2176 = vld [vmem:[#allocation5 + $0xd0] sm:$0xff]
    %v2177 = vld [vmem:[#allocation5 + $0xd8] sm:$0xff]
    %v2178 = vld [vmem:[#allocation5 + $0xe0] sm:$0xff]
    %v2179 = vld [vmem:[#allocation5 + $0xe8] sm:$0xff]
    %v2180 = vld [vmem:[#allocation5 + $0xf0] sm:$0xff]
    %v2181 = vld [vmem:[#allocation5 + $0xf8] sm:$0xff]
    %v2182 = vld [vmem:[#allocation5 + $0x100] sm:$0xff]
    %v2183 = vld [vmem:[#allocation5 + $0x108] sm:$0xff]
    %v2184 = vld [vmem:[#allocation5 + $0x110] sm:$0xff]
    %v2185 = vld [vmem:[#allocation5 + $0x118] sm:$0xff]
    %v2186 = vld [vmem:[#allocation5 + $0x120] sm:$0xff]
    %v2187 = vld [vmem:[#allocation5 + $0x128] sm:$0xff]
    %v2188 = vld [vmem:[#allocation5 + $0x130] sm:$0xff]
    %v2189 = vld [vmem:[#allocation5 + $0x138] sm:$0xff]
    %v2190 = vld [vmem:[#allocation5 + $0x140] sm:$0xff]
    %v2191 = vld [vmem:[#allocation5 + $0x148] sm:$0xff]
    %v2192 = vld [vmem:[#allocation5 + $0x150] sm:$0xff]
    %v2193 = vld [vmem:[#allocation5 + $0x158] sm:$0xff]
    %v2194 = vld [vmem:[#allocation5 + $0x160] sm:$0xff]
    %v2195 = vld [vmem:[#allocation5 + $0x168] sm:$0xff]
    %v2196 = vld [vmem:[#allocation5 + $0x170] sm:$0xff]
    %v2197 = vld [vmem:[#allocation5 + $0x178] sm:$0xff]
    %v2198 = vld [vmem:[#allocation5 + $0x180] sm:$0xff]
    %v2199 = vld [vmem:[#allocation5 + $0x188] sm:$0xff]
    %v2200 = vld [vmem:[#allocation5 + $0x190] sm:$0xff]
    %v2201 = vld [vmem:[#allocation5 + $0x198] sm:$0xff]
    %v2202 = vld [vmem:[#allocation5 + $0x1a0] sm:$0xff]
    %v2203 = vld [vmem:[#allocation5 + $0x1a8] sm:$0xff]
    %v2204 = vld [vmem:[#allocation5 + $0x1b0] sm:$0xff]
    %v2205 = vld [vmem:[#allocation5 + $0x1b8] sm:$0xff]
    %v2206 = vld [vmem:[#allocation5 + $0x1c0] sm:$0xff]
    %v2207 = vld [vmem:[#allocation5 + $0x1c8] sm:$0xff]
    %v2208 = vld [vmem:[#allocation5 + $0x1d0] sm:$0xff]
    %v2209 = vld [vmem:[#allocation5 + $0x1d8] sm:$0xff]
    %v2210 = vld [vmem:[#allocation5 + $0x1e0] sm:$0xff]
    %v2211 = vld [vmem:[#allocation5 + $0x1e8] sm:$0xff]
    %v2212 = vld [vmem:[#allocation5 + $0x1f0] sm:$0xff]
    %v2213 = vld [vmem:[#allocation5 + $0x1f8] sm:$0xff]
    %v2214 = vld [vmem:[#allocation5 + $0x200] sm:$0xff]
    %v2215 = vld [vmem:[#allocation5 + $0x208] sm:$0xff]
    %v2216 = vld [vmem:[#allocation5 + $0x210] sm:$0xff]
    %v2217 = vld [vmem:[#allocation5 + $0x218] sm:$0xff]
    %v2218 = vld [vmem:[#allocation5 + $0x220] sm:$0xff]
    %v2219 = vld [vmem:[#allocation5 + $0x228] sm:$0xff]
    %v2220 = vld [vmem:[#allocation5 + $0x230] sm:$0xff]
    %v2221 = vld [vmem:[#allocation5 + $0x238] sm:$0xff]
    %v2222 = vld [vmem:[#allocation5 + $0x240] sm:$0xff]
    %v2223 = vld [vmem:[#allocation5 + $0x248] sm:$0xff]
    %v2224 = vld [vmem:[#allocation5 + $0x250] sm:$0xff]
    %v2225 = vld [vmem:[#allocation5 + $0x258] sm:$0xff]
    %v2226 = vld [vmem:[#allocation5 + $0x260] sm:$0xff]
    %v2227 = vld [vmem:[#allocation5 + $0x268] sm:$0xff]
    %v2228 = vld [vmem:[#allocation5 + $0x270] sm:$0xff]
    %v2229 = vld [vmem:[#allocation5 + $0x278] sm:$0xff]
    %v2230 = vld [vmem:[#allocation5 + $0x280] sm:$0xff]
    %v2231 = vld [vmem:[#allocation5 + $0x288] sm:$0xff]
    %v2232 = vld [vmem:[#allocation5 + $0x290] sm:$0xff]
    %v2233 = vld [vmem:[#allocation5 + $0x298] sm:$0xff]
    %v2234 = vld [vmem:[#allocation5 + $0x2a0] sm:$0xff]
    %v2235 = vld [vmem:[#allocation5 + $0x2a8] sm:$0xff]
    %v2236 = vld [vmem:[#allocation5 + $0x2b0] sm:$0xff]
    %v2237 = vld [vmem:[#allocation5 + $0x2b8] sm:$0xff]
    %v2238 = vld [vmem:[#allocation5 + $0x2c0] sm:$0xff]
    %v2239 = vld [vmem:[#allocation5 + $0x2c8] sm:$0xff]
    %v2240 = vld [vmem:[#allocation5 + $0x2d0] sm:$0xff]
    %v2241 = vld [vmem:[#allocation5 + $0x2d8] sm:$0xff]
    %v2242 = vld [vmem:[#allocation5 + $0x2e0] sm:$0xff]
    %v2243 = vld [vmem:[#allocation5 + $0x2e8] sm:$0xff]
    %v2244 = vld [vmem:[#allocation5 + $0x2f0] sm:$0xff]
    %v2245 = vld [vmem:[#allocation5 + $0x2f8] sm:$0xff]
    %v2246 = vld [vmem:[#allocation5 + $0x300] sm:$0xff]
    %v2247 = vld [vmem:[#allocation5 + $0x308] sm:$0xff]
    %v2248 = vld [vmem:[#allocation5 + $0x310] sm:$0xff]
    %v2249 = vld [vmem:[#allocation5 + $0x318] sm:$0xff]
    %v2250 = vld [vmem:[#allocation5 + $0x320] sm:$0xff]
    %v2251 = vld [vmem:[#allocation5 + $0x328] sm:$0xff]
    %v2252 = vld [vmem:[#allocation5 + $0x330] sm:$0xff]
    %v2253 = vld [vmem:[#allocation5 + $0x338] sm:$0xff]
    %v2254 = vld [vmem:[#allocation5 + $0x340] sm:$0xff]
    %v2255 = vld [vmem:[#allocation5 + $0x348] sm:$0xff]
    %v2256 = vld [vmem:[#allocation5 + $0x350] sm:$0xff]
    %v2257 = vld [vmem:[#allocation5 + $0x358] sm:$0xff]
    %v2258 = vld [vmem:[#allocation5 + $0x360] sm:$0xff]
    %v2259 = vld [vmem:[#allocation5 + $0x368] sm:$0xff]
    %v2260 = vld [vmem:[#allocation5 + $0x370] sm:$0xff]
    %v2261 = vld [vmem:[#allocation5 + $0x378] sm:$0xff]
    %v2262 = vld [vmem:[#allocation5 + $0x380] sm:$0xff]
    %v2263 = vld [vmem:[#allocation5 + $0x388] sm:$0xff]
    %v2264 = vld [vmem:[#allocation5 + $0x390] sm:$0xff]
    %v2265 = vld [vmem:[#allocation5 + $0x398] sm:$0xff]
    %v2266 = vld [vmem:[#allocation5 + $0x3a0] sm:$0xff]
    %v2267 = vld [vmem:[#allocation5 + $0x3a8] sm:$0xff]
    %v2268 = vld [vmem:[#allocation5 + $0x3b0] sm:$0xff]
    %v2269 = vld [vmem:[#allocation5 + $0x3b8] sm:$0xff]
    %v2270 = vld [vmem:[#allocation5 + $0x3c0] sm:$0xff]
    %v2271 = vld [vmem:[#allocation5 + $0x3c8] sm:$0xff]
    %v2272 = vld [vmem:[#allocation5 + $0x3d0] sm:$0xff]
    %v2273 = vld [vmem:[#allocation5 + $0x3d8] sm:$0xff]
    %v2274 = vld [vmem:[#allocation5 + $0x3e0] sm:$0xff]
    %v2275 = vld [vmem:[#allocation5 + $0x3e8] sm:$0xff]
    %v2276 = vld [vmem:[#allocation5 + $0x3f0] sm:$0xff]
    %v2277 = vld [vmem:[#allocation5 + $0x3f8] sm:$0xff]
    %v2278 = vld [vmem:[#allocation5 + $0x400] sm:$0xff]
    %v2279 = vld [vmem:[#allocation5 + $0x408] sm:$0xff]
    %v2280 = vld [vmem:[#allocation5 + $0x410] sm:$0xff]
    %v2281 = vld [vmem:[#allocation5 + $0x418] sm:$0xff]
    %v2282 = vld [vmem:[#allocation5 + $0x420] sm:$0xff]
    %v2283 = vld [vmem:[#allocation5 + $0x428] sm:$0xff]
    %v2284 = vld [vmem:[#allocation5 + $0x430] sm:$0xff]
    %v2285 = vld [vmem:[#allocation5 + $0x438] sm:$0xff]
    %v2286 = vld [vmem:[#allocation5 + $0x440] sm:$0xff]
    %v2287 = vld [vmem:[#allocation5 + $0x448] sm:$0xff]
    %v2288 = vld [vmem:[#allocation5 + $0x450] sm:$0xff]
    %v2289 = vld [vmem:[#allocation5 + $0x458] sm:$0xff]
    %v2290 = vld [vmem:[#allocation5 + $0x460] sm:$0xff]
    %v2291 = vld [vmem:[#allocation5 + $0x468] sm:$0xff]
    %v2292 = vld [vmem:[#allocation5 + $0x470] sm:$0xff]
    %v2293 = vld [vmem:[#allocation5 + $0x478] sm:$0xff]
    %v2294 = vld [vmem:[#allocation5 + $0x480] sm:$0xff]
    %v2295 = vld [vmem:[#allocation5 + $0x488] sm:$0xff]
    %v2296 = vld [vmem:[#allocation5 + $0x490] sm:$0xff]
    %v2297 = vld [vmem:[#allocation5 + $0x498] sm:$0xff]
    %v2298 = vld [vmem:[#allocation5 + $0x4a0] sm:$0xff]
    %v2299 = vld [vmem:[#allocation5 + $0x4a8] sm:$0xff]
    %v2300 = vld [vmem:[#allocation5 + $0x4b0] sm:$0xff]
    %v2301 = vld [vmem:[#allocation5 + $0x4b8] sm:$0xff]
    %v2302 = vld [vmem:[#allocation5 + $0x4c0] sm:$0xff]
    %v2303 = vld [vmem:[#allocation5 + $0x4c8] sm:$0xff]
    %v2304 = vld [vmem:[#allocation5 + $0x4d0] sm:$0xff]
    %v2305 = vld [vmem:[#allocation5 + $0x4d8] sm:$0xff]
    %v2306 = vld [vmem:[#allocation5 + $0x4e0] sm:$0xff]
    %v2307 = vld [vmem:[#allocation5 + $0x4e8] sm:$0xff]
    %v2308 = vld [vmem:[#allocation5 + $0x4f0] sm:$0xff]
    %v2309 = vld [vmem:[#allocation5 + $0x4f8] sm:$0xff]
    %v2310 = vld [vmem:[#allocation5 + $0x500] sm:$0xff]
    %v2311 = vld [vmem:[#allocation5 + $0x508] sm:$0xff]
    %v2312 = vld [vmem:[#allocation5 + $0x510] sm:$0xff]
    %v2313 = vld [vmem:[#allocation5 + $0x518] sm:$0xff]
    %v2314 = vld [vmem:[#allocation5 + $0x520] sm:$0xff]
    %v2315 = vld [vmem:[#allocation5 + $0x528] sm:$0xff]
    %v2316 = vld [vmem:[#allocation5 + $0x530] sm:$0xff]
    %v2317 = vld [vmem:[#allocation5 + $0x538] sm:$0xff]
    %v2318 = vld [vmem:[#allocation5 + $0x540] sm:$0xff]
    %v2319 = vld [vmem:[#allocation5 + $0x548] sm:$0xff]
    %v2320 = vld [vmem:[#allocation5 + $0x550] sm:$0xff]
    %v2321 = vld [vmem:[#allocation5 + $0x558] sm:$0xff]
    %v2322 = vld [vmem:[#allocation5 + $0x560] sm:$0xff]
    %v2323 = vld [vmem:[#allocation5 + $0x568] sm:$0xff]
    %v2324 = vld [vmem:[#allocation5 + $0x570] sm:$0xff]
    %v2325 = vld [vmem:[#allocation5 + $0x578] sm:$0xff]
    %v2326 = vld [vmem:[#allocation5 + $0x580] sm:$0xff]
    %v2327 = vld [vmem:[#allocation5 + $0x588] sm:$0xff]
    %v2328 = vld [vmem:[#allocation5 + $0x590] sm:$0xff]
    %v2329 = vld [vmem:[#allocation5 + $0x598] sm:$0xff]
    %v2330 = vld [vmem:[#allocation5 + $0x5a0] sm:$0xff]
    %v2331 = vld [vmem:[#allocation5 + $0x5a8] sm:$0xff]
    %v2332 = vld [vmem:[#allocation5 + $0x5b0] sm:$0xff]
    %v2333 = vld [vmem:[#allocation5 + $0x5b8] sm:$0xff]
    %v2334 = vld [vmem:[#allocation5 + $0x5c0] sm:$0xff]
    %v2335 = vld [vmem:[#allocation5 + $0x5c8] sm:$0xff]
    %v2336 = vld [vmem:[#allocation5 + $0x5d0] sm:$0xff]
    %v2337 = vld [vmem:[#allocation5 + $0x5d8] sm:$0xff]
    %v2338 = vld [vmem:[#allocation5 + $0x5e0] sm:$0xff]
    %v2339 = vld [vmem:[#allocation5 + $0x5e8] sm:$0xff]
    %v2340 = vld [vmem:[#allocation5 + $0x5f0] sm:$0xff]
    %v2341 = vld [vmem:[#allocation5 + $0x5f8] sm:$0xff]
    %v2342 = vld [vmem:[#allocation5 + $0x600] sm:$0xff]
    %v2343 = vld [vmem:[#allocation5 + $0x608] sm:$0xff]
    %v2344 = vld [vmem:[#allocation5 + $0x610] sm:$0xff]
    %v2345 = vld [vmem:[#allocation5 + $0x618] sm:$0xff]
    %v2346 = vld [vmem:[#allocation5 + $0x620] sm:$0xff]
    %v2347 = vld [vmem:[#allocation5 + $0x628] sm:$0xff]
    %v2348 = vld [vmem:[#allocation5 + $0x630] sm:$0xff]
    %v2349 = vld [vmem:[#allocation5 + $0x638] sm:$0xff]
    %v2350 = vld [vmem:[#allocation5 + $0x640] sm:$0xff]
    %v2351 = vld [vmem:[#allocation5 + $0x648] sm:$0xff]
    %v2352 = vld [vmem:[#allocation5 + $0x650] sm:$0xff]
    %v2353 = vld [vmem:[#allocation5 + $0x658] sm:$0xff]
    %v2354 = vld [vmem:[#allocation5 + $0x660] sm:$0xff]
    %v2355 = vld [vmem:[#allocation5 + $0x668] sm:$0xff]
    %v2356 = vld [vmem:[#allocation5 + $0x670] sm:$0xff]
    %v2357 = vld [vmem:[#allocation5 + $0x678] sm:$0xff]
    %v2358 = vld [vmem:[#allocation5 + $0x680] sm:$0xff]
    %v2359 = vld [vmem:[#allocation5 + $0x688] sm:$0xff]
    %v2360 = vld [vmem:[#allocation5 + $0x690] sm:$0xff]
    %v2361 = vld [vmem:[#allocation5 + $0x698] sm:$0xff]
    %v2362 = vld [vmem:[#allocation5 + $0x6a0] sm:$0xff]
    %v2363 = vld [vmem:[#allocation5 + $0x6a8] sm:$0xff]
    %v2364 = vld [vmem:[#allocation5 + $0x6b0] sm:$0xff]
    %v2365 = vld [vmem:[#allocation5 + $0x6b8] sm:$0xff]
    %v2366 = vld [vmem:[#allocation5 + $0x6c0] sm:$0xff]
    %v2367 = vld [vmem:[#allocation5 + $0x6c8] sm:$0xff]
    %v2368 = vld [vmem:[#allocation5 + $0x6d0] sm:$0xff]
    %v2369 = vld [vmem:[#allocation5 + $0x6d8] sm:$0xff]
    %v2370 = vld [vmem:[#allocation5 + $0x6e0] sm:$0xff]
    %v2371 = vld [vmem:[#allocation5 + $0x6e8] sm:$0xff]
    %v2372 = vld [vmem:[#allocation5 + $0x6f0] sm:$0xff]
    %v2373 = vld [vmem:[#allocation5 + $0x6f8] sm:$0xff]
    %v2374 = vld [vmem:[#allocation5 + $0x700] sm:$0xff]
    %v2375 = vld [vmem:[#allocation5 + $0x708] sm:$0xff]
    %v2376 = vld [vmem:[#allocation5 + $0x710] sm:$0xff]
    %v2377 = vld [vmem:[#allocation5 + $0x718] sm:$0xff]
    %v2378 = vld [vmem:[#allocation5 + $0x720] sm:$0xff]
    %v2379 = vld [vmem:[#allocation5 + $0x728] sm:$0xff]
    %v2380 = vld [vmem:[#allocation5 + $0x730] sm:$0xff]
    %v2381 = vld [vmem:[#allocation5 + $0x738] sm:$0xff]
    %v2382 = vld [vmem:[#allocation5 + $0x740] sm:$0xff]
    %v2383 = vld [vmem:[#allocation5 + $0x748] sm:$0xff]
    %v2384 = vld [vmem:[#allocation5 + $0x750] sm:$0xff]
    %v2385 = vld [vmem:[#allocation5 + $0x758] sm:$0xff]
    %v2386 = vld [vmem:[#allocation5 + $0x760] sm:$0xff]
    %v2387 = vld [vmem:[#allocation5 + $0x768] sm:$0xff]
    %v2388 = vld [vmem:[#allocation5 + $0x770] sm:$0xff]
    %v2389 = vld [vmem:[#allocation5 + $0x778] sm:$0xff]
    %v2390 = vld [vmem:[#allocation5 + $0x780] sm:$0xff]
    %v2391 = vld [vmem:[#allocation5 + $0x788] sm:$0xff]
    %v2392 = vld [vmem:[#allocation5 + $0x790] sm:$0xff]
    %v2393 = vld [vmem:[#allocation5 + $0x798] sm:$0xff]
    %v2394 = vld [vmem:[#allocation5 + $0x7a0] sm:$0xff]
    %v2395 = vld [vmem:[#allocation5 + $0x7a8] sm:$0xff]
    %v2396 = vld [vmem:[#allocation5 + $0x7b0] sm:$0xff]
    %v2397 = vld [vmem:[#allocation5 + $0x7b8] sm:$0xff]
    %v2398 = vld [vmem:[#allocation5 + $0x7c0] sm:$0xff]
    %v2399 = vld [vmem:[#allocation5 + $0x7c8] sm:$0xff]
    %v2400 = vld [vmem:[#allocation5 + $0x7d0] sm:$0xff]
    %v2401 = vld [vmem:[#allocation5 + $0x7d8] sm:$0xff]
    %v2402 = vld [vmem:[#allocation5 + $0x7e0] sm:$0xff]
    %v2403 = vld [vmem:[#allocation5 + $0x7e8] sm:$0xff]
    %v2404 = vld [vmem:[#allocation5 + $0x7f0] sm:$0xff]
    %v2405 = vld [vmem:[#allocation5 + $0x7f8] sm:$0xff]
    %v2406 = vld [vmem:[%s6] sm:$0xf]
    %v2408 = vlaneseq
    %v2409 = vshrl.u32 %v2408, 7
    %v2410 = vsub.s32 0, %v2409
    %v2411 = vrot.slane %v2406, %v2410
    %v2412 = vlaneseq
    %v2413 = vshrl.u32 %v2412, 7
    %v2414 = vsub.s32 1, %v2413
    %v2415 = vrot.slane %v2406, %v2414
    %v2416 = vlaneseq
    %v2417 = vshrl.u32 %v2416, 7
    %v2418 = vsub.s32 2, %v2417
    %v2419 = vrot.slane %v2406, %v2418
    %v2420 = vlaneseq
    %v2421 = vshrl.u32 %v2420, 7
    %v2422 = vsub.s32 3, %v2421
    %v2423 = vrot.slane %v2406, %v2422
    %v2684 = vunpack.c.l.b16 %v2150
    %v2685 = vunpack.c.h.b16 %v2150
    %v2686 = vunpack.c.l.b16 %v2151
    %v2687 = vunpack.c.h.b16 %v2151
    %v2688 = vunpack.c.l.b16 %v2152
    %v2689 = vunpack.c.h.b16 %v2152
    %v2690 = vunpack.c.l.b16 %v2153
    %v2691 = vunpack.c.h.b16 %v2153
    %v2692 = vunpack.c.l.b16 %v2154
    %v2693 = vunpack.c.h.b16 %v2154
    %v2694 = vunpack.c.l.b16 %v2155
    %v2695 = vunpack.c.h.b16 %v2155
    %v2696 = vunpack.c.l.b16 %v2156
    %v2697 = vunpack.c.h.b16 %v2156
    %v2698 = vunpack.c.l.b16 %v2157
    %v2699 = vunpack.c.h.b16 %v2157
    %v2700 = vunpack.c.l.b16 %v2158
    %v2701 = vunpack.c.h.b16 %v2158
    %v2702 = vunpack.c.l.b16 %v2159
    %v2703 = vunpack.c.h.b16 %v2159
    %v2704 = vunpack.c.l.b16 %v2160
    %v2705 = vunpack.c.h.b16 %v2160
    %v2706 = vunpack.c.l.b16 %v2161
    %v2707 = vunpack.c.h.b16 %v2161
    %v2708 = vunpack.c.l.b16 %v2162
    %v2709 = vunpack.c.h.b16 %v2162
    %v2710 = vunpack.c.l.b16 %v2163
    %v2711 = vunpack.c.h.b16 %v2163
    %v2712 = vunpack.c.l.b16 %v2164
    %v2713 = vunpack.c.h.b16 %v2164
    %v2714 = vunpack.c.l.b16 %v2165
    %v2715 = vunpack.c.h.b16 %v2165
    %v2716 = vunpack.c.l.b16 %v2166
    %v2717 = vunpack.c.h.b16 %v2166
    %v2718 = vunpack.c.l.b16 %v2167
    %v2719 = vunpack.c.h.b16 %v2167
    %v2720 = vunpack.c.l.b16 %v2168
    %v2721 = vunpack.c.h.b16 %v2168
    %v2722 = vunpack.c.l.b16 %v2169
    %v2723 = vunpack.c.h.b16 %v2169
    %v2724 = vunpack.c.l.b16 %v2170
    %v2725 = vunpack.c.h.b16 %v2170
    %v2726 = vunpack.c.l.b16 %v2171
    %v2727 = vunpack.c.h.b16 %v2171
    %v2728 = vunpack.c.l.b16 %v2172
    %v2729 = vunpack.c.h.b16 %v2172
    %v2730 = vunpack.c.l.b16 %v2173
    %v2731 = vunpack.c.h.b16 %v2173
    %v2732 = vunpack.c.l.b16 %v2174
    %v2733 = vunpack.c.h.b16 %v2174
    %v2734 = vunpack.c.l.b16 %v2175
    %v2735 = vunpack.c.h.b16 %v2175
    %v2736 = vunpack.c.l.b16 %v2176
    %v2737 = vunpack.c.h.b16 %v2176
    %v2738 = vunpack.c.l.b16 %v2177
    %v2739 = vunpack.c.h.b16 %v2177
    %v2740 = vunpack.c.l.b16 %v2178
    %v2741 = vunpack.c.h.b16 %v2178
    %v2742 = vunpack.c.l.b16 %v2179
    %v2743 = vunpack.c.h.b16 %v2179
    %v2744 = vunpack.c.l.b16 %v2180
    %v2745 = vunpack.c.h.b16 %v2180
    %v2746 = vunpack.c.l.b16 %v2181
    %v2747 = vunpack.c.h.b16 %v2181
    %v2748 = vunpack.c.l.b16 %v2182
    %v2749 = vunpack.c.h.b16 %v2182
    %v2750 = vunpack.c.l.b16 %v2183
    %v2751 = vunpack.c.h.b16 %v2183
    %v2752 = vunpack.c.l.b16 %v2184
    %v2753 = vunpack.c.h.b16 %v2184
    %v2754 = vunpack.c.l.b16 %v2185
    %v2755 = vunpack.c.h.b16 %v2185
    %v2756 = vunpack.c.l.b16 %v2186
    %v2757 = vunpack.c.h.b16 %v2186
    %v2758 = vunpack.c.l.b16 %v2187
    %v2759 = vunpack.c.h.b16 %v2187
    %v2760 = vunpack.c.l.b16 %v2188
    %v2761 = vunpack.c.h.b16 %v2188
    %v2762 = vunpack.c.l.b16 %v2189
    %v2763 = vunpack.c.h.b16 %v2189
    %v2764 = vunpack.c.l.b16 %v2190
    %v2765 = vunpack.c.h.b16 %v2190
    %v2766 = vunpack.c.l.b16 %v2191
    %v2767 = vunpack.c.h.b16 %v2191
    %v2768 = vunpack.c.l.b16 %v2192
    %v2769 = vunpack.c.h.b16 %v2192
    %v2770 = vunpack.c.l.b16 %v2193
    %v2771 = vunpack.c.h.b16 %v2193
    %v2772 = vunpack.c.l.b16 %v2194
    %v2773 = vunpack.c.h.b16 %v2194
    %v2774 = vunpack.c.l.b16 %v2195
    %v2775 = vunpack.c.h.b16 %v2195
    %v2776 = vunpack.c.l.b16 %v2196
    %v2777 = vunpack.c.h.b16 %v2196
    %v2778 = vunpack.c.l.b16 %v2197
    %v2779 = vunpack.c.h.b16 %v2197
    %v2780 = vunpack.c.l.b16 %v2198
    %v2781 = vunpack.c.h.b16 %v2198
    %v2782 = vunpack.c.l.b16 %v2199
    %v2783 = vunpack.c.h.b16 %v2199
    %v2784 = vunpack.c.l.b16 %v2200
    %v2785 = vunpack.c.h.b16 %v2200
    %v2786 = vunpack.c.l.b16 %v2201
    %v2787 = vunpack.c.h.b16 %v2201
    %v2788 = vunpack.c.l.b16 %v2202
    %v2789 = vunpack.c.h.b16 %v2202
    %v2790 = vunpack.c.l.b16 %v2203
    %v2791 = vunpack.c.h.b16 %v2203
    %v2792 = vunpack.c.l.b16 %v2204
    %v2793 = vunpack.c.h.b16 %v2204
    %v2794 = vunpack.c.l.b16 %v2205
    %v2795 = vunpack.c.h.b16 %v2205
    %v2796 = vunpack.c.l.b16 %v2206
    %v2797 = vunpack.c.h.b16 %v2206
    %v2798 = vunpack.c.l.b16 %v2207
    %v2799 = vunpack.c.h.b16 %v2207
    %v2800 = vunpack.c.l.b16 %v2208
    %v2801 = vunpack.c.h.b16 %v2208
    %v2802 = vunpack.c.l.b16 %v2209
    %v2803 = vunpack.c.h.b16 %v2209
    %v2804 = vunpack.c.l.b16 %v2210
    %v2805 = vunpack.c.h.b16 %v2210
    %v2806 = vunpack.c.l.b16 %v2211
    %v2807 = vunpack.c.h.b16 %v2211
    %v2808 = vunpack.c.l.b16 %v2212
    %v2809 = vunpack.c.h.b16 %v2212
    %v2810 = vunpack.c.l.b16 %v2213
    %v2811 = vunpack.c.h.b16 %v2213
    %v2812 = vunpack.c.l.b16 %v2214
    %v2813 = vunpack.c.h.b16 %v2214
    %v2814 = vunpack.c.l.b16 %v2215
    %v2815 = vunpack.c.h.b16 %v2215
    %v2816 = vunpack.c.l.b16 %v2216
    %v2817 = vunpack.c.h.b16 %v2216
    %v2818 = vunpack.c.l.b16 %v2217
    %v2819 = vunpack.c.h.b16 %v2217
    %v2820 = vunpack.c.l.b16 %v2218
    %v2821 = vunpack.c.h.b16 %v2218
    %v2822 = vunpack.c.l.b16 %v2219
    %v2823 = vunpack.c.h.b16 %v2219
    %v2824 = vunpack.c.l.b16 %v2220
    %v2825 = vunpack.c.h.b16 %v2220
    %v2826 = vunpack.c.l.b16 %v2221
    %v2827 = vunpack.c.h.b16 %v2221
    %v2828 = vunpack.c.l.b16 %v2222
    %v2829 = vunpack.c.h.b16 %v2222
    %v2830 = vunpack.c.l.b16 %v2223
    %v2831 = vunpack.c.h.b16 %v2223
    %v2832 = vunpack.c.l.b16 %v2224
    %v2833 = vunpack.c.h.b16 %v2224
    %v2834 = vunpack.c.l.b16 %v2225
    %v2835 = vunpack.c.h.b16 %v2225
    %v2836 = vunpack.c.l.b16 %v2226
    %v2837 = vunpack.c.h.b16 %v2226
    %v2838 = vunpack.c.l.b16 %v2227
    %v2839 = vunpack.c.h.b16 %v2227
    %v2840 = vunpack.c.l.b16 %v2228
    %v2841 = vunpack.c.h.b16 %v2228
    %v2842 = vunpack.c.l.b16 %v2229
    %v2843 = vunpack.c.h.b16 %v2229
    %v2844 = vunpack.c.l.b16 %v2230
    %v2845 = vunpack.c.h.b16 %v2230
    %v2846 = vunpack.c.l.b16 %v2231
    %v2847 = vunpack.c.h.b16 %v2231
    %v2848 = vunpack.c.l.b16 %v2232
    %v2849 = vunpack.c.h.b16 %v2232
    %v2850 = vunpack.c.l.b16 %v2233
    %v2851 = vunpack.c.h.b16 %v2233
    %v2852 = vunpack.c.l.b16 %v2234
    %v2853 = vunpack.c.h.b16 %v2234
    %v2854 = vunpack.c.l.b16 %v2235
    %v2855 = vunpack.c.h.b16 %v2235
    %v2856 = vunpack.c.l.b16 %v2236
    %v2857 = vunpack.c.h.b16 %v2236
    %v2858 = vunpack.c.l.b16 %v2237
    %v2859 = vunpack.c.h.b16 %v2237
    %v2860 = vunpack.c.l.b16 %v2238
    %v2861 = vunpack.c.h.b16 %v2238
    %v2862 = vunpack.c.l.b16 %v2239
    %v2863 = vunpack.c.h.b16 %v2239
    %v2864 = vunpack.c.l.b16 %v2240
    %v2865 = vunpack.c.h.b16 %v2240
    %v2866 = vunpack.c.l.b16 %v2241
    %v2867 = vunpack.c.h.b16 %v2241
    %v2868 = vunpack.c.l.b16 %v2242
    %v2869 = vunpack.c.h.b16 %v2242
    %v2870 = vunpack.c.l.b16 %v2243
    %v2871 = vunpack.c.h.b16 %v2243
    %v2872 = vunpack.c.l.b16 %v2244
    %v2873 = vunpack.c.h.b16 %v2244
    %v2874 = vunpack.c.l.b16 %v2245
    %v2875 = vunpack.c.h.b16 %v2245
    %v2876 = vunpack.c.l.b16 %v2246
    %v2877 = vunpack.c.h.b16 %v2246
    %v2878 = vunpack.c.l.b16 %v2247
    %v2879 = vunpack.c.h.b16 %v2247
    %v2880 = vunpack.c.l.b16 %v2248
    %v2881 = vunpack.c.h.b16 %v2248
    %v2882 = vunpack.c.l.b16 %v2249
    %v2883 = vunpack.c.h.b16 %v2249
    %v2884 = vunpack.c.l.b16 %v2250
    %v2885 = vunpack.c.h.b16 %v2250
    %v2886 = vunpack.c.l.b16 %v2251
    %v2887 = vunpack.c.h.b16 %v2251
    %v2888 = vunpack.c.l.b16 %v2252
    %v2889 = vunpack.c.h.b16 %v2252
    %v2890 = vunpack.c.l.b16 %v2253
    %v2891 = vunpack.c.h.b16 %v2253
    %v2892 = vunpack.c.l.b16 %v2254
    %v2893 = vunpack.c.h.b16 %v2254
    %v2894 = vunpack.c.l.b16 %v2255
    %v2895 = vunpack.c.h.b16 %v2255
    %v2896 = vunpack.c.l.b16 %v2256
    %v2897 = vunpack.c.h.b16 %v2256
    %v2898 = vunpack.c.l.b16 %v2257
    %v2899 = vunpack.c.h.b16 %v2257
    %v2900 = vunpack.c.l.b16 %v2258
    %v2901 = vunpack.c.h.b16 %v2258
    %v2902 = vunpack.c.l.b16 %v2259
    %v2903 = vunpack.c.h.b16 %v2259
    %v2904 = vunpack.c.l.b16 %v2260
    %v2905 = vunpack.c.h.b16 %v2260
    %v2906 = vunpack.c.l.b16 %v2261
    %v2907 = vunpack.c.h.b16 %v2261
    %v2908 = vunpack.c.l.b16 %v2262
    %v2909 = vunpack.c.h.b16 %v2262
    %v2910 = vunpack.c.l.b16 %v2263
    %v2911 = vunpack.c.h.b16 %v2263
    %v2912 = vunpack.c.l.b16 %v2264
    %v2913 = vunpack.c.h.b16 %v2264
    %v2914 = vunpack.c.l.b16 %v2265
    %v2915 = vunpack.c.h.b16 %v2265
    %v2916 = vunpack.c.l.b16 %v2266
    %v2917 = vunpack.c.h.b16 %v2266
    %v2918 = vunpack.c.l.b16 %v2267
    %v2919 = vunpack.c.h.b16 %v2267
    %v2920 = vunpack.c.l.b16 %v2268
    %v2921 = vunpack.c.h.b16 %v2268
    %v2922 = vunpack.c.l.b16 %v2269
    %v2923 = vunpack.c.h.b16 %v2269
    %v2924 = vunpack.c.l.b16 %v2270
    %v2925 = vunpack.c.h.b16 %v2270
    %v2926 = vunpack.c.l.b16 %v2271
    %v2927 = vunpack.c.h.b16 %v2271
    %v2928 = vunpack.c.l.b16 %v2272
    %v2929 = vunpack.c.h.b16 %v2272
    %v2930 = vunpack.c.l.b16 %v2273
    %v2931 = vunpack.c.h.b16 %v2273
    %v2932 = vunpack.c.l.b16 %v2274
    %v2933 = vunpack.c.h.b16 %v2274
    %v2934 = vunpack.c.l.b16 %v2275
    %v2935 = vunpack.c.h.b16 %v2275
    %v2936 = vunpack.c.l.b16 %v2276
    %v2937 = vunpack.c.h.b16 %v2276
    %v2938 = vunpack.c.l.b16 %v2277
    %v2939 = vunpack.c.h.b16 %v2277
    %v2940 = vunpack.c.l.b16 %v2278
    %v2941 = vunpack.c.h.b16 %v2278
    %v2942 = vunpack.c.l.b16 %v2279
    %v2943 = vunpack.c.h.b16 %v2279
    %v2944 = vunpack.c.l.b16 %v2280
    %v2945 = vunpack.c.h.b16 %v2280
    %v2946 = vunpack.c.l.b16 %v2281
    %v2947 = vunpack.c.h.b16 %v2281
    %v2948 = vunpack.c.l.b16 %v2282
    %v2949 = vunpack.c.h.b16 %v2282
    %v2950 = vunpack.c.l.b16 %v2283
    %v2951 = vunpack.c.h.b16 %v2283
    %v2952 = vunpack.c.l.b16 %v2284
    %v2953 = vunpack.c.h.b16 %v2284
    %v2954 = vunpack.c.l.b16 %v2285
    %v2955 = vunpack.c.h.b16 %v2285
    %v2956 = vunpack.c.l.b16 %v2286
    %v2957 = vunpack.c.h.b16 %v2286
    %v2958 = vunpack.c.l.b16 %v2287
    %v2959 = vunpack.c.h.b16 %v2287
    %v2960 = vunpack.c.l.b16 %v2288
    %v2961 = vunpack.c.h.b16 %v2288
    %v2962 = vunpack.c.l.b16 %v2289
    %v2963 = vunpack.c.h.b16 %v2289
    %v2964 = vunpack.c.l.b16 %v2290
    %v2965 = vunpack.c.h.b16 %v2290
    %v2966 = vunpack.c.l.b16 %v2291
    %v2967 = vunpack.c.h.b16 %v2291
    %v2968 = vunpack.c.l.b16 %v2292
    %v2969 = vunpack.c.h.b16 %v2292
    %v2970 = vunpack.c.l.b16 %v2293
    %v2971 = vunpack.c.h.b16 %v2293
    %v2972 = vunpack.c.l.b16 %v2294
    %v2973 = vunpack.c.h.b16 %v2294
    %v2974 = vunpack.c.l.b16 %v2295
    %v2975 = vunpack.c.h.b16 %v2295
    %v2976 = vunpack.c.l.b16 %v2296
    %v2977 = vunpack.c.h.b16 %v2296
    %v2978 = vunpack.c.l.b16 %v2297
    %v2979 = vunpack.c.h.b16 %v2297
    %v2980 = vunpack.c.l.b16 %v2298
    %v2981 = vunpack.c.h.b16 %v2298
    %v2982 = vunpack.c.l.b16 %v2299
    %v2983 = vunpack.c.h.b16 %v2299
    %v2984 = vunpack.c.l.b16 %v2300
    %v2985 = vunpack.c.h.b16 %v2300
    %v2986 = vunpack.c.l.b16 %v2301
    %v2987 = vunpack.c.h.b16 %v2301
    %v2988 = vunpack.c.l.b16 %v2302
    %v2989 = vunpack.c.h.b16 %v2302
    %v2990 = vunpack.c.l.b16 %v2303
    %v2991 = vunpack.c.h.b16 %v2303
    %v2992 = vunpack.c.l.b16 %v2304
    %v2993 = vunpack.c.h.b16 %v2304
    %v2994 = vunpack.c.l.b16 %v2305
    %v2995 = vunpack.c.h.b16 %v2305
    %v2996 = vunpack.c.l.b16 %v2306
    %v2997 = vunpack.c.h.b16 %v2306
    %v2998 = vunpack.c.l.b16 %v2307
    %v2999 = vunpack.c.h.b16 %v2307
    %v3000 = vunpack.c.l.b16 %v2308
    %v3001 = vunpack.c.h.b16 %v2308
    %v3002 = vunpack.c.l.b16 %v2309
    %v3003 = vunpack.c.h.b16 %v2309
    %v3004 = vunpack.c.l.b16 %v2310
    %v3005 = vunpack.c.h.b16 %v2310
    %v3006 = vunpack.c.l.b16 %v2311
    %v3007 = vunpack.c.h.b16 %v2311
    %v3008 = vunpack.c.l.b16 %v2312
    %v3009 = vunpack.c.h.b16 %v2312
    %v3010 = vunpack.c.l.b16 %v2313
    %v3011 = vunpack.c.h.b16 %v2313
    %v3012 = vunpack.c.l.b16 %v2314
    %v3013 = vunpack.c.h.b16 %v2314
    %v3014 = vunpack.c.l.b16 %v2315
    %v3015 = vunpack.c.h.b16 %v2315
    %v3016 = vunpack.c.l.b16 %v2316
    %v3017 = vunpack.c.h.b16 %v2316
    %v3018 = vunpack.c.l.b16 %v2317
    %v3019 = vunpack.c.h.b16 %v2317
    %v3020 = vunpack.c.l.b16 %v2318
    %v3021 = vunpack.c.h.b16 %v2318
    %v3022 = vunpack.c.l.b16 %v2319
    %v3023 = vunpack.c.h.b16 %v2319
    %v3024 = vunpack.c.l.b16 %v2320
    %v3025 = vunpack.c.h.b16 %v2320
    %v3026 = vunpack.c.l.b16 %v2321
    %v3027 = vunpack.c.h.b16 %v2321
    %v3028 = vunpack.c.l.b16 %v2322
    %v3029 = vunpack.c.h.b16 %v2322
    %v3030 = vunpack.c.l.b16 %v2323
    %v3031 = vunpack.c.h.b16 %v2323
    %v3032 = vunpack.c.l.b16 %v2324
    %v3033 = vunpack.c.h.b16 %v2324
    %v3034 = vunpack.c.l.b16 %v2325
    %v3035 = vunpack.c.h.b16 %v2325
    %v3036 = vunpack.c.l.b16 %v2326
    %v3037 = vunpack.c.h.b16 %v2326
    %v3038 = vunpack.c.l.b16 %v2327
    %v3039 = vunpack.c.h.b16 %v2327
    %v3040 = vunpack.c.l.b16 %v2328
    %v3041 = vunpack.c.h.b16 %v2328
    %v3042 = vunpack.c.l.b16 %v2329
    %v3043 = vunpack.c.h.b16 %v2329
    %v3044 = vunpack.c.l.b16 %v2330
    %v3045 = vunpack.c.h.b16 %v2330
    %v3046 = vunpack.c.l.b16 %v2331
    %v3047 = vunpack.c.h.b16 %v2331
    %v3048 = vunpack.c.l.b16 %v2332
    %v3049 = vunpack.c.h.b16 %v2332
    %v3050 = vunpack.c.l.b16 %v2333
    %v3051 = vunpack.c.h.b16 %v2333
    %v3052 = vunpack.c.l.b16 %v2334
    %v3053 = vunpack.c.h.b16 %v2334
    %v3054 = vunpack.c.l.b16 %v2335
    %v3055 = vunpack.c.h.b16 %v2335
    %v3056 = vunpack.c.l.b16 %v2336
    %v3057 = vunpack.c.h.b16 %v2336
    %v3058 = vunpack.c.l.b16 %v2337
    %v3059 = vunpack.c.h.b16 %v2337
    %v3060 = vunpack.c.l.b16 %v2338
    %v3061 = vunpack.c.h.b16 %v2338
    %v3062 = vunpack.c.l.b16 %v2339
    %v3063 = vunpack.c.h.b16 %v2339
    %v3064 = vunpack.c.l.b16 %v2340
    %v3065 = vunpack.c.h.b16 %v2340
    %v3066 = vunpack.c.l.b16 %v2341
    %v3067 = vunpack.c.h.b16 %v2341
    %v3068 = vunpack.c.l.b16 %v2342
    %v3069 = vunpack.c.h.b16 %v2342
    %v3070 = vunpack.c.l.b16 %v2343
    %v3071 = vunpack.c.h.b16 %v2343
    %v3072 = vunpack.c.l.b16 %v2344
    %v3073 = vunpack.c.h.b16 %v2344
    %v3074 = vunpack.c.l.b16 %v2345
    %v3075 = vunpack.c.h.b16 %v2345
    %v3076 = vunpack.c.l.b16 %v2346
    %v3077 = vunpack.c.h.b16 %v2346
    %v3078 = vunpack.c.l.b16 %v2347
    %v3079 = vunpack.c.h.b16 %v2347
    %v3080 = vunpack.c.l.b16 %v2348
    %v3081 = vunpack.c.h.b16 %v2348
    %v3082 = vunpack.c.l.b16 %v2349
    %v3083 = vunpack.c.h.b16 %v2349
    %v3084 = vunpack.c.l.b16 %v2350
    %v3085 = vunpack.c.h.b16 %v2350
    %v3086 = vunpack.c.l.b16 %v2351
    %v3087 = vunpack.c.h.b16 %v2351
    %v3088 = vunpack.c.l.b16 %v2352
    %v3089 = vunpack.c.h.b16 %v2352
    %v3090 = vunpack.c.l.b16 %v2353
    %v3091 = vunpack.c.h.b16 %v2353
    %v3092 = vunpack.c.l.b16 %v2354
    %v3093 = vunpack.c.h.b16 %v2354
    %v3094 = vunpack.c.l.b16 %v2355
    %v3095 = vunpack.c.h.b16 %v2355
    %v3096 = vunpack.c.l.b16 %v2356
    %v3097 = vunpack.c.h.b16 %v2356
    %v3098 = vunpack.c.l.b16 %v2357
    %v3099 = vunpack.c.h.b16 %v2357
    %v3100 = vunpack.c.l.b16 %v2358
    %v3101 = vunpack.c.h.b16 %v2358
    %v3102 = vunpack.c.l.b16 %v2359
    %v3103 = vunpack.c.h.b16 %v2359
    %v3104 = vunpack.c.l.b16 %v2360
    %v3105 = vunpack.c.h.b16 %v2360
    %v3106 = vunpack.c.l.b16 %v2361
    %v3107 = vunpack.c.h.b16 %v2361
    %v3108 = vunpack.c.l.b16 %v2362
    %v3109 = vunpack.c.h.b16 %v2362
    %v3110 = vunpack.c.l.b16 %v2363
    %v3111 = vunpack.c.h.b16 %v2363
    %v3112 = vunpack.c.l.b16 %v2364
    %v3113 = vunpack.c.h.b16 %v2364
    %v3114 = vunpack.c.l.b16 %v2365
    %v3115 = vunpack.c.h.b16 %v2365
    %v3116 = vunpack.c.l.b16 %v2366
    %v3117 = vunpack.c.h.b16 %v2366
    %v3118 = vunpack.c.l.b16 %v2367
    %v3119 = vunpack.c.h.b16 %v2367
    %v3120 = vunpack.c.l.b16 %v2368
    %v3121 = vunpack.c.h.b16 %v2368
    %v3122 = vunpack.c.l.b16 %v2369
    %v3123 = vunpack.c.h.b16 %v2369
    %v3124 = vunpack.c.l.b16 %v2370
    %v3125 = vunpack.c.h.b16 %v2370
    %v3126 = vunpack.c.l.b16 %v2371
    %v3127 = vunpack.c.h.b16 %v2371
    %v3128 = vunpack.c.l.b16 %v2372
    %v3129 = vunpack.c.h.b16 %v2372
    %v3130 = vunpack.c.l.b16 %v2373
    %v3131 = vunpack.c.h.b16 %v2373
    %v3132 = vunpack.c.l.b16 %v2374
    %v3133 = vunpack.c.h.b16 %v2374
    %v3134 = vunpack.c.l.b16 %v2375
    %v3135 = vunpack.c.h.b16 %v2375
    %v3136 = vunpack.c.l.b16 %v2376
    %v3137 = vunpack.c.h.b16 %v2376
    %v3138 = vunpack.c.l.b16 %v2377
    %v3139 = vunpack.c.h.b16 %v2377
    %v3140 = vunpack.c.l.b16 %v2378
    %v3141 = vunpack.c.h.b16 %v2378
    %v3142 = vunpack.c.l.b16 %v2379
    %v3143 = vunpack.c.h.b16 %v2379
    %v3144 = vunpack.c.l.b16 %v2380
    %v3145 = vunpack.c.h.b16 %v2380
    %v3146 = vunpack.c.l.b16 %v2381
    %v3147 = vunpack.c.h.b16 %v2381
    %v3148 = vunpack.c.l.b16 %v2382
    %v3149 = vunpack.c.h.b16 %v2382
    %v3150 = vunpack.c.l.b16 %v2383
    %v3151 = vunpack.c.h.b16 %v2383
    %v3152 = vunpack.c.l.b16 %v2384
    %v3153 = vunpack.c.h.b16 %v2384
    %v3154 = vunpack.c.l.b16 %v2385
    %v3155 = vunpack.c.h.b16 %v2385
    %v3156 = vunpack.c.l.b16 %v2386
    %v3157 = vunpack.c.h.b16 %v2386
    %v3158 = vunpack.c.l.b16 %v2387
    %v3159 = vunpack.c.h.b16 %v2387
    %v3160 = vunpack.c.l.b16 %v2388
    %v3161 = vunpack.c.h.b16 %v2388
    %v3162 = vunpack.c.l.b16 %v2389
    %v3163 = vunpack.c.h.b16 %v2389
    %v3164 = vunpack.c.l.b16 %v2390
    %v3165 = vunpack.c.h.b16 %v2390
    %v3166 = vunpack.c.l.b16 %v2391
    %v3167 = vunpack.c.h.b16 %v2391
    %v3168 = vunpack.c.l.b16 %v2392
    %v3169 = vunpack.c.h.b16 %v2392
    %v3170 = vunpack.c.l.b16 %v2393
    %v3171 = vunpack.c.h.b16 %v2393
    %v3172 = vunpack.c.l.b16 %v2394
    %v3173 = vunpack.c.h.b16 %v2394
    %v3174 = vunpack.c.l.b16 %v2395
    %v3175 = vunpack.c.h.b16 %v2395
    %v3176 = vunpack.c.l.b16 %v2396
    %v3177 = vunpack.c.h.b16 %v2396
    %v3178 = vunpack.c.l.b16 %v2397
    %v3179 = vunpack.c.h.b16 %v2397
    %v3180 = vunpack.c.l.b16 %v2398
    %v3181 = vunpack.c.h.b16 %v2398
    %v3182 = vunpack.c.l.b16 %v2399
    %v3183 = vunpack.c.h.b16 %v2399
    %v3184 = vunpack.c.l.b16 %v2400
    %v3185 = vunpack.c.h.b16 %v2400
    %v3186 = vunpack.c.l.b16 %v2401
    %v3187 = vunpack.c.h.b16 %v2401
    %v3188 = vunpack.c.l.b16 %v2402
    %v3189 = vunpack.c.h.b16 %v2402
    %v3190 = vunpack.c.l.b16 %v2403
    %v3191 = vunpack.c.h.b16 %v2403
    %v3192 = vunpack.c.l.b16 %v2404
    %v3193 = vunpack.c.h.b16 %v2404
    %v3194 = vunpack.c.l.b16 %v2405
    %v3195 = vunpack.c.h.b16 %v2405
    %v3196 = vpack.c.b16 %v2688, %v2684
    %v3197 = vpack.c.b16 %v2689, %v2685
    %v3198 = vpack.c.b16 %v2690, %v2686
    %v3199 = vpack.c.b16 %v2691, %v2687
    %v3200 = vpack.c.b16 %v2696, %v2692
    %v3201 = vpack.c.b16 %v2697, %v2693
    %v3202 = vpack.c.b16 %v2698, %v2694
    %v3203 = vpack.c.b16 %v2699, %v2695
    %v3204 = vpack.c.b16 %v2704, %v2700
    %v3205 = vpack.c.b16 %v2705, %v2701
    %v3206 = vpack.c.b16 %v2706, %v2702
    %v3207 = vpack.c.b16 %v2707, %v2703
    %v3208 = vpack.c.b16 %v2712, %v2708
    %v3209 = vpack.c.b16 %v2713, %v2709
    %v3210 = vpack.c.b16 %v2714, %v2710
    %v3211 = vpack.c.b16 %v2715, %v2711
    %v3212 = vpack.c.b16 %v2720, %v2716
    %v3213 = vpack.c.b16 %v2721, %v2717
    %v3214 = vpack.c.b16 %v2722, %v2718
    %v3215 = vpack.c.b16 %v2723, %v2719
    %v3216 = vpack.c.b16 %v2728, %v2724
    %v3217 = vpack.c.b16 %v2729, %v2725
    %v3218 = vpack.c.b16 %v2730, %v2726
    %v3219 = vpack.c.b16 %v2731, %v2727
    %v3220 = vpack.c.b16 %v2736, %v2732
    %v3221 = vpack.c.b16 %v2737, %v2733
    %v3222 = vpack.c.b16 %v2738, %v2734
    %v3223 = vpack.c.b16 %v2739, %v2735
    %v3224 = vpack.c.b16 %v2744, %v2740
    %v3225 = vpack.c.b16 %v2745, %v2741
    %v3226 = vpack.c.b16 %v2746, %v2742
    %v3227 = vpack.c.b16 %v2747, %v2743
    %v3228 = vpack.c.b16 %v2752, %v2748
    %v3229 = vpack.c.b16 %v2753, %v2749
    %v3230 = vpack.c.b16 %v2754, %v2750
    %v3231 = vpack.c.b16 %v2755, %v2751
    %v3232 = vpack.c.b16 %v2760, %v2756
    %v3233 = vpack.c.b16 %v2761, %v2757
    %v3234 = vpack.c.b16 %v2762, %v2758
    %v3235 = vpack.c.b16 %v2763, %v2759
    %v3236 = vpack.c.b16 %v2768, %v2764
    %v3237 = vpack.c.b16 %v2769, %v2765
    %v3238 = vpack.c.b16 %v2770, %v2766
    %v3239 = vpack.c.b16 %v2771, %v2767
    %v3240 = vpack.c.b16 %v2776, %v2772
    %v3241 = vpack.c.b16 %v2777, %v2773
    %v3242 = vpack.c.b16 %v2778, %v2774
    %v3243 = vpack.c.b16 %v2779, %v2775
    %v3244 = vpack.c.b16 %v2784, %v2780
    %v3245 = vpack.c.b16 %v2785, %v2781
    %v3246 = vpack.c.b16 %v2786, %v2782
    %v3247 = vpack.c.b16 %v2787, %v2783
    %v3248 = vpack.c.b16 %v2792, %v2788
    %v3249 = vpack.c.b16 %v2793, %v2789
    %v3250 = vpack.c.b16 %v2794, %v2790
    %v3251 = vpack.c.b16 %v2795, %v2791
    %v3252 = vpack.c.b16 %v2800, %v2796
    %v3253 = vpack.c.b16 %v2801, %v2797
    %v3254 = vpack.c.b16 %v2802, %v2798
    %v3255 = vpack.c.b16 %v2803, %v2799
    %v3256 = vpack.c.b16 %v2808, %v2804
    %v3257 = vpack.c.b16 %v2809, %v2805
    %v3258 = vpack.c.b16 %v2810, %v2806
    %v3259 = vpack.c.b16 %v2811, %v2807
    %v3260 = vpack.c.b16 %v2816, %v2812
    %v3261 = vpack.c.b16 %v2817, %v2813
    %v3262 = vpack.c.b16 %v2818, %v2814
    %v3263 = vpack.c.b16 %v2819, %v2815
    %v3264 = vpack.c.b16 %v2824, %v2820
    %v3265 = vpack.c.b16 %v2825, %v2821
    %v3266 = vpack.c.b16 %v2826, %v2822
    %v3267 = vpack.c.b16 %v2827, %v2823
    %v3268 = vpack.c.b16 %v2832, %v2828
    %v3269 = vpack.c.b16 %v2833, %v2829
    %v3270 = vpack.c.b16 %v2834, %v2830
    %v3271 = vpack.c.b16 %v2835, %v2831
    %v3272 = vpack.c.b16 %v2840, %v2836
    %v3273 = vpack.c.b16 %v2841, %v2837
    %v3274 = vpack.c.b16 %v2842, %v2838
    %v3275 = vpack.c.b16 %v2843, %v2839
    %v3276 = vpack.c.b16 %v2848, %v2844
    %v3277 = vpack.c.b16 %v2849, %v2845
    %v3278 = vpack.c.b16 %v2850, %v2846
    %v3279 = vpack.c.b16 %v2851, %v2847
    %v3280 = vpack.c.b16 %v2856, %v2852
    %v3281 = vpack.c.b16 %v2857, %v2853
    %v3282 = vpack.c.b16 %v2858, %v2854
    %v3283 = vpack.c.b16 %v2859, %v2855
    %v3284 = vpack.c.b16 %v2864, %v2860
    %v3285 = vpack.c.b16 %v2865, %v2861
    %v3286 = vpack.c.b16 %v2866, %v2862
    %v3287 = vpack.c.b16 %v2867, %v2863
    %v3288 = vpack.c.b16 %v2872, %v2868
    %v3289 = vpack.c.b16 %v2873, %v2869
    %v3290 = vpack.c.b16 %v2874, %v2870
    %v3291 = vpack.c.b16 %v2875, %v2871
    %v3292 = vpack.c.b16 %v2880, %v2876
    %v3293 = vpack.c.b16 %v2881, %v2877
    %v3294 = vpack.c.b16 %v2882, %v2878
    %v3295 = vpack.c.b16 %v2883, %v2879
    %v3296 = vpack.c.b16 %v2888, %v2884
    %v3297 = vpack.c.b16 %v2889, %v2885
    %v3298 = vpack.c.b16 %v2890, %v2886
    %v3299 = vpack.c.b16 %v2891, %v2887
    %v3300 = vpack.c.b16 %v2896, %v2892
    %v3301 = vpack.c.b16 %v2897, %v2893
    %v3302 = vpack.c.b16 %v2898, %v2894
    %v3303 = vpack.c.b16 %v2899, %v2895
    %v3304 = vpack.c.b16 %v2904, %v2900
    %v3305 = vpack.c.b16 %v2905, %v2901
    %v3306 = vpack.c.b16 %v2906, %v2902
    %v3307 = vpack.c.b16 %v2907, %v2903
    %v3308 = vpack.c.b16 %v2912, %v2908
    %v3309 = vpack.c.b16 %v2913, %v2909
    %v3310 = vpack.c.b16 %v2914, %v2910
    %v3311 = vpack.c.b16 %v2915, %v2911
    %v3312 = vpack.c.b16 %v2920, %v2916
    %v3313 = vpack.c.b16 %v2921, %v2917
    %v3314 = vpack.c.b16 %v2922, %v2918
    %v3315 = vpack.c.b16 %v2923, %v2919
    %v3316 = vpack.c.b16 %v2928, %v2924
    %v3317 = vpack.c.b16 %v2929, %v2925
    %v3318 = vpack.c.b16 %v2930, %v2926
    %v3319 = vpack.c.b16 %v2931, %v2927
    %v3320 = vpack.c.b16 %v2936, %v2932
    %v3321 = vpack.c.b16 %v2937, %v2933
    %v3322 = vpack.c.b16 %v2938, %v2934
    %v3323 = vpack.c.b16 %v2939, %v2935
    %v3324 = vpack.c.b16 %v2944, %v2940
    %v3325 = vpack.c.b16 %v2945, %v2941
    %v3326 = vpack.c.b16 %v2946, %v2942
    %v3327 = vpack.c.b16 %v2947, %v2943
    %v3328 = vpack.c.b16 %v2952, %v2948
    %v3329 = vpack.c.b16 %v2953, %v2949
    %v3330 = vpack.c.b16 %v2954, %v2950
    %v3331 = vpack.c.b16 %v2955, %v2951
    %v3332 = vpack.c.b16 %v2960, %v2956
    %v3333 = vpack.c.b16 %v2961, %v2957
    %v3334 = vpack.c.b16 %v2962, %v2958
    %v3335 = vpack.c.b16 %v2963, %v2959
    %v3336 = vpack.c.b16 %v2968, %v2964
    %v3337 = vpack.c.b16 %v2969, %v2965
    %v3338 = vpack.c.b16 %v2970, %v2966
    %v3339 = vpack.c.b16 %v2971, %v2967
    %v3340 = vpack.c.b16 %v2976, %v2972
    %v3341 = vpack.c.b16 %v2977, %v2973
    %v3342 = vpack.c.b16 %v2978, %v2974
    %v3343 = vpack.c.b16 %v2979, %v2975
    %v3344 = vpack.c.b16 %v2984, %v2980
    %v3345 = vpack.c.b16 %v2985, %v2981
    %v3346 = vpack.c.b16 %v2986, %v2982
    %v3347 = vpack.c.b16 %v2987, %v2983
    %v3348 = vpack.c.b16 %v2992, %v2988
    %v3349 = vpack.c.b16 %v2993, %v2989
    %v3350 = vpack.c.b16 %v2994, %v2990
    %v3351 = vpack.c.b16 %v2995, %v2991
    %v3352 = vpack.c.b16 %v3000, %v2996
    %v3353 = vpack.c.b16 %v3001, %v2997
    %v3354 = vpack.c.b16 %v3002, %v2998
    %v3355 = vpack.c.b16 %v3003, %v2999
    %v3356 = vpack.c.b16 %v3008, %v3004
    %v3357 = vpack.c.b16 %v3009, %v3005
    %v3358 = vpack.c.b16 %v3010, %v3006
    %v3359 = vpack.c.b16 %v3011, %v3007
    %v3360 = vpack.c.b16 %v3016, %v3012
    %v3361 = vpack.c.b16 %v3017, %v3013
    %v3362 = vpack.c.b16 %v3018, %v3014
    %v3363 = vpack.c.b16 %v3019, %v3015
    %v3364 = vpack.c.b16 %v3024, %v3020
    %v3365 = vpack.c.b16 %v3025, %v3021
    %v3366 = vpack.c.b16 %v3026, %v3022
    %v3367 = vpack.c.b16 %v3027, %v3023
    %v3368 = vpack.c.b16 %v3032, %v3028
    %v3369 = vpack.c.b16 %v3033, %v3029
    %v3370 = vpack.c.b16 %v3034, %v3030
    %v3371 = vpack.c.b16 %v3035, %v3031
    %v3372 = vpack.c.b16 %v3040, %v3036
    %v3373 = vpack.c.b16 %v3041, %v3037
    %v3374 = vpack.c.b16 %v3042, %v3038
    %v3375 = vpack.c.b16 %v3043, %v3039
    %v3376 = vpack.c.b16 %v3048, %v3044
    %v3377 = vpack.c.b16 %v3049, %v3045
    %v3378 = vpack.c.b16 %v3050, %v3046
    %v3379 = vpack.c.b16 %v3051, %v3047
    %v3380 = vpack.c.b16 %v3056, %v3052
    %v3381 = vpack.c.b16 %v3057, %v3053
    %v3382 = vpack.c.b16 %v3058, %v3054
    %v3383 = vpack.c.b16 %v3059, %v3055
    %v3384 = vpack.c.b16 %v3064, %v3060
    %v3385 = vpack.c.b16 %v3065, %v3061
    %v3386 = vpack.c.b16 %v3066, %v3062
    %v3387 = vpack.c.b16 %v3067, %v3063
    %v3388 = vpack.c.b16 %v3072, %v3068
    %v3389 = vpack.c.b16 %v3073, %v3069
    %v3390 = vpack.c.b16 %v3074, %v3070
    %v3391 = vpack.c.b16 %v3075, %v3071
    %v3392 = vpack.c.b16 %v3080, %v3076
    %v3393 = vpack.c.b16 %v3081, %v3077
    %v3394 = vpack.c.b16 %v3082, %v3078
    %v3395 = vpack.c.b16 %v3083, %v3079
    %v3396 = vpack.c.b16 %v3088, %v3084
    %v3397 = vpack.c.b16 %v3089, %v3085
    %v3398 = vpack.c.b16 %v3090, %v3086
    %v3399 = vpack.c.b16 %v3091, %v3087
    %v3400 = vpack.c.b16 %v3096, %v3092
    %v3401 = vpack.c.b16 %v3097, %v3093
    %v3402 = vpack.c.b16 %v3098, %v3094
    %v3403 = vpack.c.b16 %v3099, %v3095
    %v3404 = vpack.c.b16 %v3104, %v3100
    %v3405 = vpack.c.b16 %v3105, %v3101
    %v3406 = vpack.c.b16 %v3106, %v3102
    %v3407 = vpack.c.b16 %v3107, %v3103
    %v3408 = vpack.c.b16 %v3112, %v3108
    %v3409 = vpack.c.b16 %v3113, %v3109
    %v3410 = vpack.c.b16 %v3114, %v3110
    %v3411 = vpack.c.b16 %v3115, %v3111
    %v3412 = vpack.c.b16 %v3120, %v3116
    %v3413 = vpack.c.b16 %v3121, %v3117
    %v3414 = vpack.c.b16 %v3122, %v3118
    %v3415 = vpack.c.b16 %v3123, %v3119
    %v3416 = vpack.c.b16 %v3128, %v3124
    %v3417 = vpack.c.b16 %v3129, %v3125
    %v3418 = vpack.c.b16 %v3130, %v3126
    %v3419 = vpack.c.b16 %v3131, %v3127
    %v3420 = vpack.c.b16 %v3136, %v3132
    %v3421 = vpack.c.b16 %v3137, %v3133
    %v3422 = vpack.c.b16 %v3138, %v3134
    %v3423 = vpack.c.b16 %v3139, %v3135
    %v3424 = vpack.c.b16 %v3144, %v3140
    %v3425 = vpack.c.b16 %v3145, %v3141
    %v3426 = vpack.c.b16 %v3146, %v3142
    %v3427 = vpack.c.b16 %v3147, %v3143
    %v3428 = vpack.c.b16 %v3152, %v3148
    %v3429 = vpack.c.b16 %v3153, %v3149
    %v3430 = vpack.c.b16 %v3154, %v3150
    %v3431 = vpack.c.b16 %v3155, %v3151
    %v3432 = vpack.c.b16 %v3160, %v3156
    %v3433 = vpack.c.b16 %v3161, %v3157
    %v3434 = vpack.c.b16 %v3162, %v3158
    %v3435 = vpack.c.b16 %v3163, %v3159
    %v3436 = vpack.c.b16 %v3168, %v3164
    %v3437 = vpack.c.b16 %v3169, %v3165
    %v3438 = vpack.c.b16 %v3170, %v3166
    %v3439 = vpack.c.b16 %v3171, %v3167
    %v3440 = vpack.c.b16 %v3176, %v3172
    %v3441 = vpack.c.b16 %v3177, %v3173
    %v3442 = vpack.c.b16 %v3178, %v3174
    %v3443 = vpack.c.b16 %v3179, %v3175
    %v3444 = vpack.c.b16 %v3184, %v3180
    %v3445 = vpack.c.b16 %v3185, %v3181
    %v3446 = vpack.c.b16 %v3186, %v3182
    %v3447 = vpack.c.b16 %v3187, %v3183
    %v3448 = vpack.c.b16 %v3192, %v3188
    %v3449 = vpack.c.b16 %v3193, %v3189
    %v3450 = vpack.c.b16 %v3194, %v3190
    %v3451 = vpack.c.b16 %v3195, %v3191
    %3708 = vmatprep.subr.bf16.mxu0 %v3225
    %3709 = vmatpush1.bf16.msra.mxu0 %v3224
    %3710 = vmatprep.subr.bf16.mxu0 %v3221
    %3711 = vmatpush1.bf16.msra.mxu0 %v3220
    %3712 = vmatprep.subr.bf16.mxu0 %v3217
    %3713 = vmatpush1.bf16.msra.mxu0 %v3216
    %3714 = vmatprep.subr.bf16.mxu0 %v3213
    %3715 = vmatpush1.bf16.msra.mxu0 %v3212
    %3716 = vmatprep.subr.bf16.mxu0 %v3209
    %3717 = vmatpush1.bf16.msra.mxu0 %v3208
    %3718 = vmatprep.subr.bf16.mxu0 %v3205
    %3719 = vmatpush1.bf16.msra.mxu0 %v3204
    %3720 = vmatprep.subr.bf16.mxu0 %v3201
    %3721 = vmatpush1.bf16.msra.mxu0 %v3200
    %3722 = vmatprep.subr.bf16.mxu0 %v3197
    %3723 = vmatpush1.bf16.msra.mxu0 %v3196
    %3724 = vmatprep.subr.bf16.mxu0 %v3257
    %3725 = vmatpush2.bf16.msra.mxu0 %v3256
    %3726 = vmatprep.subr.bf16.mxu0 %v3253
    %3727 = vmatpush2.bf16.msra.mxu0 %v3252
    %3728 = vmatprep.subr.bf16.mxu0 %v3249
    %3729 = vmatpush2.bf16.msra.mxu0 %v3248
    %3730 = vmatprep.subr.bf16.mxu0 %v3245
    %3731 = vmatpush2.bf16.msra.mxu0 %v3244
    %3732 = vmatprep.subr.bf16.mxu0 %v3241
    %3733 = vmatpush2.bf16.msra.mxu0 %v3240
    %3734 = vmatprep.subr.bf16.mxu0 %v3237
    %3735 = vmatpush2.bf16.msra.mxu0 %v3236
    %3736 = vmatprep.subr.bf16.mxu0 %v3233
    %3737 = vmatpush2.bf16.msra.mxu0 %v3232
    %3738 = vmatprep.subr.bf16.mxu0 %v3229
    %3739 = vmatpush2.bf16.msra.mxu0 %v3228
    %3740 = vmatprep.mubr.bf16.mxu0 %v2143
    %3741 = vmatmul.mubr.bf16.gmra.mxu0 %v2142
    %v3742 = vpop.f32.mrf.mxu0
    %v3743 = vadd.f32 %v2411, %v3742
    %v3744 = vpop.f32.mrf.mxu0
    %v3745 = vadd.f32 %v2415, %v3744
    %v3746 = vpop.f32.mrf.mxu0
    %v3747 = vpop.f32.mrf.mxu0
    %3748 = vdwg.mxu0
    %3749 = vmatprep.subr.bf16.mxu0 %v3289
    %3750 = vmatpush1.bf16.msra.mxu0 %v3288
    %3751 = vmatprep.subr.bf16.mxu0 %v3285
    %3752 = vmatpush1.bf16.msra.mxu0 %v3284
    %3753 = vmatprep.subr.bf16.mxu0 %v3281
    %3754 = vmatpush1.bf16.msra.mxu0 %v3280
    %3755 = vmatprep.subr.bf16.mxu0 %v3277
    %3756 = vmatpush1.bf16.msra.mxu0 %v3276
    %3757 = vmatprep.subr.bf16.mxu0 %v3273
    %3758 = vmatpush1.bf16.msra.mxu0 %v3272
    %3759 = vmatprep.subr.bf16.mxu0 %v3269
    %3760 = vmatpush1.bf16.msra.mxu0 %v3268
    %3761 = vmatprep.subr.bf16.mxu0 %v3265
    %3762 = vmatpush1.bf16.msra.mxu0 %v3264
    %3763 = vmatprep.subr.bf16.mxu0 %v3261
    %3764 = vmatpush1.bf16.msra.mxu0 %v3260
    %3765 = vmatprep.subr.bf16.mxu0 %v3321
    %3766 = vmatpush2.bf16.msra.mxu0 %v3320
    %3767 = vmatprep.subr.bf16.mxu0 %v3317
    %3768 = vmatpush2.bf16.msra.mxu0 %v3316
    %3769 = vmatprep.subr.bf16.mxu0 %v3313
    %3770 = vmatpush2.bf16.msra.mxu0 %v3312
    %3771 = vmatprep.subr.bf16.mxu0 %v3309
    %3772 = vmatpush2.bf16.msra.mxu0 %v3308
    %3773 = vmatprep.subr.bf16.mxu0 %v3305
    %3774 = vmatpush2.bf16.msra.mxu0 %v3304
    %3775 = vmatprep.subr.bf16.mxu0 %v3301
    %3776 = vmatpush2.bf16.msra.mxu0 %v3300
    %3777 = vmatprep.subr.bf16.mxu0 %v3297
    %3778 = vmatpush2.bf16.msra.mxu0 %v3296
    %3779 = vmatprep.subr.bf16.mxu0 %v3293
    %3780 = vmatpush2.bf16.msra.mxu0 %v3292
    %3781 = vmatprep.mubr.bf16.mxu0 %v2145
    %3782 = vmatmul.mubr.bf16.gmra.mxu0 %v2144
    %v3783 = vpop.f32.mrf.mxu0
    %v3784 = vadd.f32 %v3743, %v3783
    %v3785 = vpop.f32.mrf.mxu0
    %v3786 = vadd.f32 %v3745, %v3785
    %v3787 = vpop.f32.mrf.mxu0
    %v3788 = vpop.f32.mrf.mxu0
    %3789 = vdwg.mxu0
    %3790 = vmatprep.subr.bf16.mxu0 %v3353
    %3791 = vmatpush1.bf16.msra.mxu0 %v3352
    %3792 = vmatprep.subr.bf16.mxu0 %v3349
    %3793 = vmatpush1.bf16.msra.mxu0 %v3348
    %3794 = vmatprep.subr.bf16.mxu0 %v3345
    %3795 = vmatpush1.bf16.msra.mxu0 %v3344
    %3796 = vmatprep.subr.bf16.mxu0 %v3341
    %3797 = vmatpush1.bf16.msra.mxu0 %v3340
    %3798 = vmatprep.subr.bf16.mxu0 %v3337
    %3799 = vmatpush1.bf16.msra.mxu0 %v3336
    %3800 = vmatprep.subr.bf16.mxu0 %v3333
    %3801 = vmatpush1.bf16.msra.mxu0 %v3332
    %3802 = vmatprep.subr.bf16.mxu0 %v3329
    %3803 = vmatpush1.bf16.msra.mxu0 %v3328
    %3804 = vmatprep.subr.bf16.mxu0 %v3325
    %3805 = vmatpush1.bf16.msra.mxu0 %v3324
    %3806 = vmatprep.subr.bf16.mxu0 %v3385
    %3807 = vmatpush2.bf16.msra.mxu0 %v3384
    %3808 = vmatprep.subr.bf16.mxu0 %v3381
    %3809 = vmatpush2.bf16.msra.mxu0 %v3380
    %3810 = vmatprep.subr.bf16.mxu0 %v3377
    %3811 = vmatpush2.bf16.msra.mxu0 %v3376
    %3812 = vmatprep.subr.bf16.mxu0 %v3373
    %3813 = vmatpush2.bf16.msra.mxu0 %v3372
    %3814 = vmatprep.subr.bf16.mxu0 %v3369
    %3815 = vmatpush2.bf16.msra.mxu0 %v3368
    %3816 = vmatprep.subr.bf16.mxu0 %v3365
    %3817 = vmatpush2.bf16.msra.mxu0 %v3364
    %3818 = vmatprep.subr.bf16.mxu0 %v3361
    %3819 = vmatpush2.bf16.msra.mxu0 %v3360
    %3820 = vmatprep.subr.bf16.mxu0 %v3357
    %3821 = vmatpush2.bf16.msra.mxu0 %v3356
    %3822 = vmatprep.mubr.bf16.mxu0 %v2147
    %3823 = vmatmul.mubr.bf16.gmra.mxu0 %v2146
    %v3824 = vpop.f32.mrf.mxu0
    %v3825 = vadd.f32 %v3784, %v3824
    %v3826 = vpop.f32.mrf.mxu0
    %v3827 = vadd.f32 %v3786, %v3826
    %v3828 = vpop.f32.mrf.mxu0
    %v3829 = vpop.f32.mrf.mxu0
    %3830 = vdwg.mxu0
    %3831 = vmatprep.subr.bf16.mxu0 %v3417
    %3832 = vmatpush1.bf16.msra.mxu0 %v3416
    %3833 = vmatprep.subr.bf16.mxu0 %v3413
    %3834 = vmatpush1.bf16.msra.mxu0 %v3412
    %3835 = vmatprep.subr.bf16.mxu0 %v3409
    %3836 = vmatpush1.bf16.msra.mxu0 %v3408
    %3837 = vmatprep.subr.bf16.mxu0 %v3405
    %3838 = vmatpush1.bf16.msra.mxu0 %v3404
    %3839 = vmatprep.subr.bf16.mxu0 %v3401
    %3840 = vmatpush1.bf16.msra.mxu0 %v3400
    %3841 = vmatprep.subr.bf16.mxu0 %v3397
    %3842 = vmatpush1.bf16.msra.mxu0 %v3396
    %3843 = vmatprep.subr.bf16.mxu0 %v3393
    %3844 = vmatpush1.bf16.msra.mxu0 %v3392
    %3845 = vmatprep.subr.bf16.mxu0 %v3389
    %3846 = vmatpush1.bf16.msra.mxu0 %v3388
    %3847 = vmatprep.subr.bf16.mxu0 %v3449
    %3848 = vmatpush2.bf16.msra.mxu0 %v3448
    %3849 = vmatprep.subr.bf16.mxu0 %v3445
    %3850 = vmatpush2.bf16.msra.mxu0 %v3444
    %3851 = vmatprep.subr.bf16.mxu0 %v3441
    %3852 = vmatpush2.bf16.msra.mxu0 %v3440
    %3853 = vmatprep.subr.bf16.mxu0 %v3437
    %3854 = vmatpush2.bf16.msra.mxu0 %v3436
    %3855 = vmatprep.subr.bf16.mxu0 %v3433
    %3856 = vmatpush2.bf16.msra.mxu0 %v3432
    %3857 = vmatprep.subr.bf16.mxu0 %v3429
    %3858 = vmatpush2.bf16.msra.mxu0 %v3428
    %3859 = vmatprep.subr.bf16.mxu0 %v3425
    %3860 = vmatpush2.bf16.msra.mxu0 %v3424
    %3861 = vmatprep.subr.bf16.mxu0 %v3421
    %3862 = vmatpush2.bf16.msra.mxu0 %v3420
    %3863 = vmatprep.mubr.bf16.mxu0 %v2149
    %3864 = vmatmul.mubr.bf16.gmra.mxu0 %v2148
    %v3865 = vpop.f32.mrf.mxu0
    %v3866 = vadd.f32 %v3825, %v3865
    %v3867 = vpop.f32.mrf.mxu0
    %v3868 = vadd.f32 %v3827, %v3867
    %v3869 = vpop.f32.mrf.mxu0
    %v3870 = vpop.f32.mrf.mxu0
    %3871 = vdwg.mxu0
    %3872 = vmatprep.subr.bf16.mxu0 %v3227
    %3873 = vmatpush1.bf16.msra.mxu0 %v3226
    %3874 = vmatprep.subr.bf16.mxu0 %v3223
    %3875 = vmatpush1.bf16.msra.mxu0 %v3222
    %3876 = vmatprep.subr.bf16.mxu0 %v3219
    %3877 = vmatpush1.bf16.msra.mxu0 %v3218
    %3878 = vmatprep.subr.bf16.mxu0 %v3215
    %3879 = vmatpush1.bf16.msra.mxu0 %v3214
    %3880 = vmatprep.subr.bf16.mxu0 %v3211
    %3881 = vmatpush1.bf16.msra.mxu0 %v3210
    %3882 = vmatprep.subr.bf16.mxu0 %v3207
    %3883 = vmatpush1.bf16.msra.mxu0 %v3206
    %3884 = vmatprep.subr.bf16.mxu0 %v3203
    %3885 = vmatpush1.bf16.msra.mxu0 %v3202
    %3886 = vmatprep.subr.bf16.mxu0 %v3199
    %3887 = vmatpush1.bf16.msra.mxu0 %v3198
    %3888 = vmatprep.subr.bf16.mxu0 %v3259
    %3889 = vmatpush2.bf16.msra.mxu0 %v3258
    %3890 = vmatprep.subr.bf16.mxu0 %v3255
    %3891 = vmatpush2.bf16.msra.mxu0 %v3254
    %3892 = vmatprep.subr.bf16.mxu0 %v3251
    %3893 = vmatpush2.bf16.msra.mxu0 %v3250
    %3894 = vmatprep.subr.bf16.mxu0 %v3247
    %3895 = vmatpush2.bf16.msra.mxu0 %v3246
    %3896 = vmatprep.subr.bf16.mxu0 %v3243
    %3897 = vmatpush2.bf16.msra.mxu0 %v3242
    %3898 = vmatprep.subr.bf16.mxu0 %v3239
    %3899 = vmatpush2.bf16.msra.mxu0 %v3238
    %3900 = vmatprep.subr.bf16.mxu0 %v3235
    %3901 = vmatpush2.bf16.msra.mxu0 %v3234
    %3902 = vmatprep.subr.bf16.mxu0 %v3231
    %3903 = vmatpush2.bf16.msra.mxu0 %v3230
    %3904 = vmatprep.mubr.bf16.mxu0 %v2143
    %3905 = vmatmul.mubr.bf16.gmra.mxu0 %v2142
    %v3906 = vpop.f32.mrf.mxu0
    %v3907 = vadd.f32 %v2419, %v3906
    %v3908 = vpop.f32.mrf.mxu0
    %v3909 = vadd.f32 %v2423, %v3908
    %v3910 = vpop.f32.mrf.mxu0
    %v3911 = vpop.f32.mrf.mxu0
    %3912 = vdwg.mxu0
    %3913 = vmatprep.subr.bf16.mxu0 %v3291
    %3914 = vmatpush1.bf16.msra.mxu0 %v3290
    %3915 = vmatprep.subr.bf16.mxu0 %v3287
    %3916 = vmatpush1.bf16.msra.mxu0 %v3286
    %3917 = vmatprep.subr.bf16.mxu0 %v3283
    %3918 = vmatpush1.bf16.msra.mxu0 %v3282
    %3919 = vmatprep.subr.bf16.mxu0 %v3279
    %3920 = vmatpush1.bf16.msra.mxu0 %v3278
    %3921 = vmatprep.subr.bf16.mxu0 %v3275
    %3922 = vmatpush1.bf16.msra.mxu0 %v3274
    %3923 = vmatprep.subr.bf16.mxu0 %v3271
    %3924 = vmatpush1.bf16.msra.mxu0 %v3270
    %3925 = vmatprep.subr.bf16.mxu0 %v3267
    %3926 = vmatpush1.bf16.msra.mxu0 %v3266
    %3927 = vmatprep.subr.bf16.mxu0 %v3263
    %3928 = vmatpush1.bf16.msra.mxu0 %v3262
    %3929 = vmatprep.subr.bf16.mxu0 %v3323
    %3930 = vmatpush2.bf16.msra.mxu0 %v3322
    %3931 = vmatprep.subr.bf16.mxu0 %v3319
    %3932 = vmatpush2.bf16.msra.mxu0 %v3318
    %3933 = vmatprep.subr.bf16.mxu0 %v3315
    %3934 = vmatpush2.bf16.msra.mxu0 %v3314
    %3935 = vmatprep.subr.bf16.mxu0 %v3311
    %3936 = vmatpush2.bf16.msra.mxu0 %v3310
    %3937 = vmatprep.subr.bf16.mxu0 %v3307
    %3938 = vmatpush2.bf16.msra.mxu0 %v3306
    %3939 = vmatprep.subr.bf16.mxu0 %v3303
    %3940 = vmatpush2.bf16.msra.mxu0 %v3302
    %3941 = vmatprep.subr.bf16.mxu0 %v3299
    %3942 = vmatpush2.bf16.msra.mxu0 %v3298
    %3943 = vmatprep.subr.bf16.mxu0 %v3295
    %3944 = vmatpush2.bf16.msra.mxu0 %v3294
    %3945 = vmatprep.mubr.bf16.mxu0 %v2145
    %3946 = vmatmul.mubr.bf16.gmra.mxu0 %v2144
    %v3947 = vpop.f32.mrf.mxu0
    %v3948 = vadd.f32 %v3907, %v3947
    %v3949 = vpop.f32.mrf.mxu0
    %v3950 = vadd.f32 %v3909, %v3949
    %v3951 = vpop.f32.mrf.mxu0
    %v3952 = vpop.f32.mrf.mxu0
    %3953 = vdwg.mxu0
    %3954 = vmatprep.subr.bf16.mxu0 %v3355
    %3955 = vmatpush1.bf16.msra.mxu0 %v3354
    %3956 = vmatprep.subr.bf16.mxu0 %v3351
    %3957 = vmatpush1.bf16.msra.mxu0 %v3350
    %3958 = vmatprep.subr.bf16.mxu0 %v3347
    %3959 = vmatpush1.bf16.msra.mxu0 %v3346
    %3960 = vmatprep.subr.bf16.mxu0 %v3343
    %3961 = vmatpush1.bf16.msra.mxu0 %v3342
    %3962 = vmatprep.subr.bf16.mxu0 %v3339
    %3963 = vmatpush1.bf16.msra.mxu0 %v3338
    %3964 = vmatprep.subr.bf16.mxu0 %v3335
    %3965 = vmatpush1.bf16.msra.mxu0 %v3334
    %3966 = vmatprep.subr.bf16.mxu0 %v3331
    %3967 = vmatpush1.bf16.msra.mxu0 %v3330
    %3968 = vmatprep.subr.bf16.mxu0 %v3327
    %3969 = vmatpush1.bf16.msra.mxu0 %v3326
    %3970 = vmatprep.subr.bf16.mxu0 %v3387
    %3971 = vmatpush2.bf16.msra.mxu0 %v3386
    %3972 = vmatprep.subr.bf16.mxu0 %v3383
    %3973 = vmatpush2.bf16.msra.mxu0 %v3382
    %3974 = vmatprep.subr.bf16.mxu0 %v3379
    %3975 = vmatpush2.bf16.msra.mxu0 %v3378
    %3976 = vmatprep.subr.bf16.mxu0 %v3375
    %3977 = vmatpush2.bf16.msra.mxu0 %v3374
    %3978 = vmatprep.subr.bf16.mxu0 %v3371
    %3979 = vmatpush2.bf16.msra.mxu0 %v3370
    %3980 = vmatprep.subr.bf16.mxu0 %v3367
    %3981 = vmatpush2.bf16.msra.mxu0 %v3366
    %3982 = vmatprep.subr.bf16.mxu0 %v3363
    %3983 = vmatpush2.bf16.msra.mxu0 %v3362
    %3984 = vmatprep.subr.bf16.mxu0 %v3359
    %3985 = vmatpush2.bf16.msra.mxu0 %v3358
    %3986 = vmatprep.mubr.bf16.mxu0 %v2147
    %3987 = vmatmul.mubr.bf16.gmra.mxu0 %v2146
    %v3988 = vpop.f32.mrf.mxu0
    %v3989 = vadd.f32 %v3948, %v3988
    %v3990 = vpop.f32.mrf.mxu0
    %v3991 = vadd.f32 %v3950, %v3990
    %v3992 = vpop.f32.mrf.mxu0
    %v3993 = vpop.f32.mrf.mxu0
    %3994 = vdwg.mxu0
    %3995 = vmatprep.subr.bf16.mxu0 %v3419
    %3996 = vmatpush1.bf16.msra.mxu0 %v3418
    %3997 = vmatprep.subr.bf16.mxu0 %v3415
    %3998 = vmatpush1.bf16.msra.mxu0 %v3414
    %3999 = vmatprep.subr.bf16.mxu0 %v3411
    %4000 = vmatpush1.bf16.msra.mxu0 %v3410
    %4001 = vmatprep.subr.bf16.mxu0 %v3407
    %4002 = vmatpush1.bf16.msra.mxu0 %v3406
    %4003 = vmatprep.subr.bf16.mxu0 %v3403
    %4004 = vmatpush1.bf16.msra.mxu0 %v3402
    %4005 = vmatprep.subr.bf16.mxu0 %v3399
    %4006 = vmatpush1.bf16.msra.mxu0 %v3398
    %4007 = vmatprep.subr.bf16.mxu0 %v3395
    %4008 = vmatpush1.bf16.msra.mxu0 %v3394
    %4009 = vmatprep.subr.bf16.mxu0 %v3391
    %4010 = vmatpush1.bf16.msra.mxu0 %v3390
    %4011 = vmatprep.subr.bf16.mxu0 %v3451
    %4012 = vmatpush2.bf16.msra.mxu0 %v3450
    %4013 = vmatprep.subr.bf16.mxu0 %v3447
    %4014 = vmatpush2.bf16.msra.mxu0 %v3446
    %4015 = vmatprep.subr.bf16.mxu0 %v3443
    %4016 = vmatpush2.bf16.msra.mxu0 %v3442
    %4017 = vmatprep.subr.bf16.mxu0 %v3439
    %4018 = vmatpush2.bf16.msra.mxu0 %v3438
    %4019 = vmatprep.subr.bf16.mxu0 %v3435
    %4020 = vmatpush2.bf16.msra.mxu0 %v3434
    %4021 = vmatprep.subr.bf16.mxu0 %v3431
    %4022 = vmatpush2.bf16.msra.mxu0 %v3430
    %4023 = vmatprep.subr.bf16.mxu0 %v3427
    %4024 = vmatpush2.bf16.msra.mxu0 %v3426
    %4025 = vmatprep.subr.bf16.mxu0 %v3423
    %4026 = vmatpush2.bf16.msra.mxu0 %v3422
    %4027 = vmatprep.mubr.bf16.mxu0 %v2149
    %4028 = vmatmul.mubr.bf16.gmra.mxu0 %v2148
    %v4029 = vpop.f32.mrf.mxu0
    %v4030 = vadd.f32 %v3989, %v4029
    %v4031 = vpop.f32.mrf.mxu0
    %v4032 = vadd.f32 %v3991, %v4031
    %v4033 = vpop.f32.mrf.mxu0
    %v4034 = vpop.f32.mrf.mxu0
    %4035 = vdwg.mxu0
    %v4036 = vmax.f32 %v3866, 0.0
    %v4037 = vmax.f32 %v3868, 0.0
    %v4038 = vmax.f32 %v4030, 0.0
    %v4039 = vmax.f32 %v4032, 0.0
    %v4040 = vpack.c.bf16 %v4036, %v4036
    %v4041 = vpack.c.bf16 %v4037, %v4037
    %v4042 = vpack.c.bf16 %v4038, %v4038
    %v4043 = vpack.c.bf16 %v4039, %v4039
    %v4044 = vld [vmem:[%s7] sm:$0xf]
    %v4045 = vld [vmem:[%s7 + $0x4] sm:$0xf]
    %v4046 = vld [vmem:[%s7 + $0x8] sm:$0xf]
    %v4047 = vld [vmem:[%s7 + $0xc] sm:$0xf]
    %v4048 = vld [vmem:[%s7 + $0x10] sm:$0xf]
    %v4049 = vld [vmem:[%s7 + $0x14] sm:$0xf]
    %v4050 = vld [vmem:[%s7 + $0x18] sm:$0xf]
    %v4051 = vld [vmem:[%s7 + $0x1c] sm:$0xf]
    %v4052 = vld [vmem:[%s7 + $0x20] sm:$0xf]
    %v4053 = vld [vmem:[%s7 + $0x24] sm:$0xf]
    %v4054 = vld [vmem:[%s7 + $0x28] sm:$0xf]
    %v4055 = vld [vmem:[%s7 + $0x2c] sm:$0xf]
    %v4056 = vld [vmem:[%s7 + $0x30] sm:$0xf]
    %v4057 = vld [vmem:[%s7 + $0x34] sm:$0xf]
    %v4058 = vld [vmem:[%s7 + $0x38] sm:$0xf]
    %v4059 = vld [vmem:[%s7 + $0x3c] sm:$0xf]
    %v4060 = vld [vmem:[%s7 + $0x40] sm:$0xf]
    %v4061 = vld [vmem:[%s7 + $0x44] sm:$0xf]
    %v4062 = vld [vmem:[%s7 + $0x48] sm:$0xf]
    %v4063 = vld [vmem:[%s7 + $0x4c] sm:$0xf]
    %v4064 = vld [vmem:[%s7 + $0x50] sm:$0xf]
    %v4065 = vld [vmem:[%s7 + $0x54] sm:$0xf]
    %v4066 = vld [vmem:[%s7 + $0x58] sm:$0xf]
    %v4067 = vld [vmem:[%s7 + $0x5c] sm:$0xf]
    %v4068 = vld [vmem:[%s7 + $0x60] sm:$0xf]
    %v4069 = vld [vmem:[%s7 + $0x64] sm:$0xf]
    %v4070 = vld [vmem:[%s7 + $0x68] sm:$0xf]
    %v4071 = vld [vmem:[%s7 + $0x6c] sm:$0xf]
    %v4072 = vld [vmem:[%s7 + $0x70] sm:$0xf]
    %v4073 = vld [vmem:[%s7 + $0x74] sm:$0xf]
    %v4074 = vld [vmem:[%s7 + $0x78] sm:$0xf]
    %v4075 = vld [vmem:[%s7 + $0x7c] sm:$0xf]
    %v4076 = vld [vmem:[%s7 + $0x80] sm:$0xf]
    %v4077 = vld [vmem:[%s7 + $0x84] sm:$0xf]
    %v4078 = vld [vmem:[%s7 + $0x88] sm:$0xf]
    %v4079 = vld [vmem:[%s7 + $0x8c] sm:$0xf]
    %v4080 = vld [vmem:[%s7 + $0x90] sm:$0xf]
    %v4081 = vld [vmem:[%s7 + $0x94] sm:$0xf]
    %v4082 = vld [vmem:[%s7 + $0x98] sm:$0xf]
    %v4083 = vld [vmem:[%s7 + $0x9c] sm:$0xf]
    %v4084 = vld [vmem:[%s7 + $0xa0] sm:$0xf]
    %v4085 = vld [vmem:[%s7 + $0xa4] sm:$0xf]
    %v4086 = vld [vmem:[%s7 + $0xa8] sm:$0xf]
    %v4087 = vld [vmem:[%s7 + $0xac] sm:$0xf]
    %v4088 = vld [vmem:[%s7 + $0xb0] sm:$0xf]
    %v4089 = vld [vmem:[%s7 + $0xb4] sm:$0xf]
    %v4090 = vld [vmem:[%s7 + $0xb8] sm:$0xf]
    %v4091 = vld [vmem:[%s7 + $0xbc] sm:$0xf]
    %v4092 = vld [vmem:[%s7 + $0xc0] sm:$0xf]
    %v4093 = vld [vmem:[%s7 + $0xc4] sm:$0xf]
    %v4094 = vld [vmem:[%s7 + $0xc8] sm:$0xf]
    %v4095 = vld [vmem:[%s7 + $0xcc] sm:$0xf]
    %v4096 = vld [vmem:[%s7 + $0xd0] sm:$0xf]
    %v4097 = vld [vmem:[%s7 + $0xd4] sm:$0xf]
    %v4098 = vld [vmem:[%s7 + $0xd8] sm:$0xf]
    %v4099 = vld [vmem:[%s7 + $0xdc] sm:$0xf]
    %v4100 = vld [vmem:[%s7 + $0xe0] sm:$0xf]
    %v4101 = vld [vmem:[%s7 + $0xe4] sm:$0xf]
    %v4102 = vld [vmem:[%s7 + $0xe8] sm:$0xf]
    %v4103 = vld [vmem:[%s7 + $0xec] sm:$0xf]
    %v4104 = vld [vmem:[%s7 + $0xf0] sm:$0xf]
    %v4105 = vld [vmem:[%s7 + $0xf4] sm:$0xf]
    %v4106 = vld [vmem:[%s7 + $0xf8] sm:$0xf]
    %v4107 = vld [vmem:[%s7 + $0xfc] sm:$0xf]
    %v4108 = vld [vmem:[%s8] sm:$0x1]
    %v4110 = vlaneseq
    %v4111 = vshrl.u32 %v4110, 7
    %v4112 = vsub.s32 0, %v4111
    %v4113 = vrot.slane %v4108, %v4112
    %v4179 = vunpack.c.l.b16 %v4044
    %v4180 = vunpack.c.l.b16 %v4045
    %v4181 = vunpack.c.l.b16 %v4046
    %v4182 = vunpack.c.l.b16 %v4047
    %v4183 = vunpack.c.l.b16 %v4048
    %v4184 = vunpack.c.l.b16 %v4049
    %v4185 = vunpack.c.l.b16 %v4050
    %v4186 = vunpack.c.l.b16 %v4051
    %v4187 = vunpack.c.l.b16 %v4052
    %v4188 = vunpack.c.l.b16 %v4053
    %v4189 = vunpack.c.l.b16 %v4054
    %v4190 = vunpack.c.l.b16 %v4055
    %v4191 = vunpack.c.l.b16 %v4056
    %v4192 = vunpack.c.l.b16 %v4057
    %v4193 = vunpack.c.l.b16 %v4058
    %v4194 = vunpack.c.l.b16 %v4059
    %v4195 = vunpack.c.l.b16 %v4060
    %v4196 = vunpack.c.l.b16 %v4061
    %v4197 = vunpack.c.l.b16 %v4062
    %v4198 = vunpack.c.l.b16 %v4063
    %v4199 = vunpack.c.l.b16 %v4064
    %v4200 = vunpack.c.l.b16 %v4065
    %v4201 = vunpack.c.l.b16 %v4066
    %v4202 = vunpack.c.l.b16 %v4067
    %v4203 = vunpack.c.l.b16 %v4068
    %v4204 = vunpack.c.l.b16 %v4069
    %v4205 = vunpack.c.l.b16 %v4070
    %v4206 = vunpack.c.l.b16 %v4071
    %v4207 = vunpack.c.l.b16 %v4072
    %v4208 = vunpack.c.l.b16 %v4073
    %v4209 = vunpack.c.l.b16 %v4074
    %v4210 = vunpack.c.l.b16 %v4075
    %v4211 = vunpack.c.l.b16 %v4076
    %v4212 = vunpack.c.l.b16 %v4077
    %v4213 = vunpack.c.l.b16 %v4078
    %v4214 = vunpack.c.l.b16 %v4079
    %v4215 = vunpack.c.l.b16 %v4080
    %v4216 = vunpack.c.l.b16 %v4081
    %v4217 = vunpack.c.l.b16 %v4082
    %v4218 = vunpack.c.l.b16 %v4083
    %v4219 = vunpack.c.l.b16 %v4084
    %v4220 = vunpack.c.l.b16 %v4085
    %v4221 = vunpack.c.l.b16 %v4086
    %v4222 = vunpack.c.l.b16 %v4087
    %v4223 = vunpack.c.l.b16 %v4088
    %v4224 = vunpack.c.l.b16 %v4089
    %v4225 = vunpack.c.l.b16 %v4090
    %v4226 = vunpack.c.l.b16 %v4091
    %v4227 = vunpack.c.l.b16 %v4092
    %v4228 = vunpack.c.l.b16 %v4093
    %v4229 = vunpack.c.l.b16 %v4094
    %v4230 = vunpack.c.l.b16 %v4095
    %v4231 = vunpack.c.l.b16 %v4096
    %v4232 = vunpack.c.l.b16 %v4097
    %v4233 = vunpack.c.l.b16 %v4098
    %v4234 = vunpack.c.l.b16 %v4099
    %v4235 = vunpack.c.l.b16 %v4100
    %v4236 = vunpack.c.l.b16 %v4101
    %v4237 = vunpack.c.l.b16 %v4102
    %v4238 = vunpack.c.l.b16 %v4103
    %v4239 = vunpack.c.l.b16 %v4104
    %v4240 = vunpack.c.l.b16 %v4105
    %v4241 = vunpack.c.l.b16 %v4106
    %v4242 = vunpack.c.l.b16 %v4107
    %v4243 = vpack.c.b16 %v4180, %v4179
    %v4244 = vpack.c.b16 %v4182, %v4181
    %v4245 = vpack.c.b16 %v4184, %v4183
    %v4246 = vpack.c.b16 %v4186, %v4185
    %v4247 = vpack.c.b16 %v4188, %v4187
    %v4248 = vpack.c.b16 %v4190, %v4189
    %v4249 = vpack.c.b16 %v4192, %v4191
    %v4250 = vpack.c.b16 %v4194, %v4193
    %v4251 = vpack.c.b16 %v4196, %v4195
    %v4252 = vpack.c.b16 %v4198, %v4197
    %v4253 = vpack.c.b16 %v4200, %v4199
    %v4254 = vpack.c.b16 %v4202, %v4201
    %v4255 = vpack.c.b16 %v4204, %v4203
    %v4256 = vpack.c.b16 %v4206, %v4205
    %v4257 = vpack.c.b16 %v4208, %v4207
    %v4258 = vpack.c.b16 %v4210, %v4209
    %v4259 = vpack.c.b16 %v4212, %v4211
    %v4260 = vpack.c.b16 %v4214, %v4213
    %v4261 = vpack.c.b16 %v4216, %v4215
    %v4262 = vpack.c.b16 %v4218, %v4217
    %v4263 = vpack.c.b16 %v4220, %v4219
    %v4264 = vpack.c.b16 %v4222, %v4221
    %v4265 = vpack.c.b16 %v4224, %v4223
    %v4266 = vpack.c.b16 %v4226, %v4225
    %v4267 = vpack.c.b16 %v4228, %v4227
    %v4268 = vpack.c.b16 %v4230, %v4229
    %v4269 = vpack.c.b16 %v4232, %v4231
    %v4270 = vpack.c.b16 %v4234, %v4233
    %v4271 = vpack.c.b16 %v4236, %v4235
    %v4272 = vpack.c.b16 %v4238, %v4237
    %v4273 = vpack.c.b16 %v4240, %v4239
    %v4274 = vpack.c.b16 %v4242, %v4241
    %4307 = vmatprep.subr.bf16.mxu0 0
    %4308 = vmatpush1.bf16.msra.mxu0 %v4250
    %4309 = vmatprep.subr.bf16.mxu0 0
    %4310 = vmatpush1.bf16.msra.mxu0 %v4249
    %4311 = vmatprep.subr.bf16.mxu0 0
    %4312 = vmatpush1.bf16.msra.mxu0 %v4248
    %4313 = vmatprep.subr.bf16.mxu0 0
    %4314 = vmatpush1.bf16.msra.mxu0 %v4247
    %4315 = vmatprep.subr.bf16.mxu0 0
    %4316 = vmatpush1.bf16.msra.mxu0 %v4246
    %4317 = vmatprep.subr.bf16.mxu0 0
    %4318 = vmatpush1.bf16.msra.mxu0 %v4245
    %4319 = vmatprep.subr.bf16.mxu0 0
    %4320 = vmatpush1.bf16.msra.mxu0 %v4244
    %4321 = vmatprep.subr.bf16.mxu0 0
    %4322 = vmatpush1.bf16.msra.mxu0 %v4243
    %4323 = vmatprep.subr.bf16.mxu0 0
    %4324 = vmatpush2.bf16.msra.mxu0 %v4258
    %4325 = vmatprep.subr.bf16.mxu0 0
    %4326 = vmatpush2.bf16.msra.mxu0 %v4257
    %4327 = vmatprep.subr.bf16.mxu0 0
    %4328 = vmatpush2.bf16.msra.mxu0 %v4256
    %4329 = vmatprep.subr.bf16.mxu0 0
    %4330 = vmatpush2.bf16.msra.mxu0 %v4255
    %4331 = vmatprep.subr.bf16.mxu0 0
    %4332 = vmatpush2.bf16.msra.mxu0 %v4254
    %4333 = vmatprep.subr.bf16.mxu0 0
    %4334 = vmatpush2.bf16.msra.mxu0 %v4253
    %4335 = vmatprep.subr.bf16.mxu0 0
    %4336 = vmatpush2.bf16.msra.mxu0 %v4252
    %4337 = vmatprep.subr.bf16.mxu0 0
    %4338 = vmatpush2.bf16.msra.mxu0 %v4251
    %4339 = vmatprep.mubr.bf16.mxu0 %v4041
    %4340 = vmatmul.mubr.bf16.gmra.mxu0 %v4040
    %v4341 = vpop.f32.mrf.mxu0
    %v4342 = vadd.f32 %v4113, %v4341
    %v4343 = vpop.f32.mrf.mxu0
    %v4344 = vpop.f32.mrf.mxu0
    %v4345 = vpop.f32.mrf.mxu0
    %4346 = vdwg.mxu0
    %4347 = vmatprep.subr.bf16.mxu0 0
    %4348 = vmatpush1.bf16.msra.mxu0 %v4266
    %4349 = vmatprep.subr.bf16.mxu0 0
    %4350 = vmatpush1.bf16.msra.mxu0 %v4265
    %4351 = vmatprep.subr.bf16.mxu0 0
    %4352 = vmatpush1.bf16.msra.mxu0 %v4264
    %4353 = vmatprep.subr.bf16.mxu0 0
    %4354 = vmatpush1.bf16.msra.mxu0 %v4263
    %4355 = vmatprep.subr.bf16.mxu0 0
    %4356 = vmatpush1.bf16.msra.mxu0 %v4262
    %4357 = vmatprep.subr.bf16.mxu0 0
    %4358 = vmatpush1.bf16.msra.mxu0 %v4261
    %4359 = vmatprep.subr.bf16.mxu0 0
    %4360 = vmatpush1.bf16.msra.mxu0 %v4260
    %4361 = vmatprep.subr.bf16.mxu0 0
    %4362 = vmatpush1.bf16.msra.mxu0 %v4259
    %4363 = vmatprep.subr.bf16.mxu0 0
    %4364 = vmatpush2.bf16.msra.mxu0 %v4274
    %4365 = vmatprep.subr.bf16.mxu0 0
    %4366 = vmatpush2.bf16.msra.mxu0 %v4273
    %4367 = vmatprep.subr.bf16.mxu0 0
    %4368 = vmatpush2.bf16.msra.mxu0 %v4272
    %4369 = vmatprep.subr.bf16.mxu0 0
    %4370 = vmatpush2.bf16.msra.mxu0 %v4271
    %4371 = vmatprep.subr.bf16.mxu0 0
    %4372 = vmatpush2.bf16.msra.mxu0 %v4270
    %4373 = vmatprep.subr.bf16.mxu0 0
    %4374 = vmatpush2.bf16.msra.mxu0 %v4269
    %4375 = vmatprep.subr.bf16.mxu0 0
    %4376 = vmatpush2.bf16.msra.mxu0 %v4268
    %4377 = vmatprep.subr.bf16.mxu0 0
    %4378 = vmatpush2.bf16.msra.mxu0 %v4267
    %4379 = vmatprep.mubr.bf16.mxu0 %v4043
    %4380 = vmatmul.mubr.bf16.gmra.mxu0 %v4042
    %v4381 = vpop.f32.mrf.mxu0
    %v4382 = vadd.f32 %v4342, %v4381
    %v4383 = vpop.f32.mrf.mxu0
    %v4384 = vpop.f32.mrf.mxu0
    %v4385 = vpop.f32.mrf.mxu0
    %4386 = vdwg.mxu0
    %vm4387 = vcmask 130048
    %v4388 = vsel %vm4387, %v4382, -inf
    %4389 = vmax.xlane.f32.xlu0 %v4388
    %v4390 = vpop.xlane.xlu0 %4389
    %v4391 = vsub.f32 %v4382, %v4390
    %v4392 = vmul.f32 %v4391, 1.442695
    %v4393 = vpow.pop %v4392
    %v4394 = vsel %vm4387, %v4393, 0.0
    %4395 = vadd.xlane.f32.xlu0 %v4394
    %v4396 = vpop.xlane.xlu0 %4395
    %v4397 = vlog2.pop %v4396
    %v4398 = vmul.f32 %v4397, 0.6931472
    %v4399 = vsub.f32 %v4391, %v4398
    %4400 = vst.msk [vmem:[#allocation7] sm:$0xff] %vm4387, %v4399
    // Predicated region
    $region46: #{tpu_custom_call.1} parent=1 // pred_check
      _
    $region47: #{tpu_custom_call.1} parent=1 // pred_check_branch
      %4402 = sbr.rel (0) target = $region49
    $region48: #{tpu_custom_call.1} parent=1 // pred_region
      %s4404 = ssub.s32 128, 128
      %4405 = vsyncadd [#allocation4], %s4404
      %s4407 = sshll.u32 [#allocation7], 4
      %s4408 = int_to_ptr.vmem [resolvable:$true] %s4407
      %4410 = dma.vmem_to_hbm [thread:$0]  %s4408, 128, %s9, [#allocation4]
    $region49: #{tpu_custom_call.1} parent=1 // pred_fallthru
      _
    // Predicated region
    $region50: #{tpu_custom_call.1} parent=1 // pred_check
      _
    $region51: #{tpu_custom_call.1} parent=1 // pred_check_branch
      %4412 = sbr.rel (0) target = $region53
    $region52: #{tpu_custom_call.1} parent=1 // pred_region
      %4413 = dma.done [#allocation4], 128
    $region53: #{tpu_custom_call.1} parent=1 // pred_fallthru
      _
    %4414 = vsyncpa [#allocation3], 1
    %4415 = vsyncpa [#allocation6], 1
    %4416 = vsyncpa [#allocation4], 1

</llo_original>
